<compile_context>
chip_gen: v6e
topology: v6e:2x2x1
jax: 0.10.0
libtpu: 0.0.40
codegen_flags: <defaults>
</compile_context>

<pallas_src>
import jax
import jax.numpy as jnp
from jax import lax
from jax.experimental import pallas as pl
from jax.experimental.pallas import tpu as pltpu


def add_conv1x1_kernel(a_ref, b_ref, w_ref, o_ref):
    # a_ref, b_ref: (M, C_in)  -- the two activation tensors (same full block)
    # w_ref:        (tn, C_out-tile of the native (C_out, C_in) weight)
    # o_ref:        (M, tn)
    s = (a_ref[...] + b_ref[...]).astype(w_ref.dtype)   # fused residual add (VPU)
    # 1x1 conv == matmul; contract C_in of s (dim 1) with C_in of w (dim 1).
    o_ref[...] = lax.dot_general(
        s, w_ref[...],
        dimension_numbers=(((1,), (1,)), ((), ())),
        preferred_element_type=jnp.float32,
    ).astype(o_ref.dtype)


def add_conv1x1(x824, x809, weight, *, tn=1920, weight_dtype=None):
    """x824, x809: (N, C_in, H, W) float32. weight: (C_out, C_in, 1, 1)."""
    N, C_in, H, W = x824.shape
    C_out = weight.shape[0]
    assert C_out % tn == 0
    M = N * H * W

    # NCHW -> (N*H*W, C_in)
    a = jnp.transpose(x824, (0, 2, 3, 1)).reshape(M, C_in)
    b = jnp.transpose(x809, (0, 2, 3, 1)).reshape(M, C_in)

    # Keep the weight in its native (C_out, C_in) layout: no transpose op.
    w = weight.reshape(C_out, C_in)
    if weight_dtype is not None:
        w = w.astype(weight_dtype)

    cost = pl.CostEstimate(
        flops=2 * M * C_in * C_out,
        transcendentals=0,
        bytes_accessed=int(
            w.size * w.dtype.itemsize          # dominant: weight read
            + 2 * M * C_in * 4                 # two activation reads
            + M * C_out * 4                    # output write
        ),
    )

    out = pl.pallas_call(
        add_conv1x1_kernel,
        out_shape=jax.ShapeDtypeStruct((M, C_out), jnp.float32),
        grid_spec=pltpu.PrefetchScalarGridSpec(
            num_scalar_prefetch=0,
            grid=(C_out // tn,),
            in_specs=[
                pl.BlockSpec((M, C_in), lambda j: (0, 0)),   # a (reused per tile)
                pl.BlockSpec((M, C_in), lambda j: (0, 0)),   # b (reused per tile)
                pl.BlockSpec((tn, C_in), lambda j: (j, 0)),  # native-layout weight tile
            ],
            out_specs=pl.BlockSpec((M, tn), lambda j: (0, j)),
        ),
        compiler_params=pltpu.CompilerParams(
            dimension_semantics=("parallel",),
        ),
        cost_estimate=cost,
    )(a, b, w)

    # (M, C_out) -> (N, C_out, H, W)
    return jnp.transpose(out.reshape(N, H, W, C_out), (0, 3, 1, 2))


if __name__ == "__main__":
    key = jax.random.PRNGKey(0)
    k1, k2, k3 = jax.random.split(key, 3)

    # Shapes implied by the PyTorch module: inputs [1, 640, 7, 7],
    # Conv2d(640 -> 3840, 1x1, no bias).
    x824 = jax.random.normal(k1, (1, 640, 7, 7), dtype=jnp.float32)
    x809 = jax.random.normal(k2, (1, 640, 7, 7), dtype=jnp.float32)
    weight = jax.random.normal(k3, (3840, 640, 1, 1), dtype=jnp.float32) * 0.02

    out = add_conv1x1(x824, x809, weight)
    jax.block_until_ready(out)

    # Sanity check against plain-JAX reference (1x1 conv == matmul).
    s = x824 + x809
    ref = jnp.einsum(
        "nchw,oc->nohw",
        s,
        weight.reshape(3840, 640),
        preferred_element_type=jnp.float32,
    )
    assert out.shape == (1, 3840, 7, 7), out.shape
    assert jnp.allclose(out, ref, atol=1e-3, rtol=1e-3), "mismatch vs reference"

    print("KERNEL_OK")
</pallas_src>

<mosaic_0001>
module attributes {stable_mosaic.version = 11 : i64} {
  func.func @add_conv1x1_kernel(%arg0: i32, %arg1: memref<49x640xf32, #tpu.memory_space<vmem>>, %arg2: memref<49x640xf32, #tpu.memory_space<vmem>>, %arg3: memref<1920x640xf32, #tpu.memory_space<vmem>>, %arg4: memref<49x1920xf32, #tpu.memory_space<vmem>>) attributes {dimension_semantics = [#tpu.dimension_semantics<parallel>], iteration_bounds = array<i64: 2>, scalar_prefetch = 0 : i64, scratch_operands = 0 : i64, tpu.core_type = #tpu.core_type<tc>, window_params = [{pipeline_mode = #tpu.pipeline_mode<synchronous>, transform_indices = @transform_0, window_bounds = array<i64: 49, 640>}, {pipeline_mode = #tpu.pipeline_mode<synchronous>, transform_indices = @transform_1, window_bounds = array<i64: 49, 640>}, {transform_indices = @transform_2, window_bounds = array<i64: 1920, 640>}, {transform_indices = @transform_3, window_bounds = array<i64: 49, 1920>}]} {
    %c0 = arith.constant 0 : index
    %c0_0 = arith.constant 0 : index
    %0 = vector.load %arg1[%c0, %c0_0] : memref<49x640xf32, #tpu.memory_space<vmem>>, vector<49x640xf32>
    %c0_1 = arith.constant 0 : index
    %c0_2 = arith.constant 0 : index
    %1 = vector.load %arg2[%c0_1, %c0_2] : memref<49x640xf32, #tpu.memory_space<vmem>>, vector<49x640xf32>
    %2 = arith.addf %0, %1 : vector<49x640xf32>
    %c0_3 = arith.constant 0 : index
    %c0_4 = arith.constant 0 : index
    %3 = vector.load %arg3[%c0_3, %c0_4] : memref<1920x640xf32, #tpu.memory_space<vmem>>, vector<1920x640xf32>
    %cst = arith.constant dense<0.000000e+00> : vector<49x1920xf32>
    %4 = tpu.matmul %2, %3, %cst {dimension_numbers = #tpu.dot_dimension_numbers<[1], [1], [0], [0], [0, 0, 1, 0], [], []>} : vector<49x640xf32>, vector<1920x640xf32>, vector<49x1920xf32> -> vector<49x1920xf32>
    %c0_5 = arith.constant 0 : index
    %c0_6 = arith.constant 0 : index
    %5 = vector.load %arg4[%c0_5, %c0_6] : memref<49x1920xf32, #tpu.memory_space<vmem>>, vector<49x1920xf32>
    tpu.vector_store %arg4[%c0_5, %c0_6], %4 {strides = array<i32>} : memref<49x1920xf32, #tpu.memory_space<vmem>>, vector<49x1920xf32>,
    return
  }
  func.func @transform_0(%arg0: i32) -> (i32, i32) {
    %c0_i32 = arith.constant 0 : i32
    %c0_i32_0 = arith.constant 0 : i32
    %c0_i32_1 = arith.constant 0 : i32
    return %c0_i32, %c0_i32_0 : i32, i32
  }
  func.func @transform_1(%arg0: i32) -> (i32, i32) {
    %c0_i32 = arith.constant 0 : i32
    %c0_i32_0 = arith.constant 0 : i32
    %c0_i32_1 = arith.constant 0 : i32
    return %c0_i32, %c0_i32_0 : i32, i32
  }
  func.func @transform_2(%arg0: i32) -> (i32, i32) {
    %c0_i32 = arith.constant 0 : i32
    %c0_i32_0 = arith.constant 0 : i32
    return %arg0, %c0_i32 : i32, i32
  }
  func.func @transform_3(%arg0: i32) -> (i32, i32) {
    %c0_i32 = arith.constant 0 : i32
    %c0_i32_0 = arith.constant 0 : i32
    return %c0_i32, %arg0 : i32, i32
  }
}

</mosaic_0001>

<llo_original>
// kernel: tpu_custom_call.1
$region0: #{tpu_custom_call.1}
  #allocation0 [shape = 'u32[]', space=smem, size = 0x4, offset = 0x4, fixed_abs, tag = 'smem constant byte address 0x4 - core index']
  #allocation1 [shape = 'u32[144,128]{1,0:T(1,128)}', space=vmem, size = 0x12000, scoped, tag = 'internal scratch']
  %s0 = inlined_call_operand.hbm [shape: f32[49,640], index: 0, kind: input, shape index: {}]
  %s1 = inlined_call_operand.hbm [shape: f32[49,640], index: 1, kind: input, shape index: {}]
  %s2 = inlined_call_operand.hbm [shape: f32[3840,640], index: 2, kind: input, shape index: {}]
  %s3 = inlined_call_operand.hbm [shape: f32[49,3840], index: 3, kind: output, shape index: {}]
  %s4 = sld [smem:[#allocation0]]
  $region57: #{tpu_custom_call.1} parent=0
    _
  %s6 = ssub.s32 1, %s4
  %s7 = scalar_select 0, %s6, %s4
  $region1: #{tpu_custom_call.1} parent=0
    #allocation2 [shape = 'u8[143360]{0}', space=vmem, size = 0x23000, scoped, tag = 'input window, operand 0, single buffered']
    #allocation3 [shape = 's32[2]{0}', space=sflag, size = 0x8, scoped, tag = 'scoped memory for tpu_custom_call.1']
    #allocation4 [shape = 's32[2]{0}', space=sflag, size = 0x8, scoped, tag = 'scoped memory for tpu_custom_call.1']
    #allocation5 [shape = 'u8[143360]{0}', space=vmem, size = 0x23000, scoped, tag = 'input window, operand 1, single buffered']
    #allocation6 [shape = 's32[1]{0}', space=sflag, size = 0x4, scoped, tag = 'scoped memory for tpu_custom_call.1']
    #allocation7 [shape = 'u8[9830400]{0}', space=vmem, size = 0x960000, scoped, tag = 'input window, operand 2']
    #allocation8 [shape = 'u8[860160]{0}', space=vmem, size = 0xd2000, scoped, tag = 'output window, operand 0']
    %8 = vsyncpa [#allocation3], 0
    %9 = vsyncpa [#allocation6], 0
    %10 = vsyncpa [#allocation4], 0
    %s11 = scalar_lea.sflag [#allocation4], 1
    %12 = vsyncpa %s11, 0
    loop: start=0, step=1, limit=4
    $region2: #{tpu_custom_call.1} parent=1 // loop_pre_header
      _
    $region3: #{tpu_custom_call.1} parent=1 // loop_header
      %s14 = sphi 0, %s18
      %p15 = scmp.ge.s32.totalorder %s14, 4
      %s22 = sphi 0, %s22
      %s24 = sphi 0, %s22
      %s25 = sphi 0, %s24
      %s39 = sphi 0, %s25
      %s43 = sphi 0, %s43
      %s45 = sphi 0, %s43
      %s46 = sphi 0, %s45
      %s60 = sphi 0, %s46
      %s66 = sphi 0, %s68
      %s69 = sphi 0, %s66
      %s70 = sphi 0, %s69
      %s86 = sphi 0, %s70
      %s92 = sphi 0, %s94
      %s95 = sphi 0, %s92
      %s96 = sphi 0, %s95
      %s112 = sphi 0, %s96
    $region4: #{tpu_custom_call.1} parent=1 // loop_header_branch
      %17 = sbr.rel (%p15) target = $region8
    $region5: #{tpu_custom_call.1} parent=1 // loop_body
      %s19 = ssub.s32 %s14, 1
      %s20 = ssub.s32 %s14, 2
      %s21 = sadd.s32 %s14, 1
      %s23 = sadd.s32 %s22, 1
      %p26 = scmp.eq.s32.totalorder %s14, 1
      %p27 = scmp.ne.s32.totalorder %s22, %s24
      %p28 = scmp.eq.s32.totalorder %s14, 0
      %p29 = por %p27, %p28
      %p30 = scmp.ne.s32.totalorder %s22, %s24
      %p31 = scmp.eq.s32.totalorder %s19, 1
      %p32 = por %p30, %p31
      %p33 = scmp.ne.s32.totalorder %s24, %s25
      %p34 = scmp.eq.s32.totalorder %s19, 0
      %p35 = por %p33, %p34
      %p36 = scmp.ne.s32.totalorder %s24, %s25
      %p37 = scmp.eq.s32.totalorder %s20, 1
      %p38 = por %p36, %p37
      %p40 = scmp.ne.s32.totalorder %s25, %s39
      %p41 = scmp.eq.s32.totalorder %s20, 0
      %p42 = por %p40, %p41
      %s44 = sadd.s32 %s43, 1
      %p47 = scmp.eq.s32.totalorder %s14, 1
      %p48 = scmp.ne.s32.totalorder %s43, %s45
      %p49 = scmp.eq.s32.totalorder %s14, 0
      %p50 = por %p48, %p49
      %p51 = scmp.ne.s32.totalorder %s43, %s45
      %p52 = scmp.eq.s32.totalorder %s19, 1
      %p53 = por %p51, %p52
      %p54 = scmp.ne.s32.totalorder %s45, %s46
      %p55 = scmp.eq.s32.totalorder %s19, 0
      %p56 = por %p54, %p55
      %p57 = scmp.ne.s32.totalorder %s45, %s46
      %p58 = scmp.eq.s32.totalorder %s20, 1
      %p59 = por %p57, %p58
      %p61 = scmp.ne.s32.totalorder %s46, %s60
      %p62 = scmp.eq.s32.totalorder %s20, 0
      %p63 = por %p61, %p62
      %s64 = ssub.s32 %s14, %s21
      %p65 = scmp.eq.s32.totalorder %s64, 0
      %s67 = sadd.s32 %s66, 1
      %s68 = scalar_select %p65, %s66, %s67
      %p71 = pneg %p65
      %p72 = scmp.eq.s32.totalorder %s14, 1
      %p73 = por %p71, %p72
      %p74 = scmp.ne.s32.totalorder %s66, %s69
      %p75 = scmp.eq.s32.totalorder %s14, 0
      %p76 = por %p74, %p75
      %p77 = scmp.ne.s32.totalorder %s66, %s69
      %p78 = scmp.eq.s32.totalorder %s19, 1
      %p79 = por %p77, %p78
      %p80 = scmp.ne.s32.totalorder %s69, %s70
      %p81 = scmp.eq.s32.totalorder %s19, 0
      %p82 = por %p80, %p81
      %p83 = scmp.ne.s32.totalorder %s69, %s70
      %p84 = scmp.eq.s32.totalorder %s20, 1
      %p85 = por %p83, %p84
      %p87 = scmp.ne.s32.totalorder %s70, %s86
      %p88 = scmp.eq.s32.totalorder %s20, 0
      %p89 = por %p87, %p88
      %s90 = ssub.s32 %s14, %s21
      %p91 = scmp.eq.s32.totalorder %s90, 0
      %s93 = sadd.s32 %s92, 1
      %s94 = scalar_select %p91, %s92, %s93
      %p97 = pneg %p91
      %p98 = scmp.eq.s32.totalorder %s14, 1
      %p99 = por %p97, %p98
      %p100 = scmp.ne.s32.totalorder %s92, %s95
      %p101 = scmp.eq.s32.totalorder %s14, 0
      %p102 = por %p100, %p101
      %p103 = scmp.ne.s32.totalorder %s92, %s95
      %p104 = scmp.eq.s32.totalorder %s19, 1
      %p105 = por %p103, %p104
      %p106 = scmp.ne.s32.totalorder %s95, %s96
      %p107 = scmp.eq.s32.totalorder %s19, 0
      %p108 = por %p106, %p107
      %p109 = scmp.ne.s32.totalorder %s95, %s96
      %p110 = scmp.eq.s32.totalorder %s20, 1
      %p111 = por %p109, %p110
      %p113 = scmp.ne.s32.totalorder %s96, %s112
      %p114 = scmp.eq.s32.totalorder %s20, 0
      %p115 = por %p113, %p114
      %p116 = scmp.le.s32.totalorder 1, %s14
      %p117 = scmp.lt.s32.totalorder %s14, 3
      %p118 = pnand %p116, %p117
      %p119 = pneg %p118
      // Predicated region
      $region9: #{tpu_custom_call.1} parent=5 // pred_check
        _
      $region10: #{tpu_custom_call.1} parent=5 // pred_check_branch
        %121 = sbr.rel (%p118) target = $region12
      $region11: #{tpu_custom_call.1} parent=5 // pred_region
        %s122 = ssub.s32 %s14, 1
        // Predicated region
        $region13: #{tpu_custom_call.1} parent=11 // pred_check
          %p123 = pneg %p35
        $region14: #{tpu_custom_call.1} parent=11 // pred_check_branch
          %125 = sbr.rel (%p123) target = $region16
        $region15: #{tpu_custom_call.1} parent=11 // pred_region
          %s127 = ssub.s32 4480, 4480
          %128 = vsyncadd [#allocation3], %s127
          %s129 = sshll.u32 [#allocation2], 4
          %s130 = int_to_ptr.vmem [resolvable:$true] %s129
          %135 = dma.hbm_to_vmem [thread:$0]  %s0, 4480, %s130, [#allocation3], 640, 640, 40
        $region16: #{tpu_custom_call.1} parent=11 // pred_fallthru
          _
        // Predicated region
        $region17: #{tpu_custom_call.1} parent=11 // pred_check
          %p136 = pneg %p56
        $region18: #{tpu_custom_call.1} parent=11 // pred_check_branch
          %138 = sbr.rel (%p136) target = $region20
        $region19: #{tpu_custom_call.1} parent=11 // pred_region
          %s140 = ssub.s32 4480, 4480
          %141 = vsyncadd [#allocation6], %s140
          %s142 = sshll.u32 [#allocation5], 4
          %s143 = int_to_ptr.vmem [resolvable:$true] %s142
          %148 = dma.hbm_to_vmem [thread:$0]  %s1, 4480, %s143, [#allocation6], 640, 640, 40
        $region20: #{tpu_custom_call.1} parent=11 // pred_fallthru
          _
      $region12: #{tpu_custom_call.1} parent=5 // pred_fallthru
        _
      %p149 = scmp.lt.s32.totalorder %s14, 2
      // Predicated region
      $region21: #{tpu_custom_call.1} parent=5 // pred_check
        %p150 = pneg %p149
      $region22: #{tpu_custom_call.1} parent=5 // pred_check_branch
        %152 = sbr.rel (%p150) target = $region24
      $region23: #{tpu_custom_call.1} parent=5 // pred_region
        // Predicated region
        $region25: #{tpu_custom_call.1} parent=23 // pred_check
          %p153 = pneg %p76
        $region26: #{tpu_custom_call.1} parent=23 // pred_check_branch
          %155 = sbr.rel (%p153) target = $region28
        $region27: #{tpu_custom_call.1} parent=23 // pred_region
          %s156 = sand.u32 %s14, 1
          %s157 = scalar_lea.sflag [#allocation3], %s156
          %s158 = sand.u32 %s66, 1
          %s159 = smul.addr %s158, 9600
          %s160 = scalar_lea.vmem [#allocation7], %s159
          %s161 = smul.u32 240, %s14
          %s163 = ssub.s32 153600, 153600
          %164 = vsyncadd %s157, %s163
          %s165 = smul.addr %s161, 5
          %s166 = smul.addr %s165, 128
          %s167 = scalar_lea.hbm %s2, %s166
          %s168 = sshll.u32 %s160, 4
          %s169 = int_to_ptr.vmem [resolvable:$true] %s168
          %174 = dma.hbm_to_vmem [thread:$0]  %s167, 153600, %s169, %s157, 640, 640, 40
        $region28: #{tpu_custom_call.1} parent=23 // pred_fallthru
          _
      $region24: #{tpu_custom_call.1} parent=5 // pred_fallthru
        _
      %p175 = scmp.le.s32.totalorder 1, %s14
      %p176 = scmp.lt.s32.totalorder %s14, 3
      %p177 = pnand %p175, %p176
      %p178 = pneg %p177
      // Predicated region
      $region29: #{tpu_custom_call.1} parent=5 // pred_check
        _
      $region30: #{tpu_custom_call.1} parent=5 // pred_check_branch
        %180 = sbr.rel (%p177) target = $region32
      $region31: #{tpu_custom_call.1} parent=5 // pred_region
        %s181 = ssub.s32 %s14, 1
        // Predicated region
        $region33: #{tpu_custom_call.1} parent=31 // pred_check
          %p182 = pneg %p35
        $region34: #{tpu_custom_call.1} parent=31 // pred_check_branch
          %184 = sbr.rel (%p182) target = $region36
        $region35: #{tpu_custom_call.1} parent=31 // pred_region
          %185 = dma.done [#allocation3], 4480
        $region36: #{tpu_custom_call.1} parent=31 // pred_fallthru
          _
        // Predicated region
        $region37: #{tpu_custom_call.1} parent=31 // pred_check
          %p186 = pneg %p56
        $region38: #{tpu_custom_call.1} parent=31 // pred_check_branch
          %188 = sbr.rel (%p186) target = $region40
        $region39: #{tpu_custom_call.1} parent=31 // pred_region
          %189 = dma.done [#allocation6], 4480
        $region40: #{tpu_custom_call.1} parent=31 // pred_fallthru
          _
        %s190 = sand.u32 %s19, 1
        %s191 = scalar_lea.sflag [#allocation3], %s190
        %s192 = sand.u32 %s69, 1
        %s193 = smul.addr %s192, 9600
        %s194 = scalar_lea.vmem [#allocation7], %s193
        // Predicated region
        $region41: #{tpu_custom_call.1} parent=31 // pred_check
          %p195 = pneg %p82
        $region42: #{tpu_custom_call.1} parent=31 // pred_check_branch
          %197 = sbr.rel (%p195) target = $region44
        $region43: #{tpu_custom_call.1} parent=31 // pred_region
          %198 = dma.done %s191, 153600
        $region44: #{tpu_custom_call.1} parent=31 // pred_fallthru
          _
        %p199 = pneg %p35
        %p200 = pneg %p32
        %p201 = pneg %p56
        %p202 = pneg %p53
        %s203 = sand.u32 %s19, 1
        %s204 = scalar_lea.sflag [#allocation3], %s203
        %s205 = sand.u32 %s69, 1
        %s206 = smul.addr %s205, 9600
        %s207 = scalar_lea.vmem [#allocation7], %s206
        %p208 = pneg %p82
        %p209 = pneg %p79
        %p210 = pneg %p108
        %p211 = pneg %p105
        %s212 = sand.u32 %s95, 1
        %s213 = scalar_lea.sflag [#allocation4], %s212
        %s214 = sand.u32 %s95, 1
        %s215 = smul.addr %s214, 840
        %s216 = scalar_lea.vmem [#allocation8], %s215
        %s217 = smul.u32 240, %s19
        %s218 = smul.u32 15, %s19
        %v219 = vld [vmem:[#allocation2] sm:$0xff]
        %v220 = vld [vmem:[#allocation2 + $0x8] sm:$0xff]
        %v221 = vld [vmem:[#allocation2 + $0x10] sm:$0xff]
        %v222 = vld [vmem:[#allocation2 + $0x18] sm:$0xff]
        %v223 = vld [vmem:[#allocation2 + $0x20] sm:$0xff]
        %v224 = vld [vmem:[#allocation2 + $0x28] sm:$0xff]
        %v225 = vld [vmem:[#allocation2 + $0x30] sm:$0xff]
        %v226 = vld [vmem:[#allocation2 + $0x38] sm:$0xff]
        %v227 = vld [vmem:[#allocation2 + $0x40] sm:$0xff]
        %v228 = vld [vmem:[#allocation2 + $0x48] sm:$0xff]
        %v229 = vld [vmem:[#allocation2 + $0x50] sm:$0xff]
        %v230 = vld [vmem:[#allocation2 + $0x58] sm:$0xff]
        %v231 = vld [vmem:[#allocation2 + $0x60] sm:$0xff]
        %v232 = vld [vmem:[#allocation2 + $0x68] sm:$0xff]
        %v233 = vld [vmem:[#allocation2 + $0x70] sm:$0xff]
        %v234 = vld [vmem:[#allocation2 + $0x78] sm:$0xff]
        %v235 = vld [vmem:[#allocation2 + $0x80] sm:$0xff]
        %v236 = vld [vmem:[#allocation2 + $0x88] sm:$0xff]
        %v237 = vld [vmem:[#allocation2 + $0x90] sm:$0xff]
        %v238 = vld [vmem:[#allocation2 + $0x98] sm:$0xff]
        %v239 = vld [vmem:[#allocation2 + $0xa0] sm:$0xff]
        %v240 = vld [vmem:[#allocation2 + $0xa8] sm:$0xff]
        %v241 = vld [vmem:[#allocation2 + $0xb0] sm:$0xff]
        %v242 = vld [vmem:[#allocation2 + $0xb8] sm:$0xff]
        %v243 = vld [vmem:[#allocation2 + $0xc0] sm:$0xff]
        %v244 = vld [vmem:[#allocation2 + $0xc8] sm:$0xff]
        %v245 = vld [vmem:[#allocation2 + $0xd0] sm:$0xff]
        %v246 = vld [vmem:[#allocation2 + $0xd8] sm:$0xff]
        %v247 = vld [vmem:[#allocation2 + $0xe0] sm:$0xff]
        %v248 = vld [vmem:[#allocation2 + $0xe8] sm:$0xff]
        %v249 = vld [vmem:[#allocation2 + $0xf0] sm:$0x1]
        %v250 = vld [vmem:[#allocation2 + $0xf8] sm:$0x1]
        %v251 = vld [vmem:[#allocation2 + $0x100] sm:$0x1]
        %v252 = vld [vmem:[#allocation2 + $0x108] sm:$0x1]
        %v253 = vld [vmem:[#allocation2 + $0x110] sm:$0x1]
        %v254 = vld [vmem:[#allocation5] sm:$0xff]
        %v255 = vld [vmem:[#allocation5 + $0x8] sm:$0xff]
        %v256 = vld [vmem:[#allocation5 + $0x10] sm:$0xff]
        %v257 = vld [vmem:[#allocation5 + $0x18] sm:$0xff]
        %v258 = vld [vmem:[#allocation5 + $0x20] sm:$0xff]
        %v259 = vld [vmem:[#allocation5 + $0x28] sm:$0xff]
        %v260 = vld [vmem:[#allocation5 + $0x30] sm:$0xff]
        %v261 = vld [vmem:[#allocation5 + $0x38] sm:$0xff]
        %v262 = vld [vmem:[#allocation5 + $0x40] sm:$0xff]
        %v263 = vld [vmem:[#allocation5 + $0x48] sm:$0xff]
        %v264 = vld [vmem:[#allocation5 + $0x50] sm:$0xff]
        %v265 = vld [vmem:[#allocation5 + $0x58] sm:$0xff]
        %v266 = vld [vmem:[#allocation5 + $0x60] sm:$0xff]
        %v267 = vld [vmem:[#allocation5 + $0x68] sm:$0xff]
        %v268 = vld [vmem:[#allocation5 + $0x70] sm:$0xff]
        %v269 = vld [vmem:[#allocation5 + $0x78] sm:$0xff]
        %v270 = vld [vmem:[#allocation5 + $0x80] sm:$0xff]
        %v271 = vld [vmem:[#allocation5 + $0x88] sm:$0xff]
        %v272 = vld [vmem:[#allocation5 + $0x90] sm:$0xff]
        %v273 = vld [vmem:[#allocation5 + $0x98] sm:$0xff]
        %v274 = vld [vmem:[#allocation5 + $0xa0] sm:$0xff]
        %v275 = vld [vmem:[#allocation5 + $0xa8] sm:$0xff]
        %v276 = vld [vmem:[#allocation5 + $0xb0] sm:$0xff]
        %v277 = vld [vmem:[#allocation5 + $0xb8] sm:$0xff]
        %v278 = vld [vmem:[#allocation5 + $0xc0] sm:$0xff]
        %v279 = vld [vmem:[#allocation5 + $0xc8] sm:$0xff]
        %v280 = vld [vmem:[#allocation5 + $0xd0] sm:$0xff]
        %v281 = vld [vmem:[#allocation5 + $0xd8] sm:$0xff]
        %v282 = vld [vmem:[#allocation5 + $0xe0] sm:$0xff]
        %v283 = vld [vmem:[#allocation5 + $0xe8] sm:$0xff]
        %v284 = vld [vmem:[#allocation5 + $0xf0] sm:$0x1]
        %v285 = vld [vmem:[#allocation5 + $0xf8] sm:$0x1]
        %v286 = vld [vmem:[#allocation5 + $0x100] sm:$0x1]
        %v287 = vld [vmem:[#allocation5 + $0x108] sm:$0x1]
        %v288 = vld [vmem:[#allocation5 + $0x110] sm:$0x1]
        %v289 = vadd.f32 %v219, %v254
        %v290 = vadd.f32 %v220, %v255
        %v291 = vadd.f32 %v221, %v256
        %v292 = vadd.f32 %v222, %v257
        %v293 = vadd.f32 %v223, %v258
        %v294 = vadd.f32 %v224, %v259
        %v295 = vadd.f32 %v225, %v260
        %v296 = vadd.f32 %v226, %v261
        %v297 = vadd.f32 %v227, %v262
        %v298 = vadd.f32 %v228, %v263
        %v299 = vadd.f32 %v229, %v264
        %v300 = vadd.f32 %v230, %v265
        %v301 = vadd.f32 %v231, %v266
        %v302 = vadd.f32 %v232, %v267
        %v303 = vadd.f32 %v233, %v268
        %v304 = vadd.f32 %v234, %v269
        %v305 = vadd.f32 %v235, %v270
        %v306 = vadd.f32 %v236, %v271
        %v307 = vadd.f32 %v237, %v272
        %v308 = vadd.f32 %v238, %v273
        %v309 = vadd.f32 %v239, %v274
        %v310 = vadd.f32 %v240, %v275
        %v311 = vadd.f32 %v241, %v276
        %v312 = vadd.f32 %v242, %v277
        %v313 = vadd.f32 %v243, %v278
        %v314 = vadd.f32 %v244, %v279
        %v315 = vadd.f32 %v245, %v280
        %v316 = vadd.f32 %v246, %v281
        %v317 = vadd.f32 %v247, %v282
        %v318 = vadd.f32 %v248, %v283
        %v319 = vadd.f32 %v249, %v284
        %v320 = vadd.f32 %v250, %v285
        %v321 = vadd.f32 %v251, %v286
        %v322 = vadd.f32 %v252, %v287
        %v323 = vadd.f32 %v253, %v288
        %v324 = vld [vmem:[%s194] sm:$0xff]
        %v325 = vld [vmem:[%s194 + $0x8] sm:$0xff]
        %v326 = vld [vmem:[%s194 + $0x10] sm:$0xff]
        %v327 = vld [vmem:[%s194 + $0x18] sm:$0xff]
        %v328 = vld [vmem:[%s194 + $0x20] sm:$0xff]
        %v329 = vld [vmem:[%s194 + $0x28] sm:$0xff]
        %v330 = vld [vmem:[%s194 + $0x30] sm:$0xff]
        %v331 = vld [vmem:[%s194 + $0x38] sm:$0xff]
        %v332 = vld [vmem:[%s194 + $0x40] sm:$0xff]
        %v333 = vld [vmem:[%s194 + $0x48] sm:$0xff]
        %v334 = vld [vmem:[%s194 + $0x50] sm:$0xff]
        %v335 = vld [vmem:[%s194 + $0x58] sm:$0xff]
        %v336 = vld [vmem:[%s194 + $0x60] sm:$0xff]
        %v337 = vld [vmem:[%s194 + $0x68] sm:$0xff]
        %v338 = vld [vmem:[%s194 + $0x70] sm:$0xff]
        %v339 = vld [vmem:[%s194 + $0x78] sm:$0xff]
        %v340 = vld [vmem:[%s194 + $0x80] sm:$0xff]
        %v341 = vld [vmem:[%s194 + $0x88] sm:$0xff]
        %v342 = vld [vmem:[%s194 + $0x90] sm:$0xff]
        %v343 = vld [vmem:[%s194 + $0x98] sm:$0xff]
        %v344 = vld [vmem:[%s194 + $0xa0] sm:$0xff]
        %v345 = vld [vmem:[%s194 + $0xa8] sm:$0xff]
        %v346 = vld [vmem:[%s194 + $0xb0] sm:$0xff]
        %v347 = vld [vmem:[%s194 + $0xb8] sm:$0xff]
        %v348 = vld [vmem:[%s194 + $0xc0] sm:$0xff]
        %v349 = vld [vmem:[%s194 + $0xc8] sm:$0xff]
        %v350 = vld [vmem:[%s194 + $0xd0] sm:$0xff]
        %v351 = vld [vmem:[%s194 + $0xd8] sm:$0xff]
        %v352 = vld [vmem:[%s194 + $0xe0] sm:$0xff]
        %v353 = vld [vmem:[%s194 + $0xe8] sm:$0xff]
        %v354 = vld [vmem:[%s194 + $0xf0] sm:$0xff]
        %v355 = vld [vmem:[%s194 + $0xf8] sm:$0xff]
        %v356 = vld [vmem:[%s194 + $0x100] sm:$0xff]
        %v357 = vld [vmem:[%s194 + $0x108] sm:$0xff]
        %v358 = vld [vmem:[%s194 + $0x110] sm:$0xff]
        %v359 = vld [vmem:[%s194 + $0x118] sm:$0xff]
        %v360 = vld [vmem:[%s194 + $0x120] sm:$0xff]
        %v361 = vld [vmem:[%s194 + $0x128] sm:$0xff]
        %v362 = vld [vmem:[%s194 + $0x130] sm:$0xff]
        %v363 = vld [vmem:[%s194 + $0x138] sm:$0xff]
        %v364 = vld [vmem:[%s194 + $0x140] sm:$0xff]
        %v365 = vld [vmem:[%s194 + $0x148] sm:$0xff]
        %v366 = vld [vmem:[%s194 + $0x150] sm:$0xff]
        %v367 = vld [vmem:[%s194 + $0x158] sm:$0xff]
        %v368 = vld [vmem:[%s194 + $0x160] sm:$0xff]
        %v369 = vld [vmem:[%s194 + $0x168] sm:$0xff]
        %v370 = vld [vmem:[%s194 + $0x170] sm:$0xff]
        %v371 = vld [vmem:[%s194 + $0x178] sm:$0xff]
        %v372 = vld [vmem:[%s194 + $0x180] sm:$0xff]
        %v373 = vld [vmem:[%s194 + $0x188] sm:$0xff]
        %v374 = vld [vmem:[%s194 + $0x190] sm:$0xff]
        %v375 = vld [vmem:[%s194 + $0x198] sm:$0xff]
        %v376 = vld [vmem:[%s194 + $0x1a0] sm:$0xff]
        %v377 = vld [vmem:[%s194 + $0x1a8] sm:$0xff]
        %v378 = vld [vmem:[%s194 + $0x1b0] sm:$0xff]
        %v379 = vld [vmem:[%s194 + $0x1b8] sm:$0xff]
        %v380 = vld [vmem:[%s194 + $0x1c0] sm:$0xff]
        %v381 = vld [vmem:[%s194 + $0x1c8] sm:$0xff]
        %v382 = vld [vmem:[%s194 + $0x1d0] sm:$0xff]
        %v383 = vld [vmem:[%s194 + $0x1d8] sm:$0xff]
        %v384 = vld [vmem:[%s194 + $0x1e0] sm:$0xff]
        %v385 = vld [vmem:[%s194 + $0x1e8] sm:$0xff]
        %v386 = vld [vmem:[%s194 + $0x1f0] sm:$0xff]
        %v387 = vld [vmem:[%s194 + $0x1f8] sm:$0xff]
        %v388 = vld [vmem:[%s194 + $0x200] sm:$0xff]
        %v389 = vld [vmem:[%s194 + $0x208] sm:$0xff]
        %v390 = vld [vmem:[%s194 + $0x210] sm:$0xff]
        %v391 = vld [vmem:[%s194 + $0x218] sm:$0xff]
        %v392 = vld [vmem:[%s194 + $0x220] sm:$0xff]
        %v393 = vld [vmem:[%s194 + $0x228] sm:$0xff]
        %v394 = vld [vmem:[%s194 + $0x230] sm:$0xff]
        %v395 = vld [vmem:[%s194 + $0x238] sm:$0xff]
        %v396 = vld [vmem:[%s194 + $0x240] sm:$0xff]
        %v397 = vld [vmem:[%s194 + $0x248] sm:$0xff]
        %v398 = vld [vmem:[%s194 + $0x250] sm:$0xff]
        %v399 = vld [vmem:[%s194 + $0x258] sm:$0xff]
        %v400 = vld [vmem:[%s194 + $0x260] sm:$0xff]
        %v401 = vld [vmem:[%s194 + $0x268] sm:$0xff]
        %v402 = vld [vmem:[%s194 + $0x270] sm:$0xff]
        %v403 = vld [vmem:[%s194 + $0x278] sm:$0xff]
        %v404 = vld [vmem:[%s194 + $0x280] sm:$0xff]
        %v405 = vld [vmem:[%s194 + $0x288] sm:$0xff]
        %v406 = vld [vmem:[%s194 + $0x290] sm:$0xff]
        %v407 = vld [vmem:[%s194 + $0x298] sm:$0xff]
        %v408 = vld [vmem:[%s194 + $0x2a0] sm:$0xff]
        %v409 = vld [vmem:[%s194 + $0x2a8] sm:$0xff]
        %v410 = vld [vmem:[%s194 + $0x2b0] sm:$0xff]
        %v411 = vld [vmem:[%s194 + $0x2b8] sm:$0xff]
        %v412 = vld [vmem:[%s194 + $0x2c0] sm:$0xff]
        %v413 = vld [vmem:[%s194 + $0x2c8] sm:$0xff]
        %v414 = vld [vmem:[%s194 + $0x2d0] sm:$0xff]
        %v415 = vld [vmem:[%s194 + $0x2d8] sm:$0xff]
        %v416 = vld [vmem:[%s194 + $0x2e0] sm:$0xff]
        %v417 = vld [vmem:[%s194 + $0x2e8] sm:$0xff]
        %v418 = vld [vmem:[%s194 + $0x2f0] sm:$0xff]
        %v419 = vld [vmem:[%s194 + $0x2f8] sm:$0xff]
        %v420 = vld [vmem:[%s194 + $0x300] sm:$0xff]
        %v421 = vld [vmem:[%s194 + $0x308] sm:$0xff]
        %v422 = vld [vmem:[%s194 + $0x310] sm:$0xff]
        %v423 = vld [vmem:[%s194 + $0x318] sm:$0xff]
        %v424 = vld [vmem:[%s194 + $0x320] sm:$0xff]
        %v425 = vld [vmem:[%s194 + $0x328] sm:$0xff]
        %v426 = vld [vmem:[%s194 + $0x330] sm:$0xff]
        %v427 = vld [vmem:[%s194 + $0x338] sm:$0xff]
        %v428 = vld [vmem:[%s194 + $0x340] sm:$0xff]
        %v429 = vld [vmem:[%s194 + $0x348] sm:$0xff]
        %v430 = vld [vmem:[%s194 + $0x350] sm:$0xff]
        %v431 = vld [vmem:[%s194 + $0x358] sm:$0xff]
        %v432 = vld [vmem:[%s194 + $0x360] sm:$0xff]
        %v433 = vld [vmem:[%s194 + $0x368] sm:$0xff]
        %v434 = vld [vmem:[%s194 + $0x370] sm:$0xff]
        %v435 = vld [vmem:[%s194 + $0x378] sm:$0xff]
        %v436 = vld [vmem:[%s194 + $0x380] sm:$0xff]
        %v437 = vld [vmem:[%s194 + $0x388] sm:$0xff]
        %v438 = vld [vmem:[%s194 + $0x390] sm:$0xff]
        %v439 = vld [vmem:[%s194 + $0x398] sm:$0xff]
        %v440 = vld [vmem:[%s194 + $0x3a0] sm:$0xff]
        %v441 = vld [vmem:[%s194 + $0x3a8] sm:$0xff]
        %v442 = vld [vmem:[%s194 + $0x3b0] sm:$0xff]
        %v443 = vld [vmem:[%s194 + $0x3b8] sm:$0xff]
        %v444 = vld [vmem:[%s194 + $0x3c0] sm:$0xff]
        %v445 = vld [vmem:[%s194 + $0x3c8] sm:$0xff]
        %v446 = vld [vmem:[%s194 + $0x3d0] sm:$0xff]
        %v447 = vld [vmem:[%s194 + $0x3d8] sm:$0xff]
        %v448 = vld [vmem:[%s194 + $0x3e0] sm:$0xff]
        %v449 = vld [vmem:[%s194 + $0x3e8] sm:$0xff]
        %v450 = vld [vmem:[%s194 + $0x3f0] sm:$0xff]
        %v451 = vld [vmem:[%s194 + $0x3f8] sm:$0xff]
        %v452 = vld [vmem:[%s194 + $0x400] sm:$0xff]
        %v453 = vld [vmem:[%s194 + $0x408] sm:$0xff]
        %v454 = vld [vmem:[%s194 + $0x410] sm:$0xff]
        %v455 = vld [vmem:[%s194 + $0x418] sm:$0xff]
        %v456 = vld [vmem:[%s194 + $0x420] sm:$0xff]
        %v457 = vld [vmem:[%s194 + $0x428] sm:$0xff]
        %v458 = vld [vmem:[%s194 + $0x430] sm:$0xff]
        %v459 = vld [vmem:[%s194 + $0x438] sm:$0xff]
        %v460 = vld [vmem:[%s194 + $0x440] sm:$0xff]
        %v461 = vld [vmem:[%s194 + $0x448] sm:$0xff]
        %v462 = vld [vmem:[%s194 + $0x450] sm:$0xff]
        %v463 = vld [vmem:[%s194 + $0x458] sm:$0xff]
        %v464 = vld [vmem:[%s194 + $0x460] sm:$0xff]
        %v465 = vld [vmem:[%s194 + $0x468] sm:$0xff]
        %v466 = vld [vmem:[%s194 + $0x470] sm:$0xff]
        %v467 = vld [vmem:[%s194 + $0x478] sm:$0xff]
        %v468 = vld [vmem:[%s194 + $0x480] sm:$0xff]
        %v469 = vld [vmem:[%s194 + $0x488] sm:$0xff]
        %v470 = vld [vmem:[%s194 + $0x490] sm:$0xff]
        %v471 = vld [vmem:[%s194 + $0x498] sm:$0xff]
        %v472 = vld [vmem:[%s194 + $0x4a0] sm:$0xff]
        %v473 = vld [vmem:[%s194 + $0x4a8] sm:$0xff]
        %v474 = vld [vmem:[%s194 + $0x4b0] sm:$0xff]
        %v475 = vld [vmem:[%s194 + $0x4b8] sm:$0xff]
        %v476 = vld [vmem:[%s194 + $0x4c0] sm:$0xff]
        %v477 = vld [vmem:[%s194 + $0x4c8] sm:$0xff]
        %v478 = vld [vmem:[%s194 + $0x4d0] sm:$0xff]
        %v479 = vld [vmem:[%s194 + $0x4d8] sm:$0xff]
        %v480 = vld [vmem:[%s194 + $0x4e0] sm:$0xff]
        %v481 = vld [vmem:[%s194 + $0x4e8] sm:$0xff]
        %v482 = vld [vmem:[%s194 + $0x4f0] sm:$0xff]
        %v483 = vld [vmem:[%s194 + $0x4f8] sm:$0xff]
        %v484 = vld [vmem:[%s194 + $0x500] sm:$0xff]
        %v485 = vld [vmem:[%s194 + $0x508] sm:$0xff]
        %v486 = vld [vmem:[%s194 + $0x510] sm:$0xff]
        %v487 = vld [vmem:[%s194 + $0x518] sm:$0xff]
        %v488 = vld [vmem:[%s194 + $0x520] sm:$0xff]
        %v489 = vld [vmem:[%s194 + $0x528] sm:$0xff]
        %v490 = vld [vmem:[%s194 + $0x530] sm:$0xff]
        %v491 = vld [vmem:[%s194 + $0x538] sm:$0xff]
        %v492 = vld [vmem:[%s194 + $0x540] sm:$0xff]
        %v493 = vld [vmem:[%s194 + $0x548] sm:$0xff]
        %v494 = vld [vmem:[%s194 + $0x550] sm:$0xff]
        %v495 = vld [vmem:[%s194 + $0x558] sm:$0xff]
        %v496 = vld [vmem:[%s194 + $0x560] sm:$0xff]
        %v497 = vld [vmem:[%s194 + $0x568] sm:$0xff]
        %v498 = vld [vmem:[%s194 + $0x570] sm:$0xff]
        %v499 = vld [vmem:[%s194 + $0x578] sm:$0xff]
        %v500 = vld [vmem:[%s194 + $0x580] sm:$0xff]
        %v501 = vld [vmem:[%s194 + $0x588] sm:$0xff]
        %v502 = vld [vmem:[%s194 + $0x590] sm:$0xff]
        %v503 = vld [vmem:[%s194 + $0x598] sm:$0xff]
        %v504 = vld [vmem:[%s194 + $0x5a0] sm:$0xff]
        %v505 = vld [vmem:[%s194 + $0x5a8] sm:$0xff]
        %v506 = vld [vmem:[%s194 + $0x5b0] sm:$0xff]
        %v507 = vld [vmem:[%s194 + $0x5b8] sm:$0xff]
        %v508 = vld [vmem:[%s194 + $0x5c0] sm:$0xff]
        %v509 = vld [vmem:[%s194 + $0x5c8] sm:$0xff]
        %v510 = vld [vmem:[%s194 + $0x5d0] sm:$0xff]
        %v511 = vld [vmem:[%s194 + $0x5d8] sm:$0xff]
        %v512 = vld [vmem:[%s194 + $0x5e0] sm:$0xff]
        %v513 = vld [vmem:[%s194 + $0x5e8] sm:$0xff]
        %v514 = vld [vmem:[%s194 + $0x5f0] sm:$0xff]
        %v515 = vld [vmem:[%s194 + $0x5f8] sm:$0xff]
        %v516 = vld [vmem:[%s194 + $0x600] sm:$0xff]
        %v517 = vld [vmem:[%s194 + $0x608] sm:$0xff]
        %v518 = vld [vmem:[%s194 + $0x610] sm:$0xff]
        %v519 = vld [vmem:[%s194 + $0x618] sm:$0xff]
        %v520 = vld [vmem:[%s194 + $0x620] sm:$0xff]
        %v521 = vld [vmem:[%s194 + $0x628] sm:$0xff]
        %v522 = vld [vmem:[%s194 + $0x630] sm:$0xff]
        %v523 = vld [vmem:[%s194 + $0x638] sm:$0xff]
        %v524 = vld [vmem:[%s194 + $0x640] sm:$0xff]
        %v525 = vld [vmem:[%s194 + $0x648] sm:$0xff]
        %v526 = vld [vmem:[%s194 + $0x650] sm:$0xff]
        %v527 = vld [vmem:[%s194 + $0x658] sm:$0xff]
        %v528 = vld [vmem:[%s194 + $0x660] sm:$0xff]
        %v529 = vld [vmem:[%s194 + $0x668] sm:$0xff]
        %v530 = vld [vmem:[%s194 + $0x670] sm:$0xff]
        %v531 = vld [vmem:[%s194 + $0x678] sm:$0xff]
        %v532 = vld [vmem:[%s194 + $0x680] sm:$0xff]
        %v533 = vld [vmem:[%s194 + $0x688] sm:$0xff]
        %v534 = vld [vmem:[%s194 + $0x690] sm:$0xff]
        %v535 = vld [vmem:[%s194 + $0x698] sm:$0xff]
        %v536 = vld [vmem:[%s194 + $0x6a0] sm:$0xff]
        %v537 = vld [vmem:[%s194 + $0x6a8] sm:$0xff]
        %v538 = vld [vmem:[%s194 + $0x6b0] sm:$0xff]
        %v539 = vld [vmem:[%s194 + $0x6b8] sm:$0xff]
        %v540 = vld [vmem:[%s194 + $0x6c0] sm:$0xff]
        %v541 = vld [vmem:[%s194 + $0x6c8] sm:$0xff]
        %v542 = vld [vmem:[%s194 + $0x6d0] sm:$0xff]
        %v543 = vld [vmem:[%s194 + $0x6d8] sm:$0xff]
        %v544 = vld [vmem:[%s194 + $0x6e0] sm:$0xff]
        %v545 = vld [vmem:[%s194 + $0x6e8] sm:$0xff]
        %v546 = vld [vmem:[%s194 + $0x6f0] sm:$0xff]
        %v547 = vld [vmem:[%s194 + $0x6f8] sm:$0xff]
        %v548 = vld [vmem:[%s194 + $0x700] sm:$0xff]
        %v549 = vld [vmem:[%s194 + $0x708] sm:$0xff]
        %v550 = vld [vmem:[%s194 + $0x710] sm:$0xff]
        %v551 = vld [vmem:[%s194 + $0x718] sm:$0xff]
        %v552 = vld [vmem:[%s194 + $0x720] sm:$0xff]
        %v553 = vld [vmem:[%s194 + $0x728] sm:$0xff]
        %v554 = vld [vmem:[%s194 + $0x730] sm:$0xff]
        %v555 = vld [vmem:[%s194 + $0x738] sm:$0xff]
        %v556 = vld [vmem:[%s194 + $0x740] sm:$0xff]
        %v557 = vld [vmem:[%s194 + $0x748] sm:$0xff]
        %v558 = vld [vmem:[%s194 + $0x750] sm:$0xff]
        %v559 = vld [vmem:[%s194 + $0x758] sm:$0xff]
        %v560 = vld [vmem:[%s194 + $0x760] sm:$0xff]
        %v561 = vld [vmem:[%s194 + $0x768] sm:$0xff]
        %v562 = vld [vmem:[%s194 + $0x770] sm:$0xff]
        %v563 = vld [vmem:[%s194 + $0x778] sm:$0xff]
        %v564 = vld [vmem:[%s194 + $0x780] sm:$0xff]
        %v565 = vld [vmem:[%s194 + $0x788] sm:$0xff]
        %v566 = vld [vmem:[%s194 + $0x790] sm:$0xff]
        %v567 = vld [vmem:[%s194 + $0x798] sm:$0xff]
        %v568 = vld [vmem:[%s194 + $0x7a0] sm:$0xff]
        %v569 = vld [vmem:[%s194 + $0x7a8] sm:$0xff]
        %v570 = vld [vmem:[%s194 + $0x7b0] sm:$0xff]
        %v571 = vld [vmem:[%s194 + $0x7b8] sm:$0xff]
        %v572 = vld [vmem:[%s194 + $0x7c0] sm:$0xff]
        %v573 = vld [vmem:[%s194 + $0x7c8] sm:$0xff]
        %v574 = vld [vmem:[%s194 + $0x7d0] sm:$0xff]
        %v575 = vld [vmem:[%s194 + $0x7d8] sm:$0xff]
        %v576 = vld [vmem:[%s194 + $0x7e0] sm:$0xff]
        %v577 = vld [vmem:[%s194 + $0x7e8] sm:$0xff]
        %v578 = vld [vmem:[%s194 + $0x7f0] sm:$0xff]
        %v579 = vld [vmem:[%s194 + $0x7f8] sm:$0xff]
        %v580 = vld [vmem:[%s194 + $0x800] sm:$0xff]
        %v581 = vld [vmem:[%s194 + $0x808] sm:$0xff]
        %v582 = vld [vmem:[%s194 + $0x810] sm:$0xff]
        %v583 = vld [vmem:[%s194 + $0x818] sm:$0xff]
        %v584 = vld [vmem:[%s194 + $0x820] sm:$0xff]
        %v585 = vld [vmem:[%s194 + $0x828] sm:$0xff]
        %v586 = vld [vmem:[%s194 + $0x830] sm:$0xff]
        %v587 = vld [vmem:[%s194 + $0x838] sm:$0xff]
        %v588 = vld [vmem:[%s194 + $0x840] sm:$0xff]
        %v589 = vld [vmem:[%s194 + $0x848] sm:$0xff]
        %v590 = vld [vmem:[%s194 + $0x850] sm:$0xff]
        %v591 = vld [vmem:[%s194 + $0x858] sm:$0xff]
        %v592 = vld [vmem:[%s194 + $0x860] sm:$0xff]
        %v593 = vld [vmem:[%s194 + $0x868] sm:$0xff]
        %v594 = vld [vmem:[%s194 + $0x870] sm:$0xff]
        %v595 = vld [vmem:[%s194 + $0x878] sm:$0xff]
        %v596 = vld [vmem:[%s194 + $0x880] sm:$0xff]
        %v597 = vld [vmem:[%s194 + $0x888] sm:$0xff]
        %v598 = vld [vmem:[%s194 + $0x890] sm:$0xff]
        %v599 = vld [vmem:[%s194 + $0x898] sm:$0xff]
        %v600 = vld [vmem:[%s194 + $0x8a0] sm:$0xff]
        %v601 = vld [vmem:[%s194 + $0x8a8] sm:$0xff]
        %v602 = vld [vmem:[%s194 + $0x8b0] sm:$0xff]
        %v603 = vld [vmem:[%s194 + $0x8b8] sm:$0xff]
        %v604 = vld [vmem:[%s194 + $0x8c0] sm:$0xff]
        %v605 = vld [vmem:[%s194 + $0x8c8] sm:$0xff]
        %v606 = vld [vmem:[%s194 + $0x8d0] sm:$0xff]
        %v607 = vld [vmem:[%s194 + $0x8d8] sm:$0xff]
        %v608 = vld [vmem:[%s194 + $0x8e0] sm:$0xff]
        %v609 = vld [vmem:[%s194 + $0x8e8] sm:$0xff]
        %v610 = vld [vmem:[%s194 + $0x8f0] sm:$0xff]
        %v611 = vld [vmem:[%s194 + $0x8f8] sm:$0xff]
        %v612 = vld [vmem:[%s194 + $0x900] sm:$0xff]
        %v613 = vld [vmem:[%s194 + $0x908] sm:$0xff]
        %v614 = vld [vmem:[%s194 + $0x910] sm:$0xff]
        %v615 = vld [vmem:[%s194 + $0x918] sm:$0xff]
        %v616 = vld [vmem:[%s194 + $0x920] sm:$0xff]
        %v617 = vld [vmem:[%s194 + $0x928] sm:$0xff]
        %v618 = vld [vmem:[%s194 + $0x930] sm:$0xff]
        %v619 = vld [vmem:[%s194 + $0x938] sm:$0xff]
        %v620 = vld [vmem:[%s194 + $0x940] sm:$0xff]
        %v621 = vld [vmem:[%s194 + $0x948] sm:$0xff]
        %v622 = vld [vmem:[%s194 + $0x950] sm:$0xff]
        %v623 = vld [vmem:[%s194 + $0x958] sm:$0xff]
        %v624 = vld [vmem:[%s194 + $0x960] sm:$0xff]
        %v625 = vld [vmem:[%s194 + $0x968] sm:$0xff]
        %v626 = vld [vmem:[%s194 + $0x970] sm:$0xff]
        %v627 = vld [vmem:[%s194 + $0x978] sm:$0xff]
        %v628 = vld [vmem:[%s194 + $0x980] sm:$0xff]
        %v629 = vld [vmem:[%s194 + $0x988] sm:$0xff]
        %v630 = vld [vmem:[%s194 + $0x990] sm:$0xff]
        %v631 = vld [vmem:[%s194 + $0x998] sm:$0xff]
        %v632 = vld [vmem:[%s194 + $0x9a0] sm:$0xff]
        %v633 = vld [vmem:[%s194 + $0x9a8] sm:$0xff]
        %v634 = vld [vmem:[%s194 + $0x9b0] sm:$0xff]
        %v635 = vld [vmem:[%s194 + $0x9b8] sm:$0xff]
        %v636 = vld [vmem:[%s194 + $0x9c0] sm:$0xff]
        %v637 = vld [vmem:[%s194 + $0x9c8] sm:$0xff]
        %v638 = vld [vmem:[%s194 + $0x9d0] sm:$0xff]
        %v639 = vld [vmem:[%s194 + $0x9d8] sm:$0xff]
        %v640 = vld [vmem:[%s194 + $0x9e0] sm:$0xff]
        %v641 = vld [vmem:[%s194 + $0x9e8] sm:$0xff]
        %v642 = vld [vmem:[%s194 + $0x9f0] sm:$0xff]
        %v643 = vld [vmem:[%s194 + $0x9f8] sm:$0xff]
        %v644 = vld [vmem:[%s194 + $0xa00] sm:$0xff]
        %v645 = vld [vmem:[%s194 + $0xa08] sm:$0xff]
        %v646 = vld [vmem:[%s194 + $0xa10] sm:$0xff]
        %v647 = vld [vmem:[%s194 + $0xa18] sm:$0xff]
        %v648 = vld [vmem:[%s194 + $0xa20] sm:$0xff]
        %v649 = vld [vmem:[%s194 + $0xa28] sm:$0xff]
        %v650 = vld [vmem:[%s194 + $0xa30] sm:$0xff]
        %v651 = vld [vmem:[%s194 + $0xa38] sm:$0xff]
        %v652 = vld [vmem:[%s194 + $0xa40] sm:$0xff]
        %v653 = vld [vmem:[%s194 + $0xa48] sm:$0xff]
        %v654 = vld [vmem:[%s194 + $0xa50] sm:$0xff]
        %v655 = vld [vmem:[%s194 + $0xa58] sm:$0xff]
        %v656 = vld [vmem:[%s194 + $0xa60] sm:$0xff]
        %v657 = vld [vmem:[%s194 + $0xa68] sm:$0xff]
        %v658 = vld [vmem:[%s194 + $0xa70] sm:$0xff]
        %v659 = vld [vmem:[%s194 + $0xa78] sm:$0xff]
        %v660 = vld [vmem:[%s194 + $0xa80] sm:$0xff]
        %v661 = vld [vmem:[%s194 + $0xa88] sm:$0xff]
        %v662 = vld [vmem:[%s194 + $0xa90] sm:$0xff]
        %v663 = vld [vmem:[%s194 + $0xa98] sm:$0xff]
        %v664 = vld [vmem:[%s194 + $0xaa0] sm:$0xff]
        %v665 = vld [vmem:[%s194 + $0xaa8] sm:$0xff]
        %v666 = vld [vmem:[%s194 + $0xab0] sm:$0xff]
        %v667 = vld [vmem:[%s194 + $0xab8] sm:$0xff]
        %v668 = vld [vmem:[%s194 + $0xac0] sm:$0xff]
        %v669 = vld [vmem:[%s194 + $0xac8] sm:$0xff]
        %v670 = vld [vmem:[%s194 + $0xad0] sm:$0xff]
        %v671 = vld [vmem:[%s194 + $0xad8] sm:$0xff]
        %v672 = vld [vmem:[%s194 + $0xae0] sm:$0xff]
        %v673 = vld [vmem:[%s194 + $0xae8] sm:$0xff]
        %v674 = vld [vmem:[%s194 + $0xaf0] sm:$0xff]
        %v675 = vld [vmem:[%s194 + $0xaf8] sm:$0xff]
        %v676 = vld [vmem:[%s194 + $0xb00] sm:$0xff]
        %v677 = vld [vmem:[%s194 + $0xb08] sm:$0xff]
        %v678 = vld [vmem:[%s194 + $0xb10] sm:$0xff]
        %v679 = vld [vmem:[%s194 + $0xb18] sm:$0xff]
        %v680 = vld [vmem:[%s194 + $0xb20] sm:$0xff]
        %v681 = vld [vmem:[%s194 + $0xb28] sm:$0xff]
        %v682 = vld [vmem:[%s194 + $0xb30] sm:$0xff]
        %v683 = vld [vmem:[%s194 + $0xb38] sm:$0xff]
        %v684 = vld [vmem:[%s194 + $0xb40] sm:$0xff]
        %v685 = vld [vmem:[%s194 + $0xb48] sm:$0xff]
        %v686 = vld [vmem:[%s194 + $0xb50] sm:$0xff]
        %v687 = vld [vmem:[%s194 + $0xb58] sm:$0xff]
        %v688 = vld [vmem:[%s194 + $0xb60] sm:$0xff]
        %v689 = vld [vmem:[%s194 + $0xb68] sm:$0xff]
        %v690 = vld [vmem:[%s194 + $0xb70] sm:$0xff]
        %v691 = vld [vmem:[%s194 + $0xb78] sm:$0xff]
        %v692 = vld [vmem:[%s194 + $0xb80] sm:$0xff]
        %v693 = vld [vmem:[%s194 + $0xb88] sm:$0xff]
        %v694 = vld [vmem:[%s194 + $0xb90] sm:$0xff]
        %v695 = vld [vmem:[%s194 + $0xb98] sm:$0xff]
        %v696 = vld [vmem:[%s194 + $0xba0] sm:$0xff]
        %v697 = vld [vmem:[%s194 + $0xba8] sm:$0xff]
        %v698 = vld [vmem:[%s194 + $0xbb0] sm:$0xff]
        %v699 = vld [vmem:[%s194 + $0xbb8] sm:$0xff]
        %v700 = vld [vmem:[%s194 + $0xbc0] sm:$0xff]
        %v701 = vld [vmem:[%s194 + $0xbc8] sm:$0xff]
        %v702 = vld [vmem:[%s194 + $0xbd0] sm:$0xff]
        %v703 = vld [vmem:[%s194 + $0xbd8] sm:$0xff]
        %v704 = vld [vmem:[%s194 + $0xbe0] sm:$0xff]
        %v705 = vld [vmem:[%s194 + $0xbe8] sm:$0xff]
        %v706 = vld [vmem:[%s194 + $0xbf0] sm:$0xff]
        %v707 = vld [vmem:[%s194 + $0xbf8] sm:$0xff]
        %v708 = vld [vmem:[%s194 + $0xc00] sm:$0xff]
        %v709 = vld [vmem:[%s194 + $0xc08] sm:$0xff]
        %v710 = vld [vmem:[%s194 + $0xc10] sm:$0xff]
        %v711 = vld [vmem:[%s194 + $0xc18] sm:$0xff]
        %v712 = vld [vmem:[%s194 + $0xc20] sm:$0xff]
        %v713 = vld [vmem:[%s194 + $0xc28] sm:$0xff]
        %v714 = vld [vmem:[%s194 + $0xc30] sm:$0xff]
        %v715 = vld [vmem:[%s194 + $0xc38] sm:$0xff]
        %v716 = vld [vmem:[%s194 + $0xc40] sm:$0xff]
        %v717 = vld [vmem:[%s194 + $0xc48] sm:$0xff]
        %v718 = vld [vmem:[%s194 + $0xc50] sm:$0xff]
        %v719 = vld [vmem:[%s194 + $0xc58] sm:$0xff]
        %v720 = vld [vmem:[%s194 + $0xc60] sm:$0xff]
        %v721 = vld [vmem:[%s194 + $0xc68] sm:$0xff]
        %v722 = vld [vmem:[%s194 + $0xc70] sm:$0xff]
        %v723 = vld [vmem:[%s194 + $0xc78] sm:$0xff]
        %v724 = vld [vmem:[%s194 + $0xc80] sm:$0xff]
        %v725 = vld [vmem:[%s194 + $0xc88] sm:$0xff]
        %v726 = vld [vmem:[%s194 + $0xc90] sm:$0xff]
        %v727 = vld [vmem:[%s194 + $0xc98] sm:$0xff]
        %v728 = vld [vmem:[%s194 + $0xca0] sm:$0xff]
        %v729 = vld [vmem:[%s194 + $0xca8] sm:$0xff]
        %v730 = vld [vmem:[%s194 + $0xcb0] sm:$0xff]
        %v731 = vld [vmem:[%s194 + $0xcb8] sm:$0xff]
        %v732 = vld [vmem:[%s194 + $0xcc0] sm:$0xff]
        %v733 = vld [vmem:[%s194 + $0xcc8] sm:$0xff]
        %v734 = vld [vmem:[%s194 + $0xcd0] sm:$0xff]
        %v735 = vld [vmem:[%s194 + $0xcd8] sm:$0xff]
        %v736 = vld [vmem:[%s194 + $0xce0] sm:$0xff]
        %v737 = vld [vmem:[%s194 + $0xce8] sm:$0xff]
        %v738 = vld [vmem:[%s194 + $0xcf0] sm:$0xff]
        %v739 = vld [vmem:[%s194 + $0xcf8] sm:$0xff]
        %v740 = vld [vmem:[%s194 + $0xd00] sm:$0xff]
        %v741 = vld [vmem:[%s194 + $0xd08] sm:$0xff]
        %v742 = vld [vmem:[%s194 + $0xd10] sm:$0xff]
        %v743 = vld [vmem:[%s194 + $0xd18] sm:$0xff]
        %v744 = vld [vmem:[%s194 + $0xd20] sm:$0xff]
        %v745 = vld [vmem:[%s194 + $0xd28] sm:$0xff]
        %v746 = vld [vmem:[%s194 + $0xd30] sm:$0xff]
        %v747 = vld [vmem:[%s194 + $0xd38] sm:$0xff]
        %v748 = vld [vmem:[%s194 + $0xd40] sm:$0xff]
        %v749 = vld [vmem:[%s194 + $0xd48] sm:$0xff]
        %v750 = vld [vmem:[%s194 + $0xd50] sm:$0xff]
        %v751 = vld [vmem:[%s194 + $0xd58] sm:$0xff]
        %v752 = vld [vmem:[%s194 + $0xd60] sm:$0xff]
        %v753 = vld [vmem:[%s194 + $0xd68] sm:$0xff]
        %v754 = vld [vmem:[%s194 + $0xd70] sm:$0xff]
        %v755 = vld [vmem:[%s194 + $0xd78] sm:$0xff]
        %v756 = vld [vmem:[%s194 + $0xd80] sm:$0xff]
        %v757 = vld [vmem:[%s194 + $0xd88] sm:$0xff]
        %v758 = vld [vmem:[%s194 + $0xd90] sm:$0xff]
        %v759 = vld [vmem:[%s194 + $0xd98] sm:$0xff]
        %v760 = vld [vmem:[%s194 + $0xda0] sm:$0xff]
        %v761 = vld [vmem:[%s194 + $0xda8] sm:$0xff]
        %v762 = vld [vmem:[%s194 + $0xdb0] sm:$0xff]
        %v763 = vld [vmem:[%s194 + $0xdb8] sm:$0xff]
        %v764 = vld [vmem:[%s194 + $0xdc0] sm:$0xff]
        %v765 = vld [vmem:[%s194 + $0xdc8] sm:$0xff]
        %v766 = vld [vmem:[%s194 + $0xdd0] sm:$0xff]
        %v767 = vld [vmem:[%s194 + $0xdd8] sm:$0xff]
        %v768 = vld [vmem:[%s194 + $0xde0] sm:$0xff]
        %v769 = vld [vmem:[%s194 + $0xde8] sm:$0xff]
        %v770 = vld [vmem:[%s194 + $0xdf0] sm:$0xff]
        %v771 = vld [vmem:[%s194 + $0xdf8] sm:$0xff]
        %v772 = vld [vmem:[%s194 + $0xe00] sm:$0xff]
        %v773 = vld [vmem:[%s194 + $0xe08] sm:$0xff]
        %v774 = vld [vmem:[%s194 + $0xe10] sm:$0xff]
        %v775 = vld [vmem:[%s194 + $0xe18] sm:$0xff]
        %v776 = vld [vmem:[%s194 + $0xe20] sm:$0xff]
        %v777 = vld [vmem:[%s194 + $0xe28] sm:$0xff]
        %v778 = vld [vmem:[%s194 + $0xe30] sm:$0xff]
        %v779 = vld [vmem:[%s194 + $0xe38] sm:$0xff]
        %v780 = vld [vmem:[%s194 + $0xe40] sm:$0xff]
        %v781 = vld [vmem:[%s194 + $0xe48] sm:$0xff]
        %v782 = vld [vmem:[%s194 + $0xe50] sm:$0xff]
        %v783 = vld [vmem:[%s194 + $0xe58] sm:$0xff]
        %v784 = vld [vmem:[%s194 + $0xe60] sm:$0xff]
        %v785 = vld [vmem:[%s194 + $0xe68] sm:$0xff]
        %v786 = vld [vmem:[%s194 + $0xe70] sm:$0xff]
        %v787 = vld [vmem:[%s194 + $0xe78] sm:$0xff]
        %v788 = vld [vmem:[%s194 + $0xe80] sm:$0xff]
        %v789 = vld [vmem:[%s194 + $0xe88] sm:$0xff]
        %v790 = vld [vmem:[%s194 + $0xe90] sm:$0xff]
        %v791 = vld [vmem:[%s194 + $0xe98] sm:$0xff]
        %v792 = vld [vmem:[%s194 + $0xea0] sm:$0xff]
        %v793 = vld [vmem:[%s194 + $0xea8] sm:$0xff]
        %v794 = vld [vmem:[%s194 + $0xeb0] sm:$0xff]
        %v795 = vld [vmem:[%s194 + $0xeb8] sm:$0xff]
        %v796 = vld [vmem:[%s194 + $0xec0] sm:$0xff]
        %v797 = vld [vmem:[%s194 + $0xec8] sm:$0xff]
        %v798 = vld [vmem:[%s194 + $0xed0] sm:$0xff]
        %v799 = vld [vmem:[%s194 + $0xed8] sm:$0xff]
        %v800 = vld [vmem:[%s194 + $0xee0] sm:$0xff]
        %v801 = vld [vmem:[%s194 + $0xee8] sm:$0xff]
        %v802 = vld [vmem:[%s194 + $0xef0] sm:$0xff]
        %v803 = vld [vmem:[%s194 + $0xef8] sm:$0xff]
        %v804 = vld [vmem:[%s194 + $0xf00] sm:$0xff]
        %v805 = vld [vmem:[%s194 + $0xf08] sm:$0xff]
        %v806 = vld [vmem:[%s194 + $0xf10] sm:$0xff]
        %v807 = vld [vmem:[%s194 + $0xf18] sm:$0xff]
        %v808 = vld [vmem:[%s194 + $0xf20] sm:$0xff]
        %v809 = vld [vmem:[%s194 + $0xf28] sm:$0xff]
        %v810 = vld [vmem:[%s194 + $0xf30] sm:$0xff]
        %v811 = vld [vmem:[%s194 + $0xf38] sm:$0xff]
        %v812 = vld [vmem:[%s194 + $0xf40] sm:$0xff]
        %v813 = vld [vmem:[%s194 + $0xf48] sm:$0xff]
        %v814 = vld [vmem:[%s194 + $0xf50] sm:$0xff]
        %v815 = vld [vmem:[%s194 + $0xf58] sm:$0xff]
        %v816 = vld [vmem:[%s194 + $0xf60] sm:$0xff]
        %v817 = vld [vmem:[%s194 + $0xf68] sm:$0xff]
        %v818 = vld [vmem:[%s194 + $0xf70] sm:$0xff]
        %v819 = vld [vmem:[%s194 + $0xf78] sm:$0xff]
        %v820 = vld [vmem:[%s194 + $0xf80] sm:$0xff]
        %v821 = vld [vmem:[%s194 + $0xf88] sm:$0xff]
        %v822 = vld [vmem:[%s194 + $0xf90] sm:$0xff]
        %v823 = vld [vmem:[%s194 + $0xf98] sm:$0xff]
        %v824 = vld [vmem:[%s194 + $0xfa0] sm:$0xff]
        %v825 = vld [vmem:[%s194 + $0xfa8] sm:$0xff]
        %v826 = vld [vmem:[%s194 + $0xfb0] sm:$0xff]
        %v827 = vld [vmem:[%s194 + $0xfb8] sm:$0xff]
        %v828 = vld [vmem:[%s194 + $0xfc0] sm:$0xff]
        %v829 = vld [vmem:[%s194 + $0xfc8] sm:$0xff]
        %v830 = vld [vmem:[%s194 + $0xfd0] sm:$0xff]
        %v831 = vld [vmem:[%s194 + $0xfd8] sm:$0xff]
        %v832 = vld [vmem:[%s194 + $0xfe0] sm:$0xff]
        %v833 = vld [vmem:[%s194 + $0xfe8] sm:$0xff]
        %v834 = vld [vmem:[%s194 + $0xff0] sm:$0xff]
        %v835 = vld [vmem:[%s194 + $0xff8] sm:$0xff]
        %v836 = vld [vmem:[%s194 + $0x1000] sm:$0xff]
        %v837 = vld [vmem:[%s194 + $0x1008] sm:$0xff]
        %v838 = vld [vmem:[%s194 + $0x1010] sm:$0xff]
        %v839 = vld [vmem:[%s194 + $0x1018] sm:$0xff]
        %v840 = vld [vmem:[%s194 + $0x1020] sm:$0xff]
        %v841 = vld [vmem:[%s194 + $0x1028] sm:$0xff]
        %v842 = vld [vmem:[%s194 + $0x1030] sm:$0xff]
        %v843 = vld [vmem:[%s194 + $0x1038] sm:$0xff]
        %v844 = vld [vmem:[%s194 + $0x1040] sm:$0xff]
        %v845 = vld [vmem:[%s194 + $0x1048] sm:$0xff]
        %v846 = vld [vmem:[%s194 + $0x1050] sm:$0xff]
        %v847 = vld [vmem:[%s194 + $0x1058] sm:$0xff]
        %v848 = vld [vmem:[%s194 + $0x1060] sm:$0xff]
        %v849 = vld [vmem:[%s194 + $0x1068] sm:$0xff]
        %v850 = vld [vmem:[%s194 + $0x1070] sm:$0xff]
        %v851 = vld [vmem:[%s194 + $0x1078] sm:$0xff]
        %v852 = vld [vmem:[%s194 + $0x1080] sm:$0xff]
        %v853 = vld [vmem:[%s194 + $0x1088] sm:$0xff]
        %v854 = vld [vmem:[%s194 + $0x1090] sm:$0xff]
        %v855 = vld [vmem:[%s194 + $0x1098] sm:$0xff]
        %v856 = vld [vmem:[%s194 + $0x10a0] sm:$0xff]
        %v857 = vld [vmem:[%s194 + $0x10a8] sm:$0xff]
        %v858 = vld [vmem:[%s194 + $0x10b0] sm:$0xff]
        %v859 = vld [vmem:[%s194 + $0x10b8] sm:$0xff]
        %v860 = vld [vmem:[%s194 + $0x10c0] sm:$0xff]
        %v861 = vld [vmem:[%s194 + $0x10c8] sm:$0xff]
        %v862 = vld [vmem:[%s194 + $0x10d0] sm:$0xff]
        %v863 = vld [vmem:[%s194 + $0x10d8] sm:$0xff]
        %v864 = vld [vmem:[%s194 + $0x10e0] sm:$0xff]
        %v865 = vld [vmem:[%s194 + $0x10e8] sm:$0xff]
        %v866 = vld [vmem:[%s194 + $0x10f0] sm:$0xff]
        %v867 = vld [vmem:[%s194 + $0x10f8] sm:$0xff]
        %v868 = vld [vmem:[%s194 + $0x1100] sm:$0xff]
        %v869 = vld [vmem:[%s194 + $0x1108] sm:$0xff]
        %v870 = vld [vmem:[%s194 + $0x1110] sm:$0xff]
        %v871 = vld [vmem:[%s194 + $0x1118] sm:$0xff]
        %v872 = vld [vmem:[%s194 + $0x1120] sm:$0xff]
        %v873 = vld [vmem:[%s194 + $0x1128] sm:$0xff]
        %v874 = vld [vmem:[%s194 + $0x1130] sm:$0xff]
        %v875 = vld [vmem:[%s194 + $0x1138] sm:$0xff]
        %v876 = vld [vmem:[%s194 + $0x1140] sm:$0xff]
        %v877 = vld [vmem:[%s194 + $0x1148] sm:$0xff]
        %v878 = vld [vmem:[%s194 + $0x1150] sm:$0xff]
        %v879 = vld [vmem:[%s194 + $0x1158] sm:$0xff]
        %v880 = vld [vmem:[%s194 + $0x1160] sm:$0xff]
        %v881 = vld [vmem:[%s194 + $0x1168] sm:$0xff]
        %v882 = vld [vmem:[%s194 + $0x1170] sm:$0xff]
        %v883 = vld [vmem:[%s194 + $0x1178] sm:$0xff]
        %v884 = vld [vmem:[%s194 + $0x1180] sm:$0xff]
        %v885 = vld [vmem:[%s194 + $0x1188] sm:$0xff]
        %v886 = vld [vmem:[%s194 + $0x1190] sm:$0xff]
        %v887 = vld [vmem:[%s194 + $0x1198] sm:$0xff]
        %v888 = vld [vmem:[%s194 + $0x11a0] sm:$0xff]
        %v889 = vld [vmem:[%s194 + $0x11a8] sm:$0xff]
        %v890 = vld [vmem:[%s194 + $0x11b0] sm:$0xff]
        %v891 = vld [vmem:[%s194 + $0x11b8] sm:$0xff]
        %v892 = vld [vmem:[%s194 + $0x11c0] sm:$0xff]
        %v893 = vld [vmem:[%s194 + $0x11c8] sm:$0xff]
        %v894 = vld [vmem:[%s194 + $0x11d0] sm:$0xff]
        %v895 = vld [vmem:[%s194 + $0x11d8] sm:$0xff]
        %v896 = vld [vmem:[%s194 + $0x11e0] sm:$0xff]
        %v897 = vld [vmem:[%s194 + $0x11e8] sm:$0xff]
        %v898 = vld [vmem:[%s194 + $0x11f0] sm:$0xff]
        %v899 = vld [vmem:[%s194 + $0x11f8] sm:$0xff]
        %v900 = vld [vmem:[%s194 + $0x1200] sm:$0xff]
        %v901 = vld [vmem:[%s194 + $0x1208] sm:$0xff]
        %v902 = vld [vmem:[%s194 + $0x1210] sm:$0xff]
        %v903 = vld [vmem:[%s194 + $0x1218] sm:$0xff]
        %v904 = vld [vmem:[%s194 + $0x1220] sm:$0xff]
        %v905 = vld [vmem:[%s194 + $0x1228] sm:$0xff]
        %v906 = vld [vmem:[%s194 + $0x1230] sm:$0xff]
        %v907 = vld [vmem:[%s194 + $0x1238] sm:$0xff]
        %v908 = vld [vmem:[%s194 + $0x1240] sm:$0xff]
        %v909 = vld [vmem:[%s194 + $0x1248] sm:$0xff]
        %v910 = vld [vmem:[%s194 + $0x1250] sm:$0xff]
        %v911 = vld [vmem:[%s194 + $0x1258] sm:$0xff]
        %v912 = vld [vmem:[%s194 + $0x1260] sm:$0xff]
        %v913 = vld [vmem:[%s194 + $0x1268] sm:$0xff]
        %v914 = vld [vmem:[%s194 + $0x1270] sm:$0xff]
        %v915 = vld [vmem:[%s194 + $0x1278] sm:$0xff]
        %v916 = vld [vmem:[%s194 + $0x1280] sm:$0xff]
        %v917 = vld [vmem:[%s194 + $0x1288] sm:$0xff]
        %v918 = vld [vmem:[%s194 + $0x1290] sm:$0xff]
        %v919 = vld [vmem:[%s194 + $0x1298] sm:$0xff]
        %v920 = vld [vmem:[%s194 + $0x12a0] sm:$0xff]
        %v921 = vld [vmem:[%s194 + $0x12a8] sm:$0xff]
        %v922 = vld [vmem:[%s194 + $0x12b0] sm:$0xff]
        %v923 = vld [vmem:[%s194 + $0x12b8] sm:$0xff]
        %v924 = vld [vmem:[%s194 + $0x12c0] sm:$0xff]
        %v925 = vld [vmem:[%s194 + $0x12c8] sm:$0xff]
        %v926 = vld [vmem:[%s194 + $0x12d0] sm:$0xff]
        %v927 = vld [vmem:[%s194 + $0x12d8] sm:$0xff]
        %v928 = vld [vmem:[%s194 + $0x12e0] sm:$0xff]
        %v929 = vld [vmem:[%s194 + $0x12e8] sm:$0xff]
        %v930 = vld [vmem:[%s194 + $0x12f0] sm:$0xff]
        %v931 = vld [vmem:[%s194 + $0x12f8] sm:$0xff]
        %v932 = vld [vmem:[%s194 + $0x1300] sm:$0xff]
        %v933 = vld [vmem:[%s194 + $0x1308] sm:$0xff]
        %v934 = vld [vmem:[%s194 + $0x1310] sm:$0xff]
        %v935 = vld [vmem:[%s194 + $0x1318] sm:$0xff]
        %v936 = vld [vmem:[%s194 + $0x1320] sm:$0xff]
        %v937 = vld [vmem:[%s194 + $0x1328] sm:$0xff]
        %v938 = vld [vmem:[%s194 + $0x1330] sm:$0xff]
        %v939 = vld [vmem:[%s194 + $0x1338] sm:$0xff]
        %v940 = vld [vmem:[%s194 + $0x1340] sm:$0xff]
        %v941 = vld [vmem:[%s194 + $0x1348] sm:$0xff]
        %v942 = vld [vmem:[%s194 + $0x1350] sm:$0xff]
        %v943 = vld [vmem:[%s194 + $0x1358] sm:$0xff]
        %v944 = vld [vmem:[%s194 + $0x1360] sm:$0xff]
        %v945 = vld [vmem:[%s194 + $0x1368] sm:$0xff]
        %v946 = vld [vmem:[%s194 + $0x1370] sm:$0xff]
        %v947 = vld [vmem:[%s194 + $0x1378] sm:$0xff]
        %v948 = vld [vmem:[%s194 + $0x1380] sm:$0xff]
        %v949 = vld [vmem:[%s194 + $0x1388] sm:$0xff]
        %v950 = vld [vmem:[%s194 + $0x1390] sm:$0xff]
        %v951 = vld [vmem:[%s194 + $0x1398] sm:$0xff]
        %v952 = vld [vmem:[%s194 + $0x13a0] sm:$0xff]
        %v953 = vld [vmem:[%s194 + $0x13a8] sm:$0xff]
        %v954 = vld [vmem:[%s194 + $0x13b0] sm:$0xff]
        %v955 = vld [vmem:[%s194 + $0x13b8] sm:$0xff]
        %v956 = vld [vmem:[%s194 + $0x13c0] sm:$0xff]
        %v957 = vld [vmem:[%s194 + $0x13c8] sm:$0xff]
        %v958 = vld [vmem:[%s194 + $0x13d0] sm:$0xff]
        %v959 = vld [vmem:[%s194 + $0x13d8] sm:$0xff]
        %v960 = vld [vmem:[%s194 + $0x13e0] sm:$0xff]
        %v961 = vld [vmem:[%s194 + $0x13e8] sm:$0xff]
        %v962 = vld [vmem:[%s194 + $0x13f0] sm:$0xff]
        %v963 = vld [vmem:[%s194 + $0x13f8] sm:$0xff]
        %v964 = vld [vmem:[%s194 + $0x1400] sm:$0xff]
        %v965 = vld [vmem:[%s194 + $0x1408] sm:$0xff]
        %v966 = vld [vmem:[%s194 + $0x1410] sm:$0xff]
        %v967 = vld [vmem:[%s194 + $0x1418] sm:$0xff]
        %v968 = vld [vmem:[%s194 + $0x1420] sm:$0xff]
        %v969 = vld [vmem:[%s194 + $0x1428] sm:$0xff]
        %v970 = vld [vmem:[%s194 + $0x1430] sm:$0xff]
        %v971 = vld [vmem:[%s194 + $0x1438] sm:$0xff]
        %v972 = vld [vmem:[%s194 + $0x1440] sm:$0xff]
        %v973 = vld [vmem:[%s194 + $0x1448] sm:$0xff]
        %v974 = vld [vmem:[%s194 + $0x1450] sm:$0xff]
        %v975 = vld [vmem:[%s194 + $0x1458] sm:$0xff]
        %v976 = vld [vmem:[%s194 + $0x1460] sm:$0xff]
        %v977 = vld [vmem:[%s194 + $0x1468] sm:$0xff]
        %v978 = vld [vmem:[%s194 + $0x1470] sm:$0xff]
        %v979 = vld [vmem:[%s194 + $0x1478] sm:$0xff]
        %v980 = vld [vmem:[%s194 + $0x1480] sm:$0xff]
        %v981 = vld [vmem:[%s194 + $0x1488] sm:$0xff]
        %v982 = vld [vmem:[%s194 + $0x1490] sm:$0xff]
        %v983 = vld [vmem:[%s194 + $0x1498] sm:$0xff]
        %v984 = vld [vmem:[%s194 + $0x14a0] sm:$0xff]
        %v985 = vld [vmem:[%s194 + $0x14a8] sm:$0xff]
        %v986 = vld [vmem:[%s194 + $0x14b0] sm:$0xff]
        %v987 = vld [vmem:[%s194 + $0x14b8] sm:$0xff]
        %v988 = vld [vmem:[%s194 + $0x14c0] sm:$0xff]
        %v989 = vld [vmem:[%s194 + $0x14c8] sm:$0xff]
        %v990 = vld [vmem:[%s194 + $0x14d0] sm:$0xff]
        %v991 = vld [vmem:[%s194 + $0x14d8] sm:$0xff]
        %v992 = vld [vmem:[%s194 + $0x14e0] sm:$0xff]
        %v993 = vld [vmem:[%s194 + $0x14e8] sm:$0xff]
        %v994 = vld [vmem:[%s194 + $0x14f0] sm:$0xff]
        %v995 = vld [vmem:[%s194 + $0x14f8] sm:$0xff]
        %v996 = vld [vmem:[%s194 + $0x1500] sm:$0xff]
        %v997 = vld [vmem:[%s194 + $0x1508] sm:$0xff]
        %v998 = vld [vmem:[%s194 + $0x1510] sm:$0xff]
        %v999 = vld [vmem:[%s194 + $0x1518] sm:$0xff]
        %v1000 = vld [vmem:[%s194 + $0x1520] sm:$0xff]
        %v1001 = vld [vmem:[%s194 + $0x1528] sm:$0xff]
        %v1002 = vld [vmem:[%s194 + $0x1530] sm:$0xff]
        %v1003 = vld [vmem:[%s194 + $0x1538] sm:$0xff]
        %v1004 = vld [vmem:[%s194 + $0x1540] sm:$0xff]
        %v1005 = vld [vmem:[%s194 + $0x1548] sm:$0xff]
        %v1006 = vld [vmem:[%s194 + $0x1550] sm:$0xff]
        %v1007 = vld [vmem:[%s194 + $0x1558] sm:$0xff]
        %v1008 = vld [vmem:[%s194 + $0x1560] sm:$0xff]
        %v1009 = vld [vmem:[%s194 + $0x1568] sm:$0xff]
        %v1010 = vld [vmem:[%s194 + $0x1570] sm:$0xff]
        %v1011 = vld [vmem:[%s194 + $0x1578] sm:$0xff]
        %v1012 = vld [vmem:[%s194 + $0x1580] sm:$0xff]
        %v1013 = vld [vmem:[%s194 + $0x1588] sm:$0xff]
        %v1014 = vld [vmem:[%s194 + $0x1590] sm:$0xff]
        %v1015 = vld [vmem:[%s194 + $0x1598] sm:$0xff]
        %v1016 = vld [vmem:[%s194 + $0x15a0] sm:$0xff]
        %v1017 = vld [vmem:[%s194 + $0x15a8] sm:$0xff]
        %v1018 = vld [vmem:[%s194 + $0x15b0] sm:$0xff]
        %v1019 = vld [vmem:[%s194 + $0x15b8] sm:$0xff]
        %v1020 = vld [vmem:[%s194 + $0x15c0] sm:$0xff]
        %v1021 = vld [vmem:[%s194 + $0x15c8] sm:$0xff]
        %v1022 = vld [vmem:[%s194 + $0x15d0] sm:$0xff]
        %v1023 = vld [vmem:[%s194 + $0x15d8] sm:$0xff]
        %v1024 = vld [vmem:[%s194 + $0x15e0] sm:$0xff]
        %v1025 = vld [vmem:[%s194 + $0x15e8] sm:$0xff]
        %v1026 = vld [vmem:[%s194 + $0x15f0] sm:$0xff]
        %v1027 = vld [vmem:[%s194 + $0x15f8] sm:$0xff]
        %v1028 = vld [vmem:[%s194 + $0x1600] sm:$0xff]
        %v1029 = vld [vmem:[%s194 + $0x1608] sm:$0xff]
        %v1030 = vld [vmem:[%s194 + $0x1610] sm:$0xff]
        %v1031 = vld [vmem:[%s194 + $0x1618] sm:$0xff]
        %v1032 = vld [vmem:[%s194 + $0x1620] sm:$0xff]
        %v1033 = vld [vmem:[%s194 + $0x1628] sm:$0xff]
        %v1034 = vld [vmem:[%s194 + $0x1630] sm:$0xff]
        %v1035 = vld [vmem:[%s194 + $0x1638] sm:$0xff]
        %v1036 = vld [vmem:[%s194 + $0x1640] sm:$0xff]
        %v1037 = vld [vmem:[%s194 + $0x1648] sm:$0xff]
        %v1038 = vld [vmem:[%s194 + $0x1650] sm:$0xff]
        %v1039 = vld [vmem:[%s194 + $0x1658] sm:$0xff]
        %v1040 = vld [vmem:[%s194 + $0x1660] sm:$0xff]
        %v1041 = vld [vmem:[%s194 + $0x1668] sm:$0xff]
        %v1042 = vld [vmem:[%s194 + $0x1670] sm:$0xff]
        %v1043 = vld [vmem:[%s194 + $0x1678] sm:$0xff]
        %v1044 = vld [vmem:[%s194 + $0x1680] sm:$0xff]
        %v1045 = vld [vmem:[%s194 + $0x1688] sm:$0xff]
        %v1046 = vld [vmem:[%s194 + $0x1690] sm:$0xff]
        %v1047 = vld [vmem:[%s194 + $0x1698] sm:$0xff]
        %v1048 = vld [vmem:[%s194 + $0x16a0] sm:$0xff]
        %v1049 = vld [vmem:[%s194 + $0x16a8] sm:$0xff]
        %v1050 = vld [vmem:[%s194 + $0x16b0] sm:$0xff]
        %v1051 = vld [vmem:[%s194 + $0x16b8] sm:$0xff]
        %v1052 = vld [vmem:[%s194 + $0x16c0] sm:$0xff]
        %v1053 = vld [vmem:[%s194 + $0x16c8] sm:$0xff]
        %v1054 = vld [vmem:[%s194 + $0x16d0] sm:$0xff]
        %v1055 = vld [vmem:[%s194 + $0x16d8] sm:$0xff]
        %v1056 = vld [vmem:[%s194 + $0x16e0] sm:$0xff]
        %v1057 = vld [vmem:[%s194 + $0x16e8] sm:$0xff]
        %v1058 = vld [vmem:[%s194 + $0x16f0] sm:$0xff]
        %v1059 = vld [vmem:[%s194 + $0x16f8] sm:$0xff]
        %v1060 = vld [vmem:[%s194 + $0x1700] sm:$0xff]
        %v1061 = vld [vmem:[%s194 + $0x1708] sm:$0xff]
        %v1062 = vld [vmem:[%s194 + $0x1710] sm:$0xff]
        %v1063 = vld [vmem:[%s194 + $0x1718] sm:$0xff]
        %v1064 = vld [vmem:[%s194 + $0x1720] sm:$0xff]
        %v1065 = vld [vmem:[%s194 + $0x1728] sm:$0xff]
        %v1066 = vld [vmem:[%s194 + $0x1730] sm:$0xff]
        %v1067 = vld [vmem:[%s194 + $0x1738] sm:$0xff]
        %v1068 = vld [vmem:[%s194 + $0x1740] sm:$0xff]
        %v1069 = vld [vmem:[%s194 + $0x1748] sm:$0xff]
        %v1070 = vld [vmem:[%s194 + $0x1750] sm:$0xff]
        %v1071 = vld [vmem:[%s194 + $0x1758] sm:$0xff]
        %v1072 = vld [vmem:[%s194 + $0x1760] sm:$0xff]
        %v1073 = vld [vmem:[%s194 + $0x1768] sm:$0xff]
        %v1074 = vld [vmem:[%s194 + $0x1770] sm:$0xff]
        %v1075 = vld [vmem:[%s194 + $0x1778] sm:$0xff]
        %v1076 = vld [vmem:[%s194 + $0x1780] sm:$0xff]
        %v1077 = vld [vmem:[%s194 + $0x1788] sm:$0xff]
        %v1078 = vld [vmem:[%s194 + $0x1790] sm:$0xff]
        %v1079 = vld [vmem:[%s194 + $0x1798] sm:$0xff]
        %v1080 = vld [vmem:[%s194 + $0x17a0] sm:$0xff]
        %v1081 = vld [vmem:[%s194 + $0x17a8] sm:$0xff]
        %v1082 = vld [vmem:[%s194 + $0x17b0] sm:$0xff]
        %v1083 = vld [vmem:[%s194 + $0x17b8] sm:$0xff]
        %v1084 = vld [vmem:[%s194 + $0x17c0] sm:$0xff]
        %v1085 = vld [vmem:[%s194 + $0x17c8] sm:$0xff]
        %v1086 = vld [vmem:[%s194 + $0x17d0] sm:$0xff]
        %v1087 = vld [vmem:[%s194 + $0x17d8] sm:$0xff]
        %v1088 = vld [vmem:[%s194 + $0x17e0] sm:$0xff]
        %v1089 = vld [vmem:[%s194 + $0x17e8] sm:$0xff]
        %v1090 = vld [vmem:[%s194 + $0x17f0] sm:$0xff]
        %v1091 = vld [vmem:[%s194 + $0x17f8] sm:$0xff]
        %v1092 = vld [vmem:[%s194 + $0x1800] sm:$0xff]
        %v1093 = vld [vmem:[%s194 + $0x1808] sm:$0xff]
        %v1094 = vld [vmem:[%s194 + $0x1810] sm:$0xff]
        %v1095 = vld [vmem:[%s194 + $0x1818] sm:$0xff]
        %v1096 = vld [vmem:[%s194 + $0x1820] sm:$0xff]
        %v1097 = vld [vmem:[%s194 + $0x1828] sm:$0xff]
        %v1098 = vld [vmem:[%s194 + $0x1830] sm:$0xff]
        %v1099 = vld [vmem:[%s194 + $0x1838] sm:$0xff]
        %v1100 = vld [vmem:[%s194 + $0x1840] sm:$0xff]
        %v1101 = vld [vmem:[%s194 + $0x1848] sm:$0xff]
        %v1102 = vld [vmem:[%s194 + $0x1850] sm:$0xff]
        %v1103 = vld [vmem:[%s194 + $0x1858] sm:$0xff]
        %v1104 = vld [vmem:[%s194 + $0x1860] sm:$0xff]
        %v1105 = vld [vmem:[%s194 + $0x1868] sm:$0xff]
        %v1106 = vld [vmem:[%s194 + $0x1870] sm:$0xff]
        %v1107 = vld [vmem:[%s194 + $0x1878] sm:$0xff]
        %v1108 = vld [vmem:[%s194 + $0x1880] sm:$0xff]
        %v1109 = vld [vmem:[%s194 + $0x1888] sm:$0xff]
        %v1110 = vld [vmem:[%s194 + $0x1890] sm:$0xff]
        %v1111 = vld [vmem:[%s194 + $0x1898] sm:$0xff]
        %v1112 = vld [vmem:[%s194 + $0x18a0] sm:$0xff]
        %v1113 = vld [vmem:[%s194 + $0x18a8] sm:$0xff]
        %v1114 = vld [vmem:[%s194 + $0x18b0] sm:$0xff]
        %v1115 = vld [vmem:[%s194 + $0x18b8] sm:$0xff]
        %v1116 = vld [vmem:[%s194 + $0x18c0] sm:$0xff]
        %v1117 = vld [vmem:[%s194 + $0x18c8] sm:$0xff]
        %v1118 = vld [vmem:[%s194 + $0x18d0] sm:$0xff]
        %v1119 = vld [vmem:[%s194 + $0x18d8] sm:$0xff]
        %v1120 = vld [vmem:[%s194 + $0x18e0] sm:$0xff]
        %v1121 = vld [vmem:[%s194 + $0x18e8] sm:$0xff]
        %v1122 = vld [vmem:[%s194 + $0x18f0] sm:$0xff]
        %v1123 = vld [vmem:[%s194 + $0x18f8] sm:$0xff]
        %v1124 = vld [vmem:[%s194 + $0x1900] sm:$0xff]
        %v1125 = vld [vmem:[%s194 + $0x1908] sm:$0xff]
        %v1126 = vld [vmem:[%s194 + $0x1910] sm:$0xff]
        %v1127 = vld [vmem:[%s194 + $0x1918] sm:$0xff]
        %v1128 = vld [vmem:[%s194 + $0x1920] sm:$0xff]
        %v1129 = vld [vmem:[%s194 + $0x1928] sm:$0xff]
        %v1130 = vld [vmem:[%s194 + $0x1930] sm:$0xff]
        %v1131 = vld [vmem:[%s194 + $0x1938] sm:$0xff]
        %v1132 = vld [vmem:[%s194 + $0x1940] sm:$0xff]
        %v1133 = vld [vmem:[%s194 + $0x1948] sm:$0xff]
        %v1134 = vld [vmem:[%s194 + $0x1950] sm:$0xff]
        %v1135 = vld [vmem:[%s194 + $0x1958] sm:$0xff]
        %v1136 = vld [vmem:[%s194 + $0x1960] sm:$0xff]
        %v1137 = vld [vmem:[%s194 + $0x1968] sm:$0xff]
        %v1138 = vld [vmem:[%s194 + $0x1970] sm:$0xff]
        %v1139 = vld [vmem:[%s194 + $0x1978] sm:$0xff]
        %v1140 = vld [vmem:[%s194 + $0x1980] sm:$0xff]
        %v1141 = vld [vmem:[%s194 + $0x1988] sm:$0xff]
        %v1142 = vld [vmem:[%s194 + $0x1990] sm:$0xff]
        %v1143 = vld [vmem:[%s194 + $0x1998] sm:$0xff]
        %v1144 = vld [vmem:[%s194 + $0x19a0] sm:$0xff]
        %v1145 = vld [vmem:[%s194 + $0x19a8] sm:$0xff]
        %v1146 = vld [vmem:[%s194 + $0x19b0] sm:$0xff]
        %v1147 = vld [vmem:[%s194 + $0x19b8] sm:$0xff]
        %v1148 = vld [vmem:[%s194 + $0x19c0] sm:$0xff]
        %v1149 = vld [vmem:[%s194 + $0x19c8] sm:$0xff]
        %v1150 = vld [vmem:[%s194 + $0x19d0] sm:$0xff]
        %v1151 = vld [vmem:[%s194 + $0x19d8] sm:$0xff]
        %v1152 = vld [vmem:[%s194 + $0x19e0] sm:$0xff]
        %v1153 = vld [vmem:[%s194 + $0x19e8] sm:$0xff]
        %v1154 = vld [vmem:[%s194 + $0x19f0] sm:$0xff]
        %v1155 = vld [vmem:[%s194 + $0x19f8] sm:$0xff]
        %v1156 = vld [vmem:[%s194 + $0x1a00] sm:$0xff]
        %v1157 = vld [vmem:[%s194 + $0x1a08] sm:$0xff]
        %v1158 = vld [vmem:[%s194 + $0x1a10] sm:$0xff]
        %v1159 = vld [vmem:[%s194 + $0x1a18] sm:$0xff]
        %v1160 = vld [vmem:[%s194 + $0x1a20] sm:$0xff]
        %v1161 = vld [vmem:[%s194 + $0x1a28] sm:$0xff]
        %v1162 = vld [vmem:[%s194 + $0x1a30] sm:$0xff]
        %v1163 = vld [vmem:[%s194 + $0x1a38] sm:$0xff]
        %v1164 = vld [vmem:[%s194 + $0x1a40] sm:$0xff]
        %v1165 = vld [vmem:[%s194 + $0x1a48] sm:$0xff]
        %v1166 = vld [vmem:[%s194 + $0x1a50] sm:$0xff]
        %v1167 = vld [vmem:[%s194 + $0x1a58] sm:$0xff]
        %v1168 = vld [vmem:[%s194 + $0x1a60] sm:$0xff]
        %v1169 = vld [vmem:[%s194 + $0x1a68] sm:$0xff]
        %v1170 = vld [vmem:[%s194 + $0x1a70] sm:$0xff]
        %v1171 = vld [vmem:[%s194 + $0x1a78] sm:$0xff]
        %v1172 = vld [vmem:[%s194 + $0x1a80] sm:$0xff]
        %v1173 = vld [vmem:[%s194 + $0x1a88] sm:$0xff]
        %v1174 = vld [vmem:[%s194 + $0x1a90] sm:$0xff]
        %v1175 = vld [vmem:[%s194 + $0x1a98] sm:$0xff]
        %v1176 = vld [vmem:[%s194 + $0x1aa0] sm:$0xff]
        %v1177 = vld [vmem:[%s194 + $0x1aa8] sm:$0xff]
        %v1178 = vld [vmem:[%s194 + $0x1ab0] sm:$0xff]
        %v1179 = vld [vmem:[%s194 + $0x1ab8] sm:$0xff]
        %v1180 = vld [vmem:[%s194 + $0x1ac0] sm:$0xff]
        %v1181 = vld [vmem:[%s194 + $0x1ac8] sm:$0xff]
        %v1182 = vld [vmem:[%s194 + $0x1ad0] sm:$0xff]
        %v1183 = vld [vmem:[%s194 + $0x1ad8] sm:$0xff]
        %v1184 = vld [vmem:[%s194 + $0x1ae0] sm:$0xff]
        %v1185 = vld [vmem:[%s194 + $0x1ae8] sm:$0xff]
        %v1186 = vld [vmem:[%s194 + $0x1af0] sm:$0xff]
        %v1187 = vld [vmem:[%s194 + $0x1af8] sm:$0xff]
        %v1188 = vld [vmem:[%s194 + $0x1b00] sm:$0xff]
        %v1189 = vld [vmem:[%s194 + $0x1b08] sm:$0xff]
        %v1190 = vld [vmem:[%s194 + $0x1b10] sm:$0xff]
        %v1191 = vld [vmem:[%s194 + $0x1b18] sm:$0xff]
        %v1192 = vld [vmem:[%s194 + $0x1b20] sm:$0xff]
        %v1193 = vld [vmem:[%s194 + $0x1b28] sm:$0xff]
        %v1194 = vld [vmem:[%s194 + $0x1b30] sm:$0xff]
        %v1195 = vld [vmem:[%s194 + $0x1b38] sm:$0xff]
        %v1196 = vld [vmem:[%s194 + $0x1b40] sm:$0xff]
        %v1197 = vld [vmem:[%s194 + $0x1b48] sm:$0xff]
        %v1198 = vld [vmem:[%s194 + $0x1b50] sm:$0xff]
        %v1199 = vld [vmem:[%s194 + $0x1b58] sm:$0xff]
        %v1200 = vld [vmem:[%s194 + $0x1b60] sm:$0xff]
        %v1201 = vld [vmem:[%s194 + $0x1b68] sm:$0xff]
        %v1202 = vld [vmem:[%s194 + $0x1b70] sm:$0xff]
        %v1203 = vld [vmem:[%s194 + $0x1b78] sm:$0xff]
        %v1204 = vld [vmem:[%s194 + $0x1b80] sm:$0xff]
        %v1205 = vld [vmem:[%s194 + $0x1b88] sm:$0xff]
        %v1206 = vld [vmem:[%s194 + $0x1b90] sm:$0xff]
        %v1207 = vld [vmem:[%s194 + $0x1b98] sm:$0xff]
        %v1208 = vld [vmem:[%s194 + $0x1ba0] sm:$0xff]
        %v1209 = vld [vmem:[%s194 + $0x1ba8] sm:$0xff]
        %v1210 = vld [vmem:[%s194 + $0x1bb0] sm:$0xff]
        %v1211 = vld [vmem:[%s194 + $0x1bb8] sm:$0xff]
        %v1212 = vld [vmem:[%s194 + $0x1bc0] sm:$0xff]
        %v1213 = vld [vmem:[%s194 + $0x1bc8] sm:$0xff]
        %v1214 = vld [vmem:[%s194 + $0x1bd0] sm:$0xff]
        %v1215 = vld [vmem:[%s194 + $0x1bd8] sm:$0xff]
        %v1216 = vld [vmem:[%s194 + $0x1be0] sm:$0xff]
        %v1217 = vld [vmem:[%s194 + $0x1be8] sm:$0xff]
        %v1218 = vld [vmem:[%s194 + $0x1bf0] sm:$0xff]
        %v1219 = vld [vmem:[%s194 + $0x1bf8] sm:$0xff]
        %v1220 = vld [vmem:[%s194 + $0x1c00] sm:$0xff]
        %v1221 = vld [vmem:[%s194 + $0x1c08] sm:$0xff]
        %v1222 = vld [vmem:[%s194 + $0x1c10] sm:$0xff]
        %v1223 = vld [vmem:[%s194 + $0x1c18] sm:$0xff]
        %v1224 = vld [vmem:[%s194 + $0x1c20] sm:$0xff]
        %v1225 = vld [vmem:[%s194 + $0x1c28] sm:$0xff]
        %v1226 = vld [vmem:[%s194 + $0x1c30] sm:$0xff]
        %v1227 = vld [vmem:[%s194 + $0x1c38] sm:$0xff]
        %v1228 = vld [vmem:[%s194 + $0x1c40] sm:$0xff]
        %v1229 = vld [vmem:[%s194 + $0x1c48] sm:$0xff]
        %v1230 = vld [vmem:[%s194 + $0x1c50] sm:$0xff]
        %v1231 = vld [vmem:[%s194 + $0x1c58] sm:$0xff]
        %v1232 = vld [vmem:[%s194 + $0x1c60] sm:$0xff]
        %v1233 = vld [vmem:[%s194 + $0x1c68] sm:$0xff]
        %v1234 = vld [vmem:[%s194 + $0x1c70] sm:$0xff]
        %v1235 = vld [vmem:[%s194 + $0x1c78] sm:$0xff]
        %v1236 = vld [vmem:[%s194 + $0x1c80] sm:$0xff]
        %v1237 = vld [vmem:[%s194 + $0x1c88] sm:$0xff]
        %v1238 = vld [vmem:[%s194 + $0x1c90] sm:$0xff]
        %v1239 = vld [vmem:[%s194 + $0x1c98] sm:$0xff]
        %v1240 = vld [vmem:[%s194 + $0x1ca0] sm:$0xff]
        %v1241 = vld [vmem:[%s194 + $0x1ca8] sm:$0xff]
        %v1242 = vld [vmem:[%s194 + $0x1cb0] sm:$0xff]
        %v1243 = vld [vmem:[%s194 + $0x1cb8] sm:$0xff]
        %v1244 = vld [vmem:[%s194 + $0x1cc0] sm:$0xff]
        %v1245 = vld [vmem:[%s194 + $0x1cc8] sm:$0xff]
        %v1246 = vld [vmem:[%s194 + $0x1cd0] sm:$0xff]
        %v1247 = vld [vmem:[%s194 + $0x1cd8] sm:$0xff]
        %v1248 = vld [vmem:[%s194 + $0x1ce0] sm:$0xff]
        %v1249 = vld [vmem:[%s194 + $0x1ce8] sm:$0xff]
        %v1250 = vld [vmem:[%s194 + $0x1cf0] sm:$0xff]
        %v1251 = vld [vmem:[%s194 + $0x1cf8] sm:$0xff]
        %v1252 = vld [vmem:[%s194 + $0x1d00] sm:$0xff]
        %v1253 = vld [vmem:[%s194 + $0x1d08] sm:$0xff]
        %v1254 = vld [vmem:[%s194 + $0x1d10] sm:$0xff]
        %v1255 = vld [vmem:[%s194 + $0x1d18] sm:$0xff]
        %v1256 = vld [vmem:[%s194 + $0x1d20] sm:$0xff]
        %v1257 = vld [vmem:[%s194 + $0x1d28] sm:$0xff]
        %v1258 = vld [vmem:[%s194 + $0x1d30] sm:$0xff]
        %v1259 = vld [vmem:[%s194 + $0x1d38] sm:$0xff]
        %v1260 = vld [vmem:[%s194 + $0x1d40] sm:$0xff]
        %v1261 = vld [vmem:[%s194 + $0x1d48] sm:$0xff]
        %v1262 = vld [vmem:[%s194 + $0x1d50] sm:$0xff]
        %v1263 = vld [vmem:[%s194 + $0x1d58] sm:$0xff]
        %v1264 = vld [vmem:[%s194 + $0x1d60] sm:$0xff]
        %v1265 = vld [vmem:[%s194 + $0x1d68] sm:$0xff]
        %v1266 = vld [vmem:[%s194 + $0x1d70] sm:$0xff]
        %v1267 = vld [vmem:[%s194 + $0x1d78] sm:$0xff]
        %v1268 = vld [vmem:[%s194 + $0x1d80] sm:$0xff]
        %v1269 = vld [vmem:[%s194 + $0x1d88] sm:$0xff]
        %v1270 = vld [vmem:[%s194 + $0x1d90] sm:$0xff]
        %v1271 = vld [vmem:[%s194 + $0x1d98] sm:$0xff]
        %v1272 = vld [vmem:[%s194 + $0x1da0] sm:$0xff]
        %v1273 = vld [vmem:[%s194 + $0x1da8] sm:$0xff]
        %v1274 = vld [vmem:[%s194 + $0x1db0] sm:$0xff]
        %v1275 = vld [vmem:[%s194 + $0x1db8] sm:$0xff]
        %v1276 = vld [vmem:[%s194 + $0x1dc0] sm:$0xff]
        %v1277 = vld [vmem:[%s194 + $0x1dc8] sm:$0xff]
        %v1278 = vld [vmem:[%s194 + $0x1dd0] sm:$0xff]
        %v1279 = vld [vmem:[%s194 + $0x1dd8] sm:$0xff]
        %v1280 = vld [vmem:[%s194 + $0x1de0] sm:$0xff]
        %v1281 = vld [vmem:[%s194 + $0x1de8] sm:$0xff]
        %v1282 = vld [vmem:[%s194 + $0x1df0] sm:$0xff]
        %v1283 = vld [vmem:[%s194 + $0x1df8] sm:$0xff]
        %v1284 = vld [vmem:[%s194 + $0x1e00] sm:$0xff]
        %v1285 = vld [vmem:[%s194 + $0x1e08] sm:$0xff]
        %v1286 = vld [vmem:[%s194 + $0x1e10] sm:$0xff]
        %v1287 = vld [vmem:[%s194 + $0x1e18] sm:$0xff]
        %v1288 = vld [vmem:[%s194 + $0x1e20] sm:$0xff]
        %v1289 = vld [vmem:[%s194 + $0x1e28] sm:$0xff]
        %v1290 = vld [vmem:[%s194 + $0x1e30] sm:$0xff]
        %v1291 = vld [vmem:[%s194 + $0x1e38] sm:$0xff]
        %v1292 = vld [vmem:[%s194 + $0x1e40] sm:$0xff]
        %v1293 = vld [vmem:[%s194 + $0x1e48] sm:$0xff]
        %v1294 = vld [vmem:[%s194 + $0x1e50] sm:$0xff]
        %v1295 = vld [vmem:[%s194 + $0x1e58] sm:$0xff]
        %v1296 = vld [vmem:[%s194 + $0x1e60] sm:$0xff]
        %v1297 = vld [vmem:[%s194 + $0x1e68] sm:$0xff]
        %v1298 = vld [vmem:[%s194 + $0x1e70] sm:$0xff]
        %v1299 = vld [vmem:[%s194 + $0x1e78] sm:$0xff]
        %v1300 = vld [vmem:[%s194 + $0x1e80] sm:$0xff]
        %v1301 = vld [vmem:[%s194 + $0x1e88] sm:$0xff]
        %v1302 = vld [vmem:[%s194 + $0x1e90] sm:$0xff]
        %v1303 = vld [vmem:[%s194 + $0x1e98] sm:$0xff]
        %v1304 = vld [vmem:[%s194 + $0x1ea0] sm:$0xff]
        %v1305 = vld [vmem:[%s194 + $0x1ea8] sm:$0xff]
        %v1306 = vld [vmem:[%s194 + $0x1eb0] sm:$0xff]
        %v1307 = vld [vmem:[%s194 + $0x1eb8] sm:$0xff]
        %v1308 = vld [vmem:[%s194 + $0x1ec0] sm:$0xff]
        %v1309 = vld [vmem:[%s194 + $0x1ec8] sm:$0xff]
        %v1310 = vld [vmem:[%s194 + $0x1ed0] sm:$0xff]
        %v1311 = vld [vmem:[%s194 + $0x1ed8] sm:$0xff]
        %v1312 = vld [vmem:[%s194 + $0x1ee0] sm:$0xff]
        %v1313 = vld [vmem:[%s194 + $0x1ee8] sm:$0xff]
        %v1314 = vld [vmem:[%s194 + $0x1ef0] sm:$0xff]
        %v1315 = vld [vmem:[%s194 + $0x1ef8] sm:$0xff]
        %v1316 = vld [vmem:[%s194 + $0x1f00] sm:$0xff]
        %v1317 = vld [vmem:[%s194 + $0x1f08] sm:$0xff]
        %v1318 = vld [vmem:[%s194 + $0x1f10] sm:$0xff]
        %v1319 = vld [vmem:[%s194 + $0x1f18] sm:$0xff]
        %v1320 = vld [vmem:[%s194 + $0x1f20] sm:$0xff]
        %v1321 = vld [vmem:[%s194 + $0x1f28] sm:$0xff]
        %v1322 = vld [vmem:[%s194 + $0x1f30] sm:$0xff]
        %v1323 = vld [vmem:[%s194 + $0x1f38] sm:$0xff]
        %v1324 = vld [vmem:[%s194 + $0x1f40] sm:$0xff]
        %v1325 = vld [vmem:[%s194 + $0x1f48] sm:$0xff]
        %v1326 = vld [vmem:[%s194 + $0x1f50] sm:$0xff]
        %v1327 = vld [vmem:[%s194 + $0x1f58] sm:$0xff]
        %v1328 = vld [vmem:[%s194 + $0x1f60] sm:$0xff]
        %v1329 = vld [vmem:[%s194 + $0x1f68] sm:$0xff]
        %v1330 = vld [vmem:[%s194 + $0x1f70] sm:$0xff]
        %v1331 = vld [vmem:[%s194 + $0x1f78] sm:$0xff]
        %v1332 = vld [vmem:[%s194 + $0x1f80] sm:$0xff]
        %v1333 = vld [vmem:[%s194 + $0x1f88] sm:$0xff]
        %v1334 = vld [vmem:[%s194 + $0x1f90] sm:$0xff]
        %v1335 = vld [vmem:[%s194 + $0x1f98] sm:$0xff]
        %v1336 = vld [vmem:[%s194 + $0x1fa0] sm:$0xff]
        %v1337 = vld [vmem:[%s194 + $0x1fa8] sm:$0xff]
        %v1338 = vld [vmem:[%s194 + $0x1fb0] sm:$0xff]
        %v1339 = vld [vmem:[%s194 + $0x1fb8] sm:$0xff]
        %v1340 = vld [vmem:[%s194 + $0x1fc0] sm:$0xff]
        %v1341 = vld [vmem:[%s194 + $0x1fc8] sm:$0xff]
        %v1342 = vld [vmem:[%s194 + $0x1fd0] sm:$0xff]
        %v1343 = vld [vmem:[%s194 + $0x1fd8] sm:$0xff]
        %v1344 = vld [vmem:[%s194 + $0x1fe0] sm:$0xff]
        %v1345 = vld [vmem:[%s194 + $0x1fe8] sm:$0xff]
        %v1346 = vld [vmem:[%s194 + $0x1ff0] sm:$0xff]
        %v1347 = vld [vmem:[%s194 + $0x1ff8] sm:$0xff]
        %v1348 = vld [vmem:[%s194 + $0x2000] sm:$0xff]
        %v1349 = vld [vmem:[%s194 + $0x2008] sm:$0xff]
        %v1350 = vld [vmem:[%s194 + $0x2010] sm:$0xff]
        %v1351 = vld [vmem:[%s194 + $0x2018] sm:$0xff]
        %v1352 = vld [vmem:[%s194 + $0x2020] sm:$0xff]
        %v1353 = vld [vmem:[%s194 + $0x2028] sm:$0xff]
        %v1354 = vld [vmem:[%s194 + $0x2030] sm:$0xff]
        %v1355 = vld [vmem:[%s194 + $0x2038] sm:$0xff]
        %v1356 = vld [vmem:[%s194 + $0x2040] sm:$0xff]
        %v1357 = vld [vmem:[%s194 + $0x2048] sm:$0xff]
        %v1358 = vld [vmem:[%s194 + $0x2050] sm:$0xff]
        %v1359 = vld [vmem:[%s194 + $0x2058] sm:$0xff]
        %v1360 = vld [vmem:[%s194 + $0x2060] sm:$0xff]
        %v1361 = vld [vmem:[%s194 + $0x2068] sm:$0xff]
        %v1362 = vld [vmem:[%s194 + $0x2070] sm:$0xff]
        %v1363 = vld [vmem:[%s194 + $0x2078] sm:$0xff]
        %v1364 = vld [vmem:[%s194 + $0x2080] sm:$0xff]
        %v1365 = vld [vmem:[%s194 + $0x2088] sm:$0xff]
        %v1366 = vld [vmem:[%s194 + $0x2090] sm:$0xff]
        %v1367 = vld [vmem:[%s194 + $0x2098] sm:$0xff]
        %v1368 = vld [vmem:[%s194 + $0x20a0] sm:$0xff]
        %v1369 = vld [vmem:[%s194 + $0x20a8] sm:$0xff]
        %v1370 = vld [vmem:[%s194 + $0x20b0] sm:$0xff]
        %v1371 = vld [vmem:[%s194 + $0x20b8] sm:$0xff]
        %v1372 = vld [vmem:[%s194 + $0x20c0] sm:$0xff]
        %v1373 = vld [vmem:[%s194 + $0x20c8] sm:$0xff]
        %v1374 = vld [vmem:[%s194 + $0x20d0] sm:$0xff]
        %v1375 = vld [vmem:[%s194 + $0x20d8] sm:$0xff]
        %v1376 = vld [vmem:[%s194 + $0x20e0] sm:$0xff]
        %v1377 = vld [vmem:[%s194 + $0x20e8] sm:$0xff]
        %v1378 = vld [vmem:[%s194 + $0x20f0] sm:$0xff]
        %v1379 = vld [vmem:[%s194 + $0x20f8] sm:$0xff]
        %v1380 = vld [vmem:[%s194 + $0x2100] sm:$0xff]
        %v1381 = vld [vmem:[%s194 + $0x2108] sm:$0xff]
        %v1382 = vld [vmem:[%s194 + $0x2110] sm:$0xff]
        %v1383 = vld [vmem:[%s194 + $0x2118] sm:$0xff]
        %v1384 = vld [vmem:[%s194 + $0x2120] sm:$0xff]
        %v1385 = vld [vmem:[%s194 + $0x2128] sm:$0xff]
        %v1386 = vld [vmem:[%s194 + $0x2130] sm:$0xff]
        %v1387 = vld [vmem:[%s194 + $0x2138] sm:$0xff]
        %v1388 = vld [vmem:[%s194 + $0x2140] sm:$0xff]
        %v1389 = vld [vmem:[%s194 + $0x2148] sm:$0xff]
        %v1390 = vld [vmem:[%s194 + $0x2150] sm:$0xff]
        %v1391 = vld [vmem:[%s194 + $0x2158] sm:$0xff]
        %v1392 = vld [vmem:[%s194 + $0x2160] sm:$0xff]
        %v1393 = vld [vmem:[%s194 + $0x2168] sm:$0xff]
        %v1394 = vld [vmem:[%s194 + $0x2170] sm:$0xff]
        %v1395 = vld [vmem:[%s194 + $0x2178] sm:$0xff]
        %v1396 = vld [vmem:[%s194 + $0x2180] sm:$0xff]
        %v1397 = vld [vmem:[%s194 + $0x2188] sm:$0xff]
        %v1398 = vld [vmem:[%s194 + $0x2190] sm:$0xff]
        %v1399 = vld [vmem:[%s194 + $0x2198] sm:$0xff]
        %v1400 = vld [vmem:[%s194 + $0x21a0] sm:$0xff]
        %v1401 = vld [vmem:[%s194 + $0x21a8] sm:$0xff]
        %v1402 = vld [vmem:[%s194 + $0x21b0] sm:$0xff]
        %v1403 = vld [vmem:[%s194 + $0x21b8] sm:$0xff]
        %v1404 = vld [vmem:[%s194 + $0x21c0] sm:$0xff]
        %v1405 = vld [vmem:[%s194 + $0x21c8] sm:$0xff]
        %v1406 = vld [vmem:[%s194 + $0x21d0] sm:$0xff]
        %v1407 = vld [vmem:[%s194 + $0x21d8] sm:$0xff]
        %v1408 = vld [vmem:[%s194 + $0x21e0] sm:$0xff]
        %v1409 = vld [vmem:[%s194 + $0x21e8] sm:$0xff]
        %v1410 = vld [vmem:[%s194 + $0x21f0] sm:$0xff]
        %v1411 = vld [vmem:[%s194 + $0x21f8] sm:$0xff]
        %v1412 = vld [vmem:[%s194 + $0x2200] sm:$0xff]
        %v1413 = vld [vmem:[%s194 + $0x2208] sm:$0xff]
        %v1414 = vld [vmem:[%s194 + $0x2210] sm:$0xff]
        %v1415 = vld [vmem:[%s194 + $0x2218] sm:$0xff]
        %v1416 = vld [vmem:[%s194 + $0x2220] sm:$0xff]
        %v1417 = vld [vmem:[%s194 + $0x2228] sm:$0xff]
        %v1418 = vld [vmem:[%s194 + $0x2230] sm:$0xff]
        %v1419 = vld [vmem:[%s194 + $0x2238] sm:$0xff]
        %v1420 = vld [vmem:[%s194 + $0x2240] sm:$0xff]
        %v1421 = vld [vmem:[%s194 + $0x2248] sm:$0xff]
        %v1422 = vld [vmem:[%s194 + $0x2250] sm:$0xff]
        %v1423 = vld [vmem:[%s194 + $0x2258] sm:$0xff]
        %v1424 = vld [vmem:[%s194 + $0x2260] sm:$0xff]
        %v1425 = vld [vmem:[%s194 + $0x2268] sm:$0xff]
        %v1426 = vld [vmem:[%s194 + $0x2270] sm:$0xff]
        %v1427 = vld [vmem:[%s194 + $0x2278] sm:$0xff]
        %v1428 = vld [vmem:[%s194 + $0x2280] sm:$0xff]
        %v1429 = vld [vmem:[%s194 + $0x2288] sm:$0xff]
        %v1430 = vld [vmem:[%s194 + $0x2290] sm:$0xff]
        %v1431 = vld [vmem:[%s194 + $0x2298] sm:$0xff]
        %v1432 = vld [vmem:[%s194 + $0x22a0] sm:$0xff]
        %v1433 = vld [vmem:[%s194 + $0x22a8] sm:$0xff]
        %v1434 = vld [vmem:[%s194 + $0x22b0] sm:$0xff]
        %v1435 = vld [vmem:[%s194 + $0x22b8] sm:$0xff]
        %v1436 = vld [vmem:[%s194 + $0x22c0] sm:$0xff]
        %v1437 = vld [vmem:[%s194 + $0x22c8] sm:$0xff]
        %v1438 = vld [vmem:[%s194 + $0x22d0] sm:$0xff]
        %v1439 = vld [vmem:[%s194 + $0x22d8] sm:$0xff]
        %v1440 = vld [vmem:[%s194 + $0x22e0] sm:$0xff]
        %v1441 = vld [vmem:[%s194 + $0x22e8] sm:$0xff]
        %v1442 = vld [vmem:[%s194 + $0x22f0] sm:$0xff]
        %v1443 = vld [vmem:[%s194 + $0x22f8] sm:$0xff]
        %v1444 = vld [vmem:[%s194 + $0x2300] sm:$0xff]
        %v1445 = vld [vmem:[%s194 + $0x2308] sm:$0xff]
        %v1446 = vld [vmem:[%s194 + $0x2310] sm:$0xff]
        %v1447 = vld [vmem:[%s194 + $0x2318] sm:$0xff]
        %v1448 = vld [vmem:[%s194 + $0x2320] sm:$0xff]
        %v1449 = vld [vmem:[%s194 + $0x2328] sm:$0xff]
        %v1450 = vld [vmem:[%s194 + $0x2330] sm:$0xff]
        %v1451 = vld [vmem:[%s194 + $0x2338] sm:$0xff]
        %v1452 = vld [vmem:[%s194 + $0x2340] sm:$0xff]
        %v1453 = vld [vmem:[%s194 + $0x2348] sm:$0xff]
        %v1454 = vld [vmem:[%s194 + $0x2350] sm:$0xff]
        %v1455 = vld [vmem:[%s194 + $0x2358] sm:$0xff]
        %v1456 = vld [vmem:[%s194 + $0x2360] sm:$0xff]
        %v1457 = vld [vmem:[%s194 + $0x2368] sm:$0xff]
        %v1458 = vld [vmem:[%s194 + $0x2370] sm:$0xff]
        %v1459 = vld [vmem:[%s194 + $0x2378] sm:$0xff]
        %v1460 = vld [vmem:[%s194 + $0x2380] sm:$0xff]
        %v1461 = vld [vmem:[%s194 + $0x2388] sm:$0xff]
        %v1462 = vld [vmem:[%s194 + $0x2390] sm:$0xff]
        %v1463 = vld [vmem:[%s194 + $0x2398] sm:$0xff]
        %v1464 = vld [vmem:[%s194 + $0x23a0] sm:$0xff]
        %v1465 = vld [vmem:[%s194 + $0x23a8] sm:$0xff]
        %v1466 = vld [vmem:[%s194 + $0x23b0] sm:$0xff]
        %v1467 = vld [vmem:[%s194 + $0x23b8] sm:$0xff]
        %v1468 = vld [vmem:[%s194 + $0x23c0] sm:$0xff]
        %v1469 = vld [vmem:[%s194 + $0x23c8] sm:$0xff]
        %v1470 = vld [vmem:[%s194 + $0x23d0] sm:$0xff]
        %v1471 = vld [vmem:[%s194 + $0x23d8] sm:$0xff]
        %v1472 = vld [vmem:[%s194 + $0x23e0] sm:$0xff]
        %v1473 = vld [vmem:[%s194 + $0x23e8] sm:$0xff]
        %v1474 = vld [vmem:[%s194 + $0x23f0] sm:$0xff]
        %v1475 = vld [vmem:[%s194 + $0x23f8] sm:$0xff]
        %v1476 = vld [vmem:[%s194 + $0x2400] sm:$0xff]
        %v1477 = vld [vmem:[%s194 + $0x2408] sm:$0xff]
        %v1478 = vld [vmem:[%s194 + $0x2410] sm:$0xff]
        %v1479 = vld [vmem:[%s194 + $0x2418] sm:$0xff]
        %v1480 = vld [vmem:[%s194 + $0x2420] sm:$0xff]
        %v1481 = vld [vmem:[%s194 + $0x2428] sm:$0xff]
        %v1482 = vld [vmem:[%s194 + $0x2430] sm:$0xff]
        %v1483 = vld [vmem:[%s194 + $0x2438] sm:$0xff]
        %v1484 = vld [vmem:[%s194 + $0x2440] sm:$0xff]
        %v1485 = vld [vmem:[%s194 + $0x2448] sm:$0xff]
        %v1486 = vld [vmem:[%s194 + $0x2450] sm:$0xff]
        %v1487 = vld [vmem:[%s194 + $0x2458] sm:$0xff]
        %v1488 = vld [vmem:[%s194 + $0x2460] sm:$0xff]
        %v1489 = vld [vmem:[%s194 + $0x2468] sm:$0xff]
        %v1490 = vld [vmem:[%s194 + $0x2470] sm:$0xff]
        %v1491 = vld [vmem:[%s194 + $0x2478] sm:$0xff]
        %v1492 = vld [vmem:[%s194 + $0x2480] sm:$0xff]
        %v1493 = vld [vmem:[%s194 + $0x2488] sm:$0xff]
        %v1494 = vld [vmem:[%s194 + $0x2490] sm:$0xff]
        %v1495 = vld [vmem:[%s194 + $0x2498] sm:$0xff]
        %v1496 = vld [vmem:[%s194 + $0x24a0] sm:$0xff]
        %v1497 = vld [vmem:[%s194 + $0x24a8] sm:$0xff]
        %v1498 = vld [vmem:[%s194 + $0x24b0] sm:$0xff]
        %v1499 = vld [vmem:[%s194 + $0x24b8] sm:$0xff]
        %v1500 = vld [vmem:[%s194 + $0x24c0] sm:$0xff]
        %v1501 = vld [vmem:[%s194 + $0x24c8] sm:$0xff]
        %v1502 = vld [vmem:[%s194 + $0x24d0] sm:$0xff]
        %v1503 = vld [vmem:[%s194 + $0x24d8] sm:$0xff]
        %v1504 = vld [vmem:[%s194 + $0x24e0] sm:$0xff]
        %v1505 = vld [vmem:[%s194 + $0x24e8] sm:$0xff]
        %v1506 = vld [vmem:[%s194 + $0x24f0] sm:$0xff]
        %v1507 = vld [vmem:[%s194 + $0x24f8] sm:$0xff]
        %v1508 = vld [vmem:[%s194 + $0x2500] sm:$0xff]
        %v1509 = vld [vmem:[%s194 + $0x2508] sm:$0xff]
        %v1510 = vld [vmem:[%s194 + $0x2510] sm:$0xff]
        %v1511 = vld [vmem:[%s194 + $0x2518] sm:$0xff]
        %v1512 = vld [vmem:[%s194 + $0x2520] sm:$0xff]
        %v1513 = vld [vmem:[%s194 + $0x2528] sm:$0xff]
        %v1514 = vld [vmem:[%s194 + $0x2530] sm:$0xff]
        %v1515 = vld [vmem:[%s194 + $0x2538] sm:$0xff]
        %v1516 = vld [vmem:[%s194 + $0x2540] sm:$0xff]
        %v1517 = vld [vmem:[%s194 + $0x2548] sm:$0xff]
        %v1518 = vld [vmem:[%s194 + $0x2550] sm:$0xff]
        %v1519 = vld [vmem:[%s194 + $0x2558] sm:$0xff]
        %v1520 = vld [vmem:[%s194 + $0x2560] sm:$0xff]
        %v1521 = vld [vmem:[%s194 + $0x2568] sm:$0xff]
        %v1522 = vld [vmem:[%s194 + $0x2570] sm:$0xff]
        %v1523 = vld [vmem:[%s194 + $0x2578] sm:$0xff]
        %1524 = vmatprep.subr.mxu0 %v400
        %1525 = vmatpush1.xpose.msra.mxu0 %v399
        %1526 = vmatprep.subr.mxu0 %v395
        %1527 = vmatpush1.xpose.msra.mxu0 %v394
        %1528 = vmatprep.subr.mxu0 %v390
        %1529 = vmatpush1.xpose.msra.mxu0 %v389
        %1530 = vmatprep.subr.mxu0 %v385
        %1531 = vmatpush1.xpose.msra.mxu0 %v384
        %1532 = vmatprep.subr.mxu0 %v380
        %1533 = vmatpush1.xpose.msra.mxu0 %v379
        %1534 = vmatprep.subr.mxu0 %v375
        %1535 = vmatpush1.xpose.msra.mxu0 %v374
        %1536 = vmatprep.subr.mxu0 %v370
        %1537 = vmatpush1.xpose.msra.mxu0 %v369
        %1538 = vmatprep.subr.mxu0 %v365
        %1539 = vmatpush1.xpose.msra.mxu0 %v364
        %1540 = vmatprep.subr.mxu0 %v360
        %1541 = vmatpush1.xpose.msra.mxu0 %v359
        %1542 = vmatprep.subr.mxu0 %v355
        %1543 = vmatpush1.xpose.msra.mxu0 %v354
        %1544 = vmatprep.subr.mxu0 %v350
        %1545 = vmatpush1.xpose.msra.mxu0 %v349
        %1546 = vmatprep.subr.mxu0 %v345
        %1547 = vmatpush1.xpose.msra.mxu0 %v344
        %1548 = vmatprep.subr.mxu0 %v340
        %1549 = vmatpush1.xpose.msra.mxu0 %v339
        %1550 = vmatprep.subr.mxu0 %v335
        %1551 = vmatpush1.xpose.msra.mxu0 %v334
        %1552 = vmatprep.subr.mxu0 %v330
        %1553 = vmatpush1.xpose.msra.mxu0 %v329
        %1554 = vmatprep.subr.mxu0 %v325
        %1555 = vmatpush1.xpose.msra.mxu0 %v324
        %1556 = vmatprep.subr.mxu0 %v480
        %1557 = vmatpush2.xpose.msra.mxu0 %v479
        %1558 = vmatprep.subr.mxu0 %v475
        %1559 = vmatpush2.xpose.msra.mxu0 %v474
        %1560 = vmatprep.subr.mxu0 %v470
        %1561 = vmatpush2.xpose.msra.mxu0 %v469
        %1562 = vmatprep.subr.mxu0 %v465
        %1563 = vmatpush2.xpose.msra.mxu0 %v464
        %1564 = vmatprep.subr.mxu0 %v460
        %1565 = vmatpush2.xpose.msra.mxu0 %v459
        %1566 = vmatprep.subr.mxu0 %v455
        %1567 = vmatpush2.xpose.msra.mxu0 %v454
        %1568 = vmatprep.subr.mxu0 %v450
        %1569 = vmatpush2.xpose.msra.mxu0 %v449
        %1570 = vmatprep.subr.mxu0 %v445
        %1571 = vmatpush2.xpose.msra.mxu0 %v444
        %1572 = vmatprep.subr.mxu0 %v440
        %1573 = vmatpush2.xpose.msra.mxu0 %v439
        %1574 = vmatprep.subr.mxu0 %v435
        %1575 = vmatpush2.xpose.msra.mxu0 %v434
        %1576 = vmatprep.subr.mxu0 %v430
        %1577 = vmatpush2.xpose.msra.mxu0 %v429
        %1578 = vmatprep.subr.mxu0 %v425
        %1579 = vmatpush2.xpose.msra.mxu0 %v424
        %1580 = vmatprep.subr.mxu0 %v420
        %1581 = vmatpush2.xpose.msra.mxu0 %v419
        %1582 = vmatprep.subr.mxu0 %v415
        %1583 = vmatpush2.xpose.msra.mxu0 %v414
        %1584 = vmatprep.subr.mxu0 %v410
        %1585 = vmatpush2.xpose.msra.mxu0 %v409
        %1586 = vmatprep.subr.mxu0 %v405
        %1587 = vmatpush2.xpose.msra.mxu0 %v404
        %1588 = vmatprep.mubr.f32.mxu0 %v290
        %1589 = vmatmul.mubr.f32.gmra.mxu0 %v289
        %v1590 = vpop.f32.mrf.mxu0
        %v1591 = vadd.f32 0.0, %v1590
        %v1592 = vpop.f32.mrf.mxu0
        %v1593 = vadd.f32 0.0, %v1592
        %1594 = vmatprep.mubr.f32.mxu0 %v295
        %1595 = vmatmul.mubr.f32.gmra.mxu0 %v294
        %v1596 = vpop.f32.mrf.mxu0
        %v1597 = vadd.f32 0.0, %v1596
        %v1598 = vpop.f32.mrf.mxu0
        %v1599 = vadd.f32 0.0, %v1598
        %1600 = vmatprep.mubr.f32.mxu0 %v300
        %1601 = vmatmul.mubr.f32.gmra.mxu0 %v299
        %v1602 = vpop.f32.mrf.mxu0
        %v1603 = vadd.f32 0.0, %v1602
        %v1604 = vpop.f32.mrf.mxu0
        %v1605 = vadd.f32 0.0, %v1604
        %1606 = vmatprep.mubr.f32.mxu0 %v305
        %1607 = vmatmul.mubr.f32.gmra.mxu0 %v304
        %v1608 = vpop.f32.mrf.mxu0
        %v1609 = vadd.f32 0.0, %v1608
        %v1610 = vpop.f32.mrf.mxu0
        %v1611 = vadd.f32 0.0, %v1610
        %1612 = vmatprep.mubr.f32.mxu0 %v310
        %1613 = vmatmul.mubr.f32.gmra.mxu0 %v309
        %v1614 = vpop.f32.mrf.mxu0
        %v1615 = vadd.f32 0.0, %v1614
        %v1616 = vpop.f32.mrf.mxu0
        %v1617 = vadd.f32 0.0, %v1616
        %1618 = vmatprep.mubr.f32.mxu0 %v315
        %1619 = vmatmul.mubr.f32.gmra.mxu0 %v314
        %v1620 = vpop.f32.mrf.mxu0
        %v1621 = vadd.f32 0.0, %v1620
        %v1622 = vpop.f32.mrf.mxu0
        %v1623 = vadd.f32 0.0, %v1622
        %1624 = vmatprep.mubr.f32.mxu0 %v320
        %1625 = vmatmul.mubr.f32.gmra.mxu0 %v319
        %v1626 = vpop.f32.mrf.mxu0
        %v1627 = vadd.f32 0.0, %v1626
        %v1628 = vpop.f32.mrf.mxu0
        %v1629 = vadd.f32 0.0, %v1628
        %1630 = vdwg.mxu0
        %1631 = vmatprep.subr.mxu0 %v402
        %1632 = vmatpush1.xpose.msra.mxu0 %v401
        %1633 = vmatprep.subr.mxu0 %v397
        %1634 = vmatpush1.xpose.msra.mxu0 %v396
        %1635 = vmatprep.subr.mxu0 %v392
        %1636 = vmatpush1.xpose.msra.mxu0 %v391
        %1637 = vmatprep.subr.mxu0 %v387
        %1638 = vmatpush1.xpose.msra.mxu0 %v386
        %1639 = vmatprep.subr.mxu0 %v382
        %1640 = vmatpush1.xpose.msra.mxu0 %v381
        %1641 = vmatprep.subr.mxu0 %v377
        %1642 = vmatpush1.xpose.msra.mxu0 %v376
        %1643 = vmatprep.subr.mxu0 %v372
        %1644 = vmatpush1.xpose.msra.mxu0 %v371
        %1645 = vmatprep.subr.mxu0 %v367
        %1646 = vmatpush1.xpose.msra.mxu0 %v366
        %1647 = vmatprep.subr.mxu0 %v362
        %1648 = vmatpush1.xpose.msra.mxu0 %v361
        %1649 = vmatprep.subr.mxu0 %v357
        %1650 = vmatpush1.xpose.msra.mxu0 %v356
        %1651 = vmatprep.subr.mxu0 %v352
        %1652 = vmatpush1.xpose.msra.mxu0 %v351
        %1653 = vmatprep.subr.mxu0 %v347
        %1654 = vmatpush1.xpose.msra.mxu0 %v346
        %1655 = vmatprep.subr.mxu0 %v342
        %1656 = vmatpush1.xpose.msra.mxu0 %v341
        %1657 = vmatprep.subr.mxu0 %v337
        %1658 = vmatpush1.xpose.msra.mxu0 %v336
        %1659 = vmatprep.subr.mxu0 %v332
        %1660 = vmatpush1.xpose.msra.mxu0 %v331
        %1661 = vmatprep.subr.mxu0 %v327
        %1662 = vmatpush1.xpose.msra.mxu0 %v326
        %1663 = vmatprep.subr.mxu0 %v482
        %1664 = vmatpush2.xpose.msra.mxu0 %v481
        %1665 = vmatprep.subr.mxu0 %v477
        %1666 = vmatpush2.xpose.msra.mxu0 %v476
        %1667 = vmatprep.subr.mxu0 %v472
        %1668 = vmatpush2.xpose.msra.mxu0 %v471
        %1669 = vmatprep.subr.mxu0 %v467
        %1670 = vmatpush2.xpose.msra.mxu0 %v466
        %1671 = vmatprep.subr.mxu0 %v462
        %1672 = vmatpush2.xpose.msra.mxu0 %v461
        %1673 = vmatprep.subr.mxu0 %v457
        %1674 = vmatpush2.xpose.msra.mxu0 %v456
        %1675 = vmatprep.subr.mxu0 %v452
        %1676 = vmatpush2.xpose.msra.mxu0 %v451
        %1677 = vmatprep.subr.mxu0 %v447
        %1678 = vmatpush2.xpose.msra.mxu0 %v446
        %1679 = vmatprep.subr.mxu0 %v442
        %1680 = vmatpush2.xpose.msra.mxu0 %v441
        %1681 = vmatprep.subr.mxu0 %v437
        %1682 = vmatpush2.xpose.msra.mxu0 %v436
        %1683 = vmatprep.subr.mxu0 %v432
        %1684 = vmatpush2.xpose.msra.mxu0 %v431
        %1685 = vmatprep.subr.mxu0 %v427
        %1686 = vmatpush2.xpose.msra.mxu0 %v426
        %1687 = vmatprep.subr.mxu0 %v422
        %1688 = vmatpush2.xpose.msra.mxu0 %v421
        %1689 = vmatprep.subr.mxu0 %v417
        %1690 = vmatpush2.xpose.msra.mxu0 %v416
        %1691 = vmatprep.subr.mxu0 %v412
        %1692 = vmatpush2.xpose.msra.mxu0 %v411
        %1693 = vmatprep.subr.mxu0 %v407
        %1694 = vmatpush2.xpose.msra.mxu0 %v406
        %1695 = vmatprep.mubr.f32.mxu0 %v292
        %1696 = vmatmul.mubr.f32.gmra.mxu0 %v291
        %v1697 = vpop.f32.mrf.mxu0
        %v1698 = vadd.f32 %v1591, %v1697
        %v1699 = vpop.f32.mrf.mxu0
        %v1700 = vadd.f32 %v1593, %v1699
        %1701 = vmatprep.mubr.f32.mxu0 %v297
        %1702 = vmatmul.mubr.f32.gmra.mxu0 %v296
        %v1703 = vpop.f32.mrf.mxu0
        %v1704 = vadd.f32 %v1597, %v1703
        %v1705 = vpop.f32.mrf.mxu0
        %v1706 = vadd.f32 %v1599, %v1705
        %1707 = vmatprep.mubr.f32.mxu0 %v302
        %1708 = vmatmul.mubr.f32.gmra.mxu0 %v301
        %v1709 = vpop.f32.mrf.mxu0
        %v1710 = vadd.f32 %v1603, %v1709
        %v1711 = vpop.f32.mrf.mxu0
        %v1712 = vadd.f32 %v1605, %v1711
        %1713 = vmatprep.mubr.f32.mxu0 %v307
        %1714 = vmatmul.mubr.f32.gmra.mxu0 %v306
        %v1715 = vpop.f32.mrf.mxu0
        %v1716 = vadd.f32 %v1609, %v1715
        %v1717 = vpop.f32.mrf.mxu0
        %v1718 = vadd.f32 %v1611, %v1717
        %1719 = vmatprep.mubr.f32.mxu0 %v312
        %1720 = vmatmul.mubr.f32.gmra.mxu0 %v311
        %v1721 = vpop.f32.mrf.mxu0
        %v1722 = vadd.f32 %v1615, %v1721
        %v1723 = vpop.f32.mrf.mxu0
        %v1724 = vadd.f32 %v1617, %v1723
        %1725 = vmatprep.mubr.f32.mxu0 %v317
        %1726 = vmatmul.mubr.f32.gmra.mxu0 %v316
        %v1727 = vpop.f32.mrf.mxu0
        %v1728 = vadd.f32 %v1621, %v1727
        %v1729 = vpop.f32.mrf.mxu0
        %v1730 = vadd.f32 %v1623, %v1729
        %1731 = vmatprep.mubr.f32.mxu0 %v322
        %1732 = vmatmul.mubr.f32.gmra.mxu0 %v321
        %v1733 = vpop.f32.mrf.mxu0
        %v1734 = vadd.f32 %v1627, %v1733
        %v1735 = vpop.f32.mrf.mxu0
        %v1736 = vadd.f32 %v1629, %v1735
        %1737 = vdwg.mxu0
        %1738 = vmatprep.subr.mxu0 0.0
        %1739 = vmatpush1.xpose.msra.mxu0 %v403
        %1740 = vmatprep.subr.mxu0 0.0
        %1741 = vmatpush1.xpose.msra.mxu0 %v398
        %1742 = vmatprep.subr.mxu0 0.0
        %1743 = vmatpush1.xpose.msra.mxu0 %v393
        %1744 = vmatprep.subr.mxu0 0.0
        %1745 = vmatpush1.xpose.msra.mxu0 %v388
        %1746 = vmatprep.subr.mxu0 0.0
        %1747 = vmatpush1.xpose.msra.mxu0 %v383
        %1748 = vmatprep.subr.mxu0 0.0
        %1749 = vmatpush1.xpose.msra.mxu0 %v378
        %1750 = vmatprep.subr.mxu0 0.0
        %1751 = vmatpush1.xpose.msra.mxu0 %v373
        %1752 = vmatprep.subr.mxu0 0.0
        %1753 = vmatpush1.xpose.msra.mxu0 %v368
        %1754 = vmatprep.subr.mxu0 0.0
        %1755 = vmatpush1.xpose.msra.mxu0 %v363
        %1756 = vmatprep.subr.mxu0 0.0
        %1757 = vmatpush1.xpose.msra.mxu0 %v358
        %1758 = vmatprep.subr.mxu0 0.0
        %1759 = vmatpush1.xpose.msra.mxu0 %v353
        %1760 = vmatprep.subr.mxu0 0.0
        %1761 = vmatpush1.xpose.msra.mxu0 %v348
        %1762 = vmatprep.subr.mxu0 0.0
        %1763 = vmatpush1.xpose.msra.mxu0 %v343
        %1764 = vmatprep.subr.mxu0 0.0
        %1765 = vmatpush1.xpose.msra.mxu0 %v338
        %1766 = vmatprep.subr.mxu0 0.0
        %1767 = vmatpush1.xpose.msra.mxu0 %v333
        %1768 = vmatprep.subr.mxu0 0.0
        %1769 = vmatpush1.xpose.msra.mxu0 %v328
        %1770 = vmatprep.subr.mxu0 0.0
        %1771 = vmatpush2.xpose.msra.mxu0 %v483
        %1772 = vmatprep.subr.mxu0 0.0
        %1773 = vmatpush2.xpose.msra.mxu0 %v478
        %1774 = vmatprep.subr.mxu0 0.0
        %1775 = vmatpush2.xpose.msra.mxu0 %v473
        %1776 = vmatprep.subr.mxu0 0.0
        %1777 = vmatpush2.xpose.msra.mxu0 %v468
        %1778 = vmatprep.subr.mxu0 0.0
        %1779 = vmatpush2.xpose.msra.mxu0 %v463
        %1780 = vmatprep.subr.mxu0 0.0
        %1781 = vmatpush2.xpose.msra.mxu0 %v458
        %1782 = vmatprep.subr.mxu0 0.0
        %1783 = vmatpush2.xpose.msra.mxu0 %v453
        %1784 = vmatprep.subr.mxu0 0.0
        %1785 = vmatpush2.xpose.msra.mxu0 %v448
        %1786 = vmatprep.subr.mxu0 0.0
        %1787 = vmatpush2.xpose.msra.mxu0 %v443
        %1788 = vmatprep.subr.mxu0 0.0
        %1789 = vmatpush2.xpose.msra.mxu0 %v438
        %1790 = vmatprep.subr.mxu0 0.0
        %1791 = vmatpush2.xpose.msra.mxu0 %v433
        %1792 = vmatprep.subr.mxu0 0.0
        %1793 = vmatpush2.xpose.msra.mxu0 %v428
        %1794 = vmatprep.subr.mxu0 0.0
        %1795 = vmatpush2.xpose.msra.mxu0 %v423
        %1796 = vmatprep.subr.mxu0 0.0
        %1797 = vmatpush2.xpose.msra.mxu0 %v418
        %1798 = vmatprep.subr.mxu0 0.0
        %1799 = vmatpush2.xpose.msra.mxu0 %v413
        %1800 = vmatprep.subr.mxu0 0.0
        %1801 = vmatpush2.xpose.msra.mxu0 %v408
        %1802 = vmatprep.mubr.f32.mxu0 0.0
        %1803 = vmatmul.mubr.f32.gmra.mxu0 %v293
        %v1804 = vpop.f32.mrf.mxu0
        %v1805 = vadd.f32 %v1698, %v1804
        %v1806 = vpop.f32.mrf.mxu0
        %v1807 = vadd.f32 %v1700, %v1806
        %1808 = vmatprep.mubr.f32.mxu0 0.0
        %1809 = vmatmul.mubr.f32.gmra.mxu0 %v298
        %v1810 = vpop.f32.mrf.mxu0
        %v1811 = vadd.f32 %v1704, %v1810
        %v1812 = vpop.f32.mrf.mxu0
        %v1813 = vadd.f32 %v1706, %v1812
        %1814 = vmatprep.mubr.f32.mxu0 0.0
        %1815 = vmatmul.mubr.f32.gmra.mxu0 %v303
        %v1816 = vpop.f32.mrf.mxu0
        %v1817 = vadd.f32 %v1710, %v1816
        %v1818 = vpop.f32.mrf.mxu0
        %v1819 = vadd.f32 %v1712, %v1818
        %1820 = vmatprep.mubr.f32.mxu0 0.0
        %1821 = vmatmul.mubr.f32.gmra.mxu0 %v308
        %v1822 = vpop.f32.mrf.mxu0
        %v1823 = vadd.f32 %v1716, %v1822
        %v1824 = vpop.f32.mrf.mxu0
        %v1825 = vadd.f32 %v1718, %v1824
        %1826 = vmatprep.mubr.f32.mxu0 0.0
        %1827 = vmatmul.mubr.f32.gmra.mxu0 %v313
        %v1828 = vpop.f32.mrf.mxu0
        %v1829 = vadd.f32 %v1722, %v1828
        %v1830 = vpop.f32.mrf.mxu0
        %v1831 = vadd.f32 %v1724, %v1830
        %1832 = vmatprep.mubr.f32.mxu0 0.0
        %1833 = vmatmul.mubr.f32.gmra.mxu0 %v318
        %v1834 = vpop.f32.mrf.mxu0
        %v1835 = vadd.f32 %v1728, %v1834
        %v1836 = vpop.f32.mrf.mxu0
        %v1837 = vadd.f32 %v1730, %v1836
        %1838 = vmatprep.mubr.f32.mxu0 0.0
        %1839 = vmatmul.mubr.f32.gmra.mxu0 %v323
        %v1840 = vpop.f32.mrf.mxu0
        %v1841 = vadd.f32 %v1734, %v1840
        %v1842 = vpop.f32.mrf.mxu0
        %v1843 = vadd.f32 %v1736, %v1842
        %1844 = vdwg.mxu0
        %1845 = vmatprep.subr.mxu0 %v560
        %1846 = vmatpush1.xpose.msra.mxu0 %v559
        %1847 = vmatprep.subr.mxu0 %v555
        %1848 = vmatpush1.xpose.msra.mxu0 %v554
        %1849 = vmatprep.subr.mxu0 %v550
        %1850 = vmatpush1.xpose.msra.mxu0 %v549
        %1851 = vmatprep.subr.mxu0 %v545
        %1852 = vmatpush1.xpose.msra.mxu0 %v544
        %1853 = vmatprep.subr.mxu0 %v540
        %1854 = vmatpush1.xpose.msra.mxu0 %v539
        %1855 = vmatprep.subr.mxu0 %v535
        %1856 = vmatpush1.xpose.msra.mxu0 %v534
        %1857 = vmatprep.subr.mxu0 %v530
        %1858 = vmatpush1.xpose.msra.mxu0 %v529
        %1859 = vmatprep.subr.mxu0 %v525
        %1860 = vmatpush1.xpose.msra.mxu0 %v524
        %1861 = vmatprep.subr.mxu0 %v520
        %1862 = vmatpush1.xpose.msra.mxu0 %v519
        %1863 = vmatprep.subr.mxu0 %v515
        %1864 = vmatpush1.xpose.msra.mxu0 %v514
        %1865 = vmatprep.subr.mxu0 %v510
        %1866 = vmatpush1.xpose.msra.mxu0 %v509
        %1867 = vmatprep.subr.mxu0 %v505
        %1868 = vmatpush1.xpose.msra.mxu0 %v504
        %1869 = vmatprep.subr.mxu0 %v500
        %1870 = vmatpush1.xpose.msra.mxu0 %v499
        %1871 = vmatprep.subr.mxu0 %v495
        %1872 = vmatpush1.xpose.msra.mxu0 %v494
        %1873 = vmatprep.subr.mxu0 %v490
        %1874 = vmatpush1.xpose.msra.mxu0 %v489
        %1875 = vmatprep.subr.mxu0 %v485
        %1876 = vmatpush1.xpose.msra.mxu0 %v484
        %1877 = vmatprep.subr.mxu0 %v640
        %1878 = vmatpush2.xpose.msra.mxu0 %v639
        %1879 = vmatprep.subr.mxu0 %v635
        %1880 = vmatpush2.xpose.msra.mxu0 %v634
        %1881 = vmatprep.subr.mxu0 %v630
        %1882 = vmatpush2.xpose.msra.mxu0 %v629
        %1883 = vmatprep.subr.mxu0 %v625
        %1884 = vmatpush2.xpose.msra.mxu0 %v624
        %1885 = vmatprep.subr.mxu0 %v620
        %1886 = vmatpush2.xpose.msra.mxu0 %v619
        %1887 = vmatprep.subr.mxu0 %v615
        %1888 = vmatpush2.xpose.msra.mxu0 %v614
        %1889 = vmatprep.subr.mxu0 %v610
        %1890 = vmatpush2.xpose.msra.mxu0 %v609
        %1891 = vmatprep.subr.mxu0 %v605
        %1892 = vmatpush2.xpose.msra.mxu0 %v604
        %1893 = vmatprep.subr.mxu0 %v600
        %1894 = vmatpush2.xpose.msra.mxu0 %v599
        %1895 = vmatprep.subr.mxu0 %v595
        %1896 = vmatpush2.xpose.msra.mxu0 %v594
        %1897 = vmatprep.subr.mxu0 %v590
        %1898 = vmatpush2.xpose.msra.mxu0 %v589
        %1899 = vmatprep.subr.mxu0 %v585
        %1900 = vmatpush2.xpose.msra.mxu0 %v584
        %1901 = vmatprep.subr.mxu0 %v580
        %1902 = vmatpush2.xpose.msra.mxu0 %v579
        %1903 = vmatprep.subr.mxu0 %v575
        %1904 = vmatpush2.xpose.msra.mxu0 %v574
        %1905 = vmatprep.subr.mxu0 %v570
        %1906 = vmatpush2.xpose.msra.mxu0 %v569
        %1907 = vmatprep.subr.mxu0 %v565
        %1908 = vmatpush2.xpose.msra.mxu0 %v564
        %1909 = vmatprep.mubr.f32.mxu0 %v290
        %1910 = vmatmul.mubr.f32.gmra.mxu0 %v289
        %v1911 = vpop.f32.mrf.mxu0
        %v1912 = vadd.f32 0.0, %v1911
        %v1913 = vpop.f32.mrf.mxu0
        %v1914 = vadd.f32 0.0, %v1913
        %1915 = vmatprep.mubr.f32.mxu0 %v295
        %1916 = vmatmul.mubr.f32.gmra.mxu0 %v294
        %v1917 = vpop.f32.mrf.mxu0
        %v1918 = vadd.f32 0.0, %v1917
        %v1919 = vpop.f32.mrf.mxu0
        %v1920 = vadd.f32 0.0, %v1919
        %1921 = vmatprep.mubr.f32.mxu0 %v300
        %1922 = vmatmul.mubr.f32.gmra.mxu0 %v299
        %v1923 = vpop.f32.mrf.mxu0
        %v1924 = vadd.f32 0.0, %v1923
        %v1925 = vpop.f32.mrf.mxu0
        %v1926 = vadd.f32 0.0, %v1925
        %1927 = vmatprep.mubr.f32.mxu0 %v305
        %1928 = vmatmul.mubr.f32.gmra.mxu0 %v304
        %v1929 = vpop.f32.mrf.mxu0
        %v1930 = vadd.f32 0.0, %v1929
        %v1931 = vpop.f32.mrf.mxu0
        %v1932 = vadd.f32 0.0, %v1931
        %1933 = vmatprep.mubr.f32.mxu0 %v310
        %1934 = vmatmul.mubr.f32.gmra.mxu0 %v309
        %v1935 = vpop.f32.mrf.mxu0
        %v1936 = vadd.f32 0.0, %v1935
        %v1937 = vpop.f32.mrf.mxu0
        %v1938 = vadd.f32 0.0, %v1937
        %1939 = vmatprep.mubr.f32.mxu0 %v315
        %1940 = vmatmul.mubr.f32.gmra.mxu0 %v314
        %v1941 = vpop.f32.mrf.mxu0
        %v1942 = vadd.f32 0.0, %v1941
        %v1943 = vpop.f32.mrf.mxu0
        %v1944 = vadd.f32 0.0, %v1943
        %1945 = vmatprep.mubr.f32.mxu0 %v320
        %1946 = vmatmul.mubr.f32.gmra.mxu0 %v319
        %v1947 = vpop.f32.mrf.mxu0
        %v1948 = vadd.f32 0.0, %v1947
        %v1949 = vpop.f32.mrf.mxu0
        %v1950 = vadd.f32 0.0, %v1949
        %1951 = vdwg.mxu0
        %1952 = vmatprep.subr.mxu0 %v562
        %1953 = vmatpush1.xpose.msra.mxu0 %v561
        %1954 = vmatprep.subr.mxu0 %v557
        %1955 = vmatpush1.xpose.msra.mxu0 %v556
        %1956 = vmatprep.subr.mxu0 %v552
        %1957 = vmatpush1.xpose.msra.mxu0 %v551
        %1958 = vmatprep.subr.mxu0 %v547
        %1959 = vmatpush1.xpose.msra.mxu0 %v546
        %1960 = vmatprep.subr.mxu0 %v542
        %1961 = vmatpush1.xpose.msra.mxu0 %v541
        %1962 = vmatprep.subr.mxu0 %v537
        %1963 = vmatpush1.xpose.msra.mxu0 %v536
        %1964 = vmatprep.subr.mxu0 %v532
        %1965 = vmatpush1.xpose.msra.mxu0 %v531
        %1966 = vmatprep.subr.mxu0 %v527
        %1967 = vmatpush1.xpose.msra.mxu0 %v526
        %1968 = vmatprep.subr.mxu0 %v522
        %1969 = vmatpush1.xpose.msra.mxu0 %v521
        %1970 = vmatprep.subr.mxu0 %v517
        %1971 = vmatpush1.xpose.msra.mxu0 %v516
        %1972 = vmatprep.subr.mxu0 %v512
        %1973 = vmatpush1.xpose.msra.mxu0 %v511
        %1974 = vmatprep.subr.mxu0 %v507
        %1975 = vmatpush1.xpose.msra.mxu0 %v506
        %1976 = vmatprep.subr.mxu0 %v502
        %1977 = vmatpush1.xpose.msra.mxu0 %v501
        %1978 = vmatprep.subr.mxu0 %v497
        %1979 = vmatpush1.xpose.msra.mxu0 %v496
        %1980 = vmatprep.subr.mxu0 %v492
        %1981 = vmatpush1.xpose.msra.mxu0 %v491
        %1982 = vmatprep.subr.mxu0 %v487
        %1983 = vmatpush1.xpose.msra.mxu0 %v486
        %1984 = vmatprep.subr.mxu0 %v642
        %1985 = vmatpush2.xpose.msra.mxu0 %v641
        %1986 = vmatprep.subr.mxu0 %v637
        %1987 = vmatpush2.xpose.msra.mxu0 %v636
        %1988 = vmatprep.subr.mxu0 %v632
        %1989 = vmatpush2.xpose.msra.mxu0 %v631
        %1990 = vmatprep.subr.mxu0 %v627
        %1991 = vmatpush2.xpose.msra.mxu0 %v626
        %1992 = vmatprep.subr.mxu0 %v622
        %1993 = vmatpush2.xpose.msra.mxu0 %v621
        %1994 = vmatprep.subr.mxu0 %v617
        %1995 = vmatpush2.xpose.msra.mxu0 %v616
        %1996 = vmatprep.subr.mxu0 %v612
        %1997 = vmatpush2.xpose.msra.mxu0 %v611
        %1998 = vmatprep.subr.mxu0 %v607
        %1999 = vmatpush2.xpose.msra.mxu0 %v606
        %2000 = vmatprep.subr.mxu0 %v602
        %2001 = vmatpush2.xpose.msra.mxu0 %v601
        %2002 = vmatprep.subr.mxu0 %v597
        %2003 = vmatpush2.xpose.msra.mxu0 %v596
        %2004 = vmatprep.subr.mxu0 %v592
        %2005 = vmatpush2.xpose.msra.mxu0 %v591
        %2006 = vmatprep.subr.mxu0 %v587
        %2007 = vmatpush2.xpose.msra.mxu0 %v586
        %2008 = vmatprep.subr.mxu0 %v582
        %2009 = vmatpush2.xpose.msra.mxu0 %v581
        %2010 = vmatprep.subr.mxu0 %v577
        %2011 = vmatpush2.xpose.msra.mxu0 %v576
        %2012 = vmatprep.subr.mxu0 %v572
        %2013 = vmatpush2.xpose.msra.mxu0 %v571
        %2014 = vmatprep.subr.mxu0 %v567
        %2015 = vmatpush2.xpose.msra.mxu0 %v566
        %2016 = vmatprep.mubr.f32.mxu0 %v292
        %2017 = vmatmul.mubr.f32.gmra.mxu0 %v291
        %v2018 = vpop.f32.mrf.mxu0
        %v2019 = vadd.f32 %v1912, %v2018
        %v2020 = vpop.f32.mrf.mxu0
        %v2021 = vadd.f32 %v1914, %v2020
        %2022 = vmatprep.mubr.f32.mxu0 %v297
        %2023 = vmatmul.mubr.f32.gmra.mxu0 %v296
        %v2024 = vpop.f32.mrf.mxu0
        %v2025 = vadd.f32 %v1918, %v2024
        %v2026 = vpop.f32.mrf.mxu0
        %v2027 = vadd.f32 %v1920, %v2026
        %2028 = vmatprep.mubr.f32.mxu0 %v302
        %2029 = vmatmul.mubr.f32.gmra.mxu0 %v301
        %v2030 = vpop.f32.mrf.mxu0
        %v2031 = vadd.f32 %v1924, %v2030
        %v2032 = vpop.f32.mrf.mxu0
        %v2033 = vadd.f32 %v1926, %v2032
        %2034 = vmatprep.mubr.f32.mxu0 %v307
        %2035 = vmatmul.mubr.f32.gmra.mxu0 %v306
        %v2036 = vpop.f32.mrf.mxu0
        %v2037 = vadd.f32 %v1930, %v2036
        %v2038 = vpop.f32.mrf.mxu0
        %v2039 = vadd.f32 %v1932, %v2038
        %2040 = vmatprep.mubr.f32.mxu0 %v312
        %2041 = vmatmul.mubr.f32.gmra.mxu0 %v311
        %v2042 = vpop.f32.mrf.mxu0
        %v2043 = vadd.f32 %v1936, %v2042
        %v2044 = vpop.f32.mrf.mxu0
        %v2045 = vadd.f32 %v1938, %v2044
        %2046 = vmatprep.mubr.f32.mxu0 %v317
        %2047 = vmatmul.mubr.f32.gmra.mxu0 %v316
        %v2048 = vpop.f32.mrf.mxu0
        %v2049 = vadd.f32 %v1942, %v2048
        %v2050 = vpop.f32.mrf.mxu0
        %v2051 = vadd.f32 %v1944, %v2050
        %2052 = vmatprep.mubr.f32.mxu0 %v322
        %2053 = vmatmul.mubr.f32.gmra.mxu0 %v321
        %v2054 = vpop.f32.mrf.mxu0
        %v2055 = vadd.f32 %v1948, %v2054
        %v2056 = vpop.f32.mrf.mxu0
        %v2057 = vadd.f32 %v1950, %v2056
        %2058 = vdwg.mxu0
        %2059 = vmatprep.subr.mxu0 0.0
        %2060 = vmatpush1.xpose.msra.mxu0 %v563
        %2061 = vmatprep.subr.mxu0 0.0
        %2062 = vmatpush1.xpose.msra.mxu0 %v558
        %2063 = vmatprep.subr.mxu0 0.0
        %2064 = vmatpush1.xpose.msra.mxu0 %v553
        %2065 = vmatprep.subr.mxu0 0.0
        %2066 = vmatpush1.xpose.msra.mxu0 %v548
        %2067 = vmatprep.subr.mxu0 0.0
        %2068 = vmatpush1.xpose.msra.mxu0 %v543
        %2069 = vmatprep.subr.mxu0 0.0
        %2070 = vmatpush1.xpose.msra.mxu0 %v538
        %2071 = vmatprep.subr.mxu0 0.0
        %2072 = vmatpush1.xpose.msra.mxu0 %v533
        %2073 = vmatprep.subr.mxu0 0.0
        %2074 = vmatpush1.xpose.msra.mxu0 %v528
        %2075 = vmatprep.subr.mxu0 0.0
        %2076 = vmatpush1.xpose.msra.mxu0 %v523
        %2077 = vmatprep.subr.mxu0 0.0
        %2078 = vmatpush1.xpose.msra.mxu0 %v518
        %2079 = vmatprep.subr.mxu0 0.0
        %2080 = vmatpush1.xpose.msra.mxu0 %v513
        %2081 = vmatprep.subr.mxu0 0.0
        %2082 = vmatpush1.xpose.msra.mxu0 %v508
        %2083 = vmatprep.subr.mxu0 0.0
        %2084 = vmatpush1.xpose.msra.mxu0 %v503
        %2085 = vmatprep.subr.mxu0 0.0
        %2086 = vmatpush1.xpose.msra.mxu0 %v498
        %2087 = vmatprep.subr.mxu0 0.0
        %2088 = vmatpush1.xpose.msra.mxu0 %v493
        %2089 = vmatprep.subr.mxu0 0.0
        %2090 = vmatpush1.xpose.msra.mxu0 %v488
        %2091 = vmatprep.subr.mxu0 0.0
        %2092 = vmatpush2.xpose.msra.mxu0 %v643
        %2093 = vmatprep.subr.mxu0 0.0
        %2094 = vmatpush2.xpose.msra.mxu0 %v638
        %2095 = vmatprep.subr.mxu0 0.0
        %2096 = vmatpush2.xpose.msra.mxu0 %v633
        %2097 = vmatprep.subr.mxu0 0.0
        %2098 = vmatpush2.xpose.msra.mxu0 %v628
        %2099 = vmatprep.subr.mxu0 0.0
        %2100 = vmatpush2.xpose.msra.mxu0 %v623
        %2101 = vmatprep.subr.mxu0 0.0
        %2102 = vmatpush2.xpose.msra.mxu0 %v618
        %2103 = vmatprep.subr.mxu0 0.0
        %2104 = vmatpush2.xpose.msra.mxu0 %v613
        %2105 = vmatprep.subr.mxu0 0.0
        %2106 = vmatpush2.xpose.msra.mxu0 %v608
        %2107 = vmatprep.subr.mxu0 0.0
        %2108 = vmatpush2.xpose.msra.mxu0 %v603
        %2109 = vmatprep.subr.mxu0 0.0
        %2110 = vmatpush2.xpose.msra.mxu0 %v598
        %2111 = vmatprep.subr.mxu0 0.0
        %2112 = vmatpush2.xpose.msra.mxu0 %v593
        %2113 = vmatprep.subr.mxu0 0.0
        %2114 = vmatpush2.xpose.msra.mxu0 %v588
        %2115 = vmatprep.subr.mxu0 0.0
        %2116 = vmatpush2.xpose.msra.mxu0 %v583
        %2117 = vmatprep.subr.mxu0 0.0
        %2118 = vmatpush2.xpose.msra.mxu0 %v578
        %2119 = vmatprep.subr.mxu0 0.0
        %2120 = vmatpush2.xpose.msra.mxu0 %v573
        %2121 = vmatprep.subr.mxu0 0.0
        %2122 = vmatpush2.xpose.msra.mxu0 %v568
        %2123 = vmatprep.mubr.f32.mxu0 0.0
        %2124 = vmatmul.mubr.f32.gmra.mxu0 %v293
        %v2125 = vpop.f32.mrf.mxu0
        %v2126 = vadd.f32 %v2019, %v2125
        %v2127 = vpop.f32.mrf.mxu0
        %v2128 = vadd.f32 %v2021, %v2127
        %2129 = vmatprep.mubr.f32.mxu0 0.0
        %2130 = vmatmul.mubr.f32.gmra.mxu0 %v298
        %v2131 = vpop.f32.mrf.mxu0
        %v2132 = vadd.f32 %v2025, %v2131
        %v2133 = vpop.f32.mrf.mxu0
        %v2134 = vadd.f32 %v2027, %v2133
        %2135 = vmatprep.mubr.f32.mxu0 0.0
        %2136 = vmatmul.mubr.f32.gmra.mxu0 %v303
        %v2137 = vpop.f32.mrf.mxu0
        %v2138 = vadd.f32 %v2031, %v2137
        %v2139 = vpop.f32.mrf.mxu0
        %v2140 = vadd.f32 %v2033, %v2139
        %2141 = vmatprep.mubr.f32.mxu0 0.0
        %2142 = vmatmul.mubr.f32.gmra.mxu0 %v308
        %v2143 = vpop.f32.mrf.mxu0
        %v2144 = vadd.f32 %v2037, %v2143
        %v2145 = vpop.f32.mrf.mxu0
        %v2146 = vadd.f32 %v2039, %v2145
        %2147 = vmatprep.mubr.f32.mxu0 0.0
        %2148 = vmatmul.mubr.f32.gmra.mxu0 %v313
        %v2149 = vpop.f32.mrf.mxu0
        %v2150 = vadd.f32 %v2043, %v2149
        %v2151 = vpop.f32.mrf.mxu0
        %v2152 = vadd.f32 %v2045, %v2151
        %2153 = vmatprep.mubr.f32.mxu0 0.0
        %2154 = vmatmul.mubr.f32.gmra.mxu0 %v318
        %v2155 = vpop.f32.mrf.mxu0
        %v2156 = vadd.f32 %v2049, %v2155
        %v2157 = vpop.f32.mrf.mxu0
        %v2158 = vadd.f32 %v2051, %v2157
        %2159 = vmatprep.mubr.f32.mxu0 0.0
        %2160 = vmatmul.mubr.f32.gmra.mxu0 %v323
        %v2161 = vpop.f32.mrf.mxu0
        %v2162 = vadd.f32 %v2055, %v2161
        %v2163 = vpop.f32.mrf.mxu0
        %v2164 = vadd.f32 %v2057, %v2163
        %2165 = vdwg.mxu0
        %2166 = vmatprep.subr.mxu0 %v720
        %2167 = vmatpush1.xpose.msra.mxu0 %v719
        %2168 = vmatprep.subr.mxu0 %v715
        %2169 = vmatpush1.xpose.msra.mxu0 %v714
        %2170 = vmatprep.subr.mxu0 %v710
        %2171 = vmatpush1.xpose.msra.mxu0 %v709
        %2172 = vmatprep.subr.mxu0 %v705
        %2173 = vmatpush1.xpose.msra.mxu0 %v704
        %2174 = vmatprep.subr.mxu0 %v700
        %2175 = vmatpush1.xpose.msra.mxu0 %v699
        %2176 = vmatprep.subr.mxu0 %v695
        %2177 = vmatpush1.xpose.msra.mxu0 %v694
        %2178 = vmatprep.subr.mxu0 %v690
        %2179 = vmatpush1.xpose.msra.mxu0 %v689
        %2180 = vmatprep.subr.mxu0 %v685
        %2181 = vmatpush1.xpose.msra.mxu0 %v684
        %2182 = vmatprep.subr.mxu0 %v680
        %2183 = vmatpush1.xpose.msra.mxu0 %v679
        %2184 = vmatprep.subr.mxu0 %v675
        %2185 = vmatpush1.xpose.msra.mxu0 %v674
        %2186 = vmatprep.subr.mxu0 %v670
        %2187 = vmatpush1.xpose.msra.mxu0 %v669
        %2188 = vmatprep.subr.mxu0 %v665
        %2189 = vmatpush1.xpose.msra.mxu0 %v664
        %2190 = vmatprep.subr.mxu0 %v660
        %2191 = vmatpush1.xpose.msra.mxu0 %v659
        %2192 = vmatprep.subr.mxu0 %v655
        %2193 = vmatpush1.xpose.msra.mxu0 %v654
        %2194 = vmatprep.subr.mxu0 %v650
        %2195 = vmatpush1.xpose.msra.mxu0 %v649
        %2196 = vmatprep.subr.mxu0 %v645
        %2197 = vmatpush1.xpose.msra.mxu0 %v644
        %2198 = vmatprep.subr.mxu0 %v800
        %2199 = vmatpush2.xpose.msra.mxu0 %v799
        %2200 = vmatprep.subr.mxu0 %v795
        %2201 = vmatpush2.xpose.msra.mxu0 %v794
        %2202 = vmatprep.subr.mxu0 %v790
        %2203 = vmatpush2.xpose.msra.mxu0 %v789
        %2204 = vmatprep.subr.mxu0 %v785
        %2205 = vmatpush2.xpose.msra.mxu0 %v784
        %2206 = vmatprep.subr.mxu0 %v780
        %2207 = vmatpush2.xpose.msra.mxu0 %v779
        %2208 = vmatprep.subr.mxu0 %v775
        %2209 = vmatpush2.xpose.msra.mxu0 %v774
        %2210 = vmatprep.subr.mxu0 %v770
        %2211 = vmatpush2.xpose.msra.mxu0 %v769
        %2212 = vmatprep.subr.mxu0 %v765
        %2213 = vmatpush2.xpose.msra.mxu0 %v764
        %2214 = vmatprep.subr.mxu0 %v760
        %2215 = vmatpush2.xpose.msra.mxu0 %v759
        %2216 = vmatprep.subr.mxu0 %v755
        %2217 = vmatpush2.xpose.msra.mxu0 %v754
        %2218 = vmatprep.subr.mxu0 %v750
        %2219 = vmatpush2.xpose.msra.mxu0 %v749
        %2220 = vmatprep.subr.mxu0 %v745
        %2221 = vmatpush2.xpose.msra.mxu0 %v744
        %2222 = vmatprep.subr.mxu0 %v740
        %2223 = vmatpush2.xpose.msra.mxu0 %v739
        %2224 = vmatprep.subr.mxu0 %v735
        %2225 = vmatpush2.xpose.msra.mxu0 %v734
        %2226 = vmatprep.subr.mxu0 %v730
        %2227 = vmatpush2.xpose.msra.mxu0 %v729
        %2228 = vmatprep.subr.mxu0 %v725
        %2229 = vmatpush2.xpose.msra.mxu0 %v724
        %2230 = vmatprep.mubr.f32.mxu0 %v290
        %2231 = vmatmul.mubr.f32.gmra.mxu0 %v289
        %v2232 = vpop.f32.mrf.mxu0
        %v2233 = vadd.f32 0.0, %v2232
        %v2234 = vpop.f32.mrf.mxu0
        %v2235 = vadd.f32 0.0, %v2234
        %2236 = vmatprep.mubr.f32.mxu0 %v295
        %2237 = vmatmul.mubr.f32.gmra.mxu0 %v294
        %v2238 = vpop.f32.mrf.mxu0
        %v2239 = vadd.f32 0.0, %v2238
        %v2240 = vpop.f32.mrf.mxu0
        %v2241 = vadd.f32 0.0, %v2240
        %2242 = vmatprep.mubr.f32.mxu0 %v300
        %2243 = vmatmul.mubr.f32.gmra.mxu0 %v299
        %v2244 = vpop.f32.mrf.mxu0
        %v2245 = vadd.f32 0.0, %v2244
        %v2246 = vpop.f32.mrf.mxu0
        %v2247 = vadd.f32 0.0, %v2246
        %2248 = vmatprep.mubr.f32.mxu0 %v305
        %2249 = vmatmul.mubr.f32.gmra.mxu0 %v304
        %v2250 = vpop.f32.mrf.mxu0
        %v2251 = vadd.f32 0.0, %v2250
        %v2252 = vpop.f32.mrf.mxu0
        %v2253 = vadd.f32 0.0, %v2252
        %2254 = vmatprep.mubr.f32.mxu0 %v310
        %2255 = vmatmul.mubr.f32.gmra.mxu0 %v309
        %v2256 = vpop.f32.mrf.mxu0
        %v2257 = vadd.f32 0.0, %v2256
        %v2258 = vpop.f32.mrf.mxu0
        %v2259 = vadd.f32 0.0, %v2258
        %2260 = vmatprep.mubr.f32.mxu0 %v315
        %2261 = vmatmul.mubr.f32.gmra.mxu0 %v314
        %v2262 = vpop.f32.mrf.mxu0
        %v2263 = vadd.f32 0.0, %v2262
        %v2264 = vpop.f32.mrf.mxu0
        %v2265 = vadd.f32 0.0, %v2264
        %2266 = vmatprep.mubr.f32.mxu0 %v320
        %2267 = vmatmul.mubr.f32.gmra.mxu0 %v319
        %v2268 = vpop.f32.mrf.mxu0
        %v2269 = vadd.f32 0.0, %v2268
        %v2270 = vpop.f32.mrf.mxu0
        %v2271 = vadd.f32 0.0, %v2270
        %2272 = vdwg.mxu0
        %2273 = vmatprep.subr.mxu0 %v722
        %2274 = vmatpush1.xpose.msra.mxu0 %v721
        %2275 = vmatprep.subr.mxu0 %v717
        %2276 = vmatpush1.xpose.msra.mxu0 %v716
        %2277 = vmatprep.subr.mxu0 %v712
        %2278 = vmatpush1.xpose.msra.mxu0 %v711
        %2279 = vmatprep.subr.mxu0 %v707
        %2280 = vmatpush1.xpose.msra.mxu0 %v706
        %2281 = vmatprep.subr.mxu0 %v702
        %2282 = vmatpush1.xpose.msra.mxu0 %v701
        %2283 = vmatprep.subr.mxu0 %v697
        %2284 = vmatpush1.xpose.msra.mxu0 %v696
        %2285 = vmatprep.subr.mxu0 %v692
        %2286 = vmatpush1.xpose.msra.mxu0 %v691
        %2287 = vmatprep.subr.mxu0 %v687
        %2288 = vmatpush1.xpose.msra.mxu0 %v686
        %2289 = vmatprep.subr.mxu0 %v682
        %2290 = vmatpush1.xpose.msra.mxu0 %v681
        %2291 = vmatprep.subr.mxu0 %v677
        %2292 = vmatpush1.xpose.msra.mxu0 %v676
        %2293 = vmatprep.subr.mxu0 %v672
        %2294 = vmatpush1.xpose.msra.mxu0 %v671
        %2295 = vmatprep.subr.mxu0 %v667
        %2296 = vmatpush1.xpose.msra.mxu0 %v666
        %2297 = vmatprep.subr.mxu0 %v662
        %2298 = vmatpush1.xpose.msra.mxu0 %v661
        %2299 = vmatprep.subr.mxu0 %v657
        %2300 = vmatpush1.xpose.msra.mxu0 %v656
        %2301 = vmatprep.subr.mxu0 %v652
        %2302 = vmatpush1.xpose.msra.mxu0 %v651
        %2303 = vmatprep.subr.mxu0 %v647
        %2304 = vmatpush1.xpose.msra.mxu0 %v646
        %2305 = vmatprep.subr.mxu0 %v802
        %2306 = vmatpush2.xpose.msra.mxu0 %v801
        %2307 = vmatprep.subr.mxu0 %v797
        %2308 = vmatpush2.xpose.msra.mxu0 %v796
        %2309 = vmatprep.subr.mxu0 %v792
        %2310 = vmatpush2.xpose.msra.mxu0 %v791
        %2311 = vmatprep.subr.mxu0 %v787
        %2312 = vmatpush2.xpose.msra.mxu0 %v786
        %2313 = vmatprep.subr.mxu0 %v782
        %2314 = vmatpush2.xpose.msra.mxu0 %v781
        %2315 = vmatprep.subr.mxu0 %v777
        %2316 = vmatpush2.xpose.msra.mxu0 %v776
        %2317 = vmatprep.subr.mxu0 %v772
        %2318 = vmatpush2.xpose.msra.mxu0 %v771
        %2319 = vmatprep.subr.mxu0 %v767
        %2320 = vmatpush2.xpose.msra.mxu0 %v766
        %2321 = vmatprep.subr.mxu0 %v762
        %2322 = vmatpush2.xpose.msra.mxu0 %v761
        %2323 = vmatprep.subr.mxu0 %v757
        %2324 = vmatpush2.xpose.msra.mxu0 %v756
        %2325 = vmatprep.subr.mxu0 %v752
        %2326 = vmatpush2.xpose.msra.mxu0 %v751
        %2327 = vmatprep.subr.mxu0 %v747
        %2328 = vmatpush2.xpose.msra.mxu0 %v746
        %2329 = vmatprep.subr.mxu0 %v742
        %2330 = vmatpush2.xpose.msra.mxu0 %v741
        %2331 = vmatprep.subr.mxu0 %v737
        %2332 = vmatpush2.xpose.msra.mxu0 %v736
        %2333 = vmatprep.subr.mxu0 %v732
        %2334 = vmatpush2.xpose.msra.mxu0 %v731
        %2335 = vmatprep.subr.mxu0 %v727
        %2336 = vmatpush2.xpose.msra.mxu0 %v726
        %2337 = vmatprep.mubr.f32.mxu0 %v292
        %2338 = vmatmul.mubr.f32.gmra.mxu0 %v291
        %v2339 = vpop.f32.mrf.mxu0
        %v2340 = vadd.f32 %v2233, %v2339
        %v2341 = vpop.f32.mrf.mxu0
        %v2342 = vadd.f32 %v2235, %v2341
        %2343 = vmatprep.mubr.f32.mxu0 %v297
        %2344 = vmatmul.mubr.f32.gmra.mxu0 %v296
        %v2345 = vpop.f32.mrf.mxu0
        %v2346 = vadd.f32 %v2239, %v2345
        %v2347 = vpop.f32.mrf.mxu0
        %v2348 = vadd.f32 %v2241, %v2347
        %2349 = vmatprep.mubr.f32.mxu0 %v302
        %2350 = vmatmul.mubr.f32.gmra.mxu0 %v301
        %v2351 = vpop.f32.mrf.mxu0
        %v2352 = vadd.f32 %v2245, %v2351
        %v2353 = vpop.f32.mrf.mxu0
        %v2354 = vadd.f32 %v2247, %v2353
        %2355 = vmatprep.mubr.f32.mxu0 %v307
        %2356 = vmatmul.mubr.f32.gmra.mxu0 %v306
        %v2357 = vpop.f32.mrf.mxu0
        %v2358 = vadd.f32 %v2251, %v2357
        %v2359 = vpop.f32.mrf.mxu0
        %v2360 = vadd.f32 %v2253, %v2359
        %2361 = vmatprep.mubr.f32.mxu0 %v312
        %2362 = vmatmul.mubr.f32.gmra.mxu0 %v311
        %v2363 = vpop.f32.mrf.mxu0
        %v2364 = vadd.f32 %v2257, %v2363
        %v2365 = vpop.f32.mrf.mxu0
        %v2366 = vadd.f32 %v2259, %v2365
        %2367 = vmatprep.mubr.f32.mxu0 %v317
        %2368 = vmatmul.mubr.f32.gmra.mxu0 %v316
        %v2369 = vpop.f32.mrf.mxu0
        %v2370 = vadd.f32 %v2263, %v2369
        %v2371 = vpop.f32.mrf.mxu0
        %v2372 = vadd.f32 %v2265, %v2371
        %2373 = vmatprep.mubr.f32.mxu0 %v322
        %2374 = vmatmul.mubr.f32.gmra.mxu0 %v321
        %v2375 = vpop.f32.mrf.mxu0
        %v2376 = vadd.f32 %v2269, %v2375
        %v2377 = vpop.f32.mrf.mxu0
        %v2378 = vadd.f32 %v2271, %v2377
        %2379 = vdwg.mxu0
        %2380 = vmatprep.subr.mxu0 0.0
        %2381 = vmatpush1.xpose.msra.mxu0 %v723
        %2382 = vmatprep.subr.mxu0 0.0
        %2383 = vmatpush1.xpose.msra.mxu0 %v718
        %2384 = vmatprep.subr.mxu0 0.0
        %2385 = vmatpush1.xpose.msra.mxu0 %v713
        %2386 = vmatprep.subr.mxu0 0.0
        %2387 = vmatpush1.xpose.msra.mxu0 %v708
        %2388 = vmatprep.subr.mxu0 0.0
        %2389 = vmatpush1.xpose.msra.mxu0 %v703
        %2390 = vmatprep.subr.mxu0 0.0
        %2391 = vmatpush1.xpose.msra.mxu0 %v698
        %2392 = vmatprep.subr.mxu0 0.0
        %2393 = vmatpush1.xpose.msra.mxu0 %v693
        %2394 = vmatprep.subr.mxu0 0.0
        %2395 = vmatpush1.xpose.msra.mxu0 %v688
        %2396 = vmatprep.subr.mxu0 0.0
        %2397 = vmatpush1.xpose.msra.mxu0 %v683
        %2398 = vmatprep.subr.mxu0 0.0
        %2399 = vmatpush1.xpose.msra.mxu0 %v678
        %2400 = vmatprep.subr.mxu0 0.0
        %2401 = vmatpush1.xpose.msra.mxu0 %v673
        %2402 = vmatprep.subr.mxu0 0.0
        %2403 = vmatpush1.xpose.msra.mxu0 %v668
        %2404 = vmatprep.subr.mxu0 0.0
        %2405 = vmatpush1.xpose.msra.mxu0 %v663
        %2406 = vmatprep.subr.mxu0 0.0
        %2407 = vmatpush1.xpose.msra.mxu0 %v658
        %2408 = vmatprep.subr.mxu0 0.0
        %2409 = vmatpush1.xpose.msra.mxu0 %v653
        %2410 = vmatprep.subr.mxu0 0.0
        %2411 = vmatpush1.xpose.msra.mxu0 %v648
        %2412 = vmatprep.subr.mxu0 0.0
        %2413 = vmatpush2.xpose.msra.mxu0 %v803
        %2414 = vmatprep.subr.mxu0 0.0
        %2415 = vmatpush2.xpose.msra.mxu0 %v798
        %2416 = vmatprep.subr.mxu0 0.0
        %2417 = vmatpush2.xpose.msra.mxu0 %v793
        %2418 = vmatprep.subr.mxu0 0.0
        %2419 = vmatpush2.xpose.msra.mxu0 %v788
        %2420 = vmatprep.subr.mxu0 0.0
        %2421 = vmatpush2.xpose.msra.mxu0 %v783
        %2422 = vmatprep.subr.mxu0 0.0
        %2423 = vmatpush2.xpose.msra.mxu0 %v778
        %2424 = vmatprep.subr.mxu0 0.0
        %2425 = vmatpush2.xpose.msra.mxu0 %v773
        %2426 = vmatprep.subr.mxu0 0.0
        %2427 = vmatpush2.xpose.msra.mxu0 %v768
        %2428 = vmatprep.subr.mxu0 0.0
        %2429 = vmatpush2.xpose.msra.mxu0 %v763
        %2430 = vmatprep.subr.mxu0 0.0
        %2431 = vmatpush2.xpose.msra.mxu0 %v758
        %2432 = vmatprep.subr.mxu0 0.0
        %2433 = vmatpush2.xpose.msra.mxu0 %v753
        %2434 = vmatprep.subr.mxu0 0.0
        %2435 = vmatpush2.xpose.msra.mxu0 %v748
        %2436 = vmatprep.subr.mxu0 0.0
        %2437 = vmatpush2.xpose.msra.mxu0 %v743
        %2438 = vmatprep.subr.mxu0 0.0
        %2439 = vmatpush2.xpose.msra.mxu0 %v738
        %2440 = vmatprep.subr.mxu0 0.0
        %2441 = vmatpush2.xpose.msra.mxu0 %v733
        %2442 = vmatprep.subr.mxu0 0.0
        %2443 = vmatpush2.xpose.msra.mxu0 %v728
        %2444 = vmatprep.mubr.f32.mxu0 0.0
        %2445 = vmatmul.mubr.f32.gmra.mxu0 %v293
        %v2446 = vpop.f32.mrf.mxu0
        %v2447 = vadd.f32 %v2340, %v2446
        %v2448 = vpop.f32.mrf.mxu0
        %v2449 = vadd.f32 %v2342, %v2448
        %2450 = vmatprep.mubr.f32.mxu0 0.0
        %2451 = vmatmul.mubr.f32.gmra.mxu0 %v298
        %v2452 = vpop.f32.mrf.mxu0
        %v2453 = vadd.f32 %v2346, %v2452
        %v2454 = vpop.f32.mrf.mxu0
        %v2455 = vadd.f32 %v2348, %v2454
        %2456 = vmatprep.mubr.f32.mxu0 0.0
        %2457 = vmatmul.mubr.f32.gmra.mxu0 %v303
        %v2458 = vpop.f32.mrf.mxu0
        %v2459 = vadd.f32 %v2352, %v2458
        %v2460 = vpop.f32.mrf.mxu0
        %v2461 = vadd.f32 %v2354, %v2460
        %2462 = vmatprep.mubr.f32.mxu0 0.0
        %2463 = vmatmul.mubr.f32.gmra.mxu0 %v308
        %v2464 = vpop.f32.mrf.mxu0
        %v2465 = vadd.f32 %v2358, %v2464
        %v2466 = vpop.f32.mrf.mxu0
        %v2467 = vadd.f32 %v2360, %v2466
        %2468 = vmatprep.mubr.f32.mxu0 0.0
        %2469 = vmatmul.mubr.f32.gmra.mxu0 %v313
        %v2470 = vpop.f32.mrf.mxu0
        %v2471 = vadd.f32 %v2364, %v2470
        %v2472 = vpop.f32.mrf.mxu0
        %v2473 = vadd.f32 %v2366, %v2472
        %2474 = vmatprep.mubr.f32.mxu0 0.0
        %2475 = vmatmul.mubr.f32.gmra.mxu0 %v318
        %v2476 = vpop.f32.mrf.mxu0
        %v2477 = vadd.f32 %v2370, %v2476
        %v2478 = vpop.f32.mrf.mxu0
        %v2479 = vadd.f32 %v2372, %v2478
        %2480 = vmatprep.mubr.f32.mxu0 0.0
        %2481 = vmatmul.mubr.f32.gmra.mxu0 %v323
        %v2482 = vpop.f32.mrf.mxu0
        %v2483 = vadd.f32 %v2376, %v2482
        %v2484 = vpop.f32.mrf.mxu0
        %v2485 = vadd.f32 %v2378, %v2484
        %2486 = vdwg.mxu0
        %2487 = vmatprep.subr.mxu0 %v880
        %2488 = vmatpush1.xpose.msra.mxu0 %v879
        %2489 = vmatprep.subr.mxu0 %v875
        %2490 = vmatpush1.xpose.msra.mxu0 %v874
        %2491 = vmatprep.subr.mxu0 %v870
        %2492 = vmatpush1.xpose.msra.mxu0 %v869
        %2493 = vmatprep.subr.mxu0 %v865
        %2494 = vmatpush1.xpose.msra.mxu0 %v864
        %2495 = vmatprep.subr.mxu0 %v860
        %2496 = vmatpush1.xpose.msra.mxu0 %v859
        %2497 = vmatprep.subr.mxu0 %v855
        %2498 = vmatpush1.xpose.msra.mxu0 %v854
        %2499 = vmatprep.subr.mxu0 %v850
        %2500 = vmatpush1.xpose.msra.mxu0 %v849
        %2501 = vmatprep.subr.mxu0 %v845
        %2502 = vmatpush1.xpose.msra.mxu0 %v844
        %2503 = vmatprep.subr.mxu0 %v840
        %2504 = vmatpush1.xpose.msra.mxu0 %v839
        %2505 = vmatprep.subr.mxu0 %v835
        %2506 = vmatpush1.xpose.msra.mxu0 %v834
        %2507 = vmatprep.subr.mxu0 %v830
        %2508 = vmatpush1.xpose.msra.mxu0 %v829
        %2509 = vmatprep.subr.mxu0 %v825
        %2510 = vmatpush1.xpose.msra.mxu0 %v824
        %2511 = vmatprep.subr.mxu0 %v820
        %2512 = vmatpush1.xpose.msra.mxu0 %v819
        %2513 = vmatprep.subr.mxu0 %v815
        %2514 = vmatpush1.xpose.msra.mxu0 %v814
        %2515 = vmatprep.subr.mxu0 %v810
        %2516 = vmatpush1.xpose.msra.mxu0 %v809
        %2517 = vmatprep.subr.mxu0 %v805
        %2518 = vmatpush1.xpose.msra.mxu0 %v804
        %2519 = vmatprep.subr.mxu0 %v960
        %2520 = vmatpush2.xpose.msra.mxu0 %v959
        %2521 = vmatprep.subr.mxu0 %v955
        %2522 = vmatpush2.xpose.msra.mxu0 %v954
        %2523 = vmatprep.subr.mxu0 %v950
        %2524 = vmatpush2.xpose.msra.mxu0 %v949
        %2525 = vmatprep.subr.mxu0 %v945
        %2526 = vmatpush2.xpose.msra.mxu0 %v944
        %2527 = vmatprep.subr.mxu0 %v940
        %2528 = vmatpush2.xpose.msra.mxu0 %v939
        %2529 = vmatprep.subr.mxu0 %v935
        %2530 = vmatpush2.xpose.msra.mxu0 %v934
        %2531 = vmatprep.subr.mxu0 %v930
        %2532 = vmatpush2.xpose.msra.mxu0 %v929
        %2533 = vmatprep.subr.mxu0 %v925
        %2534 = vmatpush2.xpose.msra.mxu0 %v924
        %2535 = vmatprep.subr.mxu0 %v920
        %2536 = vmatpush2.xpose.msra.mxu0 %v919
        %2537 = vmatprep.subr.mxu0 %v915
        %2538 = vmatpush2.xpose.msra.mxu0 %v914
        %2539 = vmatprep.subr.mxu0 %v910
        %2540 = vmatpush2.xpose.msra.mxu0 %v909
        %2541 = vmatprep.subr.mxu0 %v905
        %2542 = vmatpush2.xpose.msra.mxu0 %v904
        %2543 = vmatprep.subr.mxu0 %v900
        %2544 = vmatpush2.xpose.msra.mxu0 %v899
        %2545 = vmatprep.subr.mxu0 %v895
        %2546 = vmatpush2.xpose.msra.mxu0 %v894
        %2547 = vmatprep.subr.mxu0 %v890
        %2548 = vmatpush2.xpose.msra.mxu0 %v889
        %2549 = vmatprep.subr.mxu0 %v885
        %2550 = vmatpush2.xpose.msra.mxu0 %v884
        %2551 = vmatprep.mubr.f32.mxu0 %v290
        %2552 = vmatmul.mubr.f32.gmra.mxu0 %v289
        %v2553 = vpop.f32.mrf.mxu0
        %v2554 = vadd.f32 0.0, %v2553
        %v2555 = vpop.f32.mrf.mxu0
        %v2556 = vadd.f32 0.0, %v2555
        %2557 = vmatprep.mubr.f32.mxu0 %v295
        %2558 = vmatmul.mubr.f32.gmra.mxu0 %v294
        %v2559 = vpop.f32.mrf.mxu0
        %v2560 = vadd.f32 0.0, %v2559
        %v2561 = vpop.f32.mrf.mxu0
        %v2562 = vadd.f32 0.0, %v2561
        %2563 = vmatprep.mubr.f32.mxu0 %v300
        %2564 = vmatmul.mubr.f32.gmra.mxu0 %v299
        %v2565 = vpop.f32.mrf.mxu0
        %v2566 = vadd.f32 0.0, %v2565
        %v2567 = vpop.f32.mrf.mxu0
        %v2568 = vadd.f32 0.0, %v2567
        %2569 = vmatprep.mubr.f32.mxu0 %v305
        %2570 = vmatmul.mubr.f32.gmra.mxu0 %v304
        %v2571 = vpop.f32.mrf.mxu0
        %v2572 = vadd.f32 0.0, %v2571
        %v2573 = vpop.f32.mrf.mxu0
        %v2574 = vadd.f32 0.0, %v2573
        %2575 = vmatprep.mubr.f32.mxu0 %v310
        %2576 = vmatmul.mubr.f32.gmra.mxu0 %v309
        %v2577 = vpop.f32.mrf.mxu0
        %v2578 = vadd.f32 0.0, %v2577
        %v2579 = vpop.f32.mrf.mxu0
        %v2580 = vadd.f32 0.0, %v2579
        %2581 = vmatprep.mubr.f32.mxu0 %v315
        %2582 = vmatmul.mubr.f32.gmra.mxu0 %v314
        %v2583 = vpop.f32.mrf.mxu0
        %v2584 = vadd.f32 0.0, %v2583
        %v2585 = vpop.f32.mrf.mxu0
        %v2586 = vadd.f32 0.0, %v2585
        %2587 = vmatprep.mubr.f32.mxu0 %v320
        %2588 = vmatmul.mubr.f32.gmra.mxu0 %v319
        %v2589 = vpop.f32.mrf.mxu0
        %v2590 = vadd.f32 0.0, %v2589
        %v2591 = vpop.f32.mrf.mxu0
        %v2592 = vadd.f32 0.0, %v2591
        %2593 = vdwg.mxu0
        %2594 = vmatprep.subr.mxu0 %v882
        %2595 = vmatpush1.xpose.msra.mxu0 %v881
        %2596 = vmatprep.subr.mxu0 %v877
        %2597 = vmatpush1.xpose.msra.mxu0 %v876
        %2598 = vmatprep.subr.mxu0 %v872
        %2599 = vmatpush1.xpose.msra.mxu0 %v871
        %2600 = vmatprep.subr.mxu0 %v867
        %2601 = vmatpush1.xpose.msra.mxu0 %v866
        %2602 = vmatprep.subr.mxu0 %v862
        %2603 = vmatpush1.xpose.msra.mxu0 %v861
        %2604 = vmatprep.subr.mxu0 %v857
        %2605 = vmatpush1.xpose.msra.mxu0 %v856
        %2606 = vmatprep.subr.mxu0 %v852
        %2607 = vmatpush1.xpose.msra.mxu0 %v851
        %2608 = vmatprep.subr.mxu0 %v847
        %2609 = vmatpush1.xpose.msra.mxu0 %v846
        %2610 = vmatprep.subr.mxu0 %v842
        %2611 = vmatpush1.xpose.msra.mxu0 %v841
        %2612 = vmatprep.subr.mxu0 %v837
        %2613 = vmatpush1.xpose.msra.mxu0 %v836
        %2614 = vmatprep.subr.mxu0 %v832
        %2615 = vmatpush1.xpose.msra.mxu0 %v831
        %2616 = vmatprep.subr.mxu0 %v827
        %2617 = vmatpush1.xpose.msra.mxu0 %v826
        %2618 = vmatprep.subr.mxu0 %v822
        %2619 = vmatpush1.xpose.msra.mxu0 %v821
        %2620 = vmatprep.subr.mxu0 %v817
        %2621 = vmatpush1.xpose.msra.mxu0 %v816
        %2622 = vmatprep.subr.mxu0 %v812
        %2623 = vmatpush1.xpose.msra.mxu0 %v811
        %2624 = vmatprep.subr.mxu0 %v807
        %2625 = vmatpush1.xpose.msra.mxu0 %v806
        %2626 = vmatprep.subr.mxu0 %v962
        %2627 = vmatpush2.xpose.msra.mxu0 %v961
        %2628 = vmatprep.subr.mxu0 %v957
        %2629 = vmatpush2.xpose.msra.mxu0 %v956
        %2630 = vmatprep.subr.mxu0 %v952
        %2631 = vmatpush2.xpose.msra.mxu0 %v951
        %2632 = vmatprep.subr.mxu0 %v947
        %2633 = vmatpush2.xpose.msra.mxu0 %v946
        %2634 = vmatprep.subr.mxu0 %v942
        %2635 = vmatpush2.xpose.msra.mxu0 %v941
        %2636 = vmatprep.subr.mxu0 %v937
        %2637 = vmatpush2.xpose.msra.mxu0 %v936
        %2638 = vmatprep.subr.mxu0 %v932
        %2639 = vmatpush2.xpose.msra.mxu0 %v931
        %2640 = vmatprep.subr.mxu0 %v927
        %2641 = vmatpush2.xpose.msra.mxu0 %v926
        %2642 = vmatprep.subr.mxu0 %v922
        %2643 = vmatpush2.xpose.msra.mxu0 %v921
        %2644 = vmatprep.subr.mxu0 %v917
        %2645 = vmatpush2.xpose.msra.mxu0 %v916
        %2646 = vmatprep.subr.mxu0 %v912
        %2647 = vmatpush2.xpose.msra.mxu0 %v911
        %2648 = vmatprep.subr.mxu0 %v907
        %2649 = vmatpush2.xpose.msra.mxu0 %v906
        %2650 = vmatprep.subr.mxu0 %v902
        %2651 = vmatpush2.xpose.msra.mxu0 %v901
        %2652 = vmatprep.subr.mxu0 %v897
        %2653 = vmatpush2.xpose.msra.mxu0 %v896
        %2654 = vmatprep.subr.mxu0 %v892
        %2655 = vmatpush2.xpose.msra.mxu0 %v891
        %2656 = vmatprep.subr.mxu0 %v887
        %2657 = vmatpush2.xpose.msra.mxu0 %v886
        %2658 = vmatprep.mubr.f32.mxu0 %v292
        %2659 = vmatmul.mubr.f32.gmra.mxu0 %v291
        %v2660 = vpop.f32.mrf.mxu0
        %v2661 = vadd.f32 %v2554, %v2660
        %v2662 = vpop.f32.mrf.mxu0
        %v2663 = vadd.f32 %v2556, %v2662
        %2664 = vmatprep.mubr.f32.mxu0 %v297
        %2665 = vmatmul.mubr.f32.gmra.mxu0 %v296
        %v2666 = vpop.f32.mrf.mxu0
        %v2667 = vadd.f32 %v2560, %v2666
        %v2668 = vpop.f32.mrf.mxu0
        %v2669 = vadd.f32 %v2562, %v2668
        %2670 = vmatprep.mubr.f32.mxu0 %v302
        %2671 = vmatmul.mubr.f32.gmra.mxu0 %v301
        %v2672 = vpop.f32.mrf.mxu0
        %v2673 = vadd.f32 %v2566, %v2672
        %v2674 = vpop.f32.mrf.mxu0
        %v2675 = vadd.f32 %v2568, %v2674
        %2676 = vmatprep.mubr.f32.mxu0 %v307
        %2677 = vmatmul.mubr.f32.gmra.mxu0 %v306
        %v2678 = vpop.f32.mrf.mxu0
        %v2679 = vadd.f32 %v2572, %v2678
        %v2680 = vpop.f32.mrf.mxu0
        %v2681 = vadd.f32 %v2574, %v2680
        %2682 = vmatprep.mubr.f32.mxu0 %v312
        %2683 = vmatmul.mubr.f32.gmra.mxu0 %v311
        %v2684 = vpop.f32.mrf.mxu0
        %v2685 = vadd.f32 %v2578, %v2684
        %v2686 = vpop.f32.mrf.mxu0
        %v2687 = vadd.f32 %v2580, %v2686
        %2688 = vmatprep.mubr.f32.mxu0 %v317
        %2689 = vmatmul.mubr.f32.gmra.mxu0 %v316
        %v2690 = vpop.f32.mrf.mxu0
        %v2691 = vadd.f32 %v2584, %v2690
        %v2692 = vpop.f32.mrf.mxu0
        %v2693 = vadd.f32 %v2586, %v2692
        %2694 = vmatprep.mubr.f32.mxu0 %v322
        %2695 = vmatmul.mubr.f32.gmra.mxu0 %v321
        %v2696 = vpop.f32.mrf.mxu0
        %v2697 = vadd.f32 %v2590, %v2696
        %v2698 = vpop.f32.mrf.mxu0
        %v2699 = vadd.f32 %v2592, %v2698
        %2700 = vdwg.mxu0
        %2701 = vmatprep.subr.mxu0 0.0
        %2702 = vmatpush1.xpose.msra.mxu0 %v883
        %2703 = vmatprep.subr.mxu0 0.0
        %2704 = vmatpush1.xpose.msra.mxu0 %v878
        %2705 = vmatprep.subr.mxu0 0.0
        %2706 = vmatpush1.xpose.msra.mxu0 %v873
        %2707 = vmatprep.subr.mxu0 0.0
        %2708 = vmatpush1.xpose.msra.mxu0 %v868
        %2709 = vmatprep.subr.mxu0 0.0
        %2710 = vmatpush1.xpose.msra.mxu0 %v863
        %2711 = vmatprep.subr.mxu0 0.0
        %2712 = vmatpush1.xpose.msra.mxu0 %v858
        %2713 = vmatprep.subr.mxu0 0.0
        %2714 = vmatpush1.xpose.msra.mxu0 %v853
        %2715 = vmatprep.subr.mxu0 0.0
        %2716 = vmatpush1.xpose.msra.mxu0 %v848
        %2717 = vmatprep.subr.mxu0 0.0
        %2718 = vmatpush1.xpose.msra.mxu0 %v843
        %2719 = vmatprep.subr.mxu0 0.0
        %2720 = vmatpush1.xpose.msra.mxu0 %v838
        %2721 = vmatprep.subr.mxu0 0.0
        %2722 = vmatpush1.xpose.msra.mxu0 %v833
        %2723 = vmatprep.subr.mxu0 0.0
        %2724 = vmatpush1.xpose.msra.mxu0 %v828
        %2725 = vmatprep.subr.mxu0 0.0
        %2726 = vmatpush1.xpose.msra.mxu0 %v823
        %2727 = vmatprep.subr.mxu0 0.0
        %2728 = vmatpush1.xpose.msra.mxu0 %v818
        %2729 = vmatprep.subr.mxu0 0.0
        %2730 = vmatpush1.xpose.msra.mxu0 %v813
        %2731 = vmatprep.subr.mxu0 0.0
        %2732 = vmatpush1.xpose.msra.mxu0 %v808
        %2733 = vmatprep.subr.mxu0 0.0
        %2734 = vmatpush2.xpose.msra.mxu0 %v963
        %2735 = vmatprep.subr.mxu0 0.0
        %2736 = vmatpush2.xpose.msra.mxu0 %v958
        %2737 = vmatprep.subr.mxu0 0.0
        %2738 = vmatpush2.xpose.msra.mxu0 %v953
        %2739 = vmatprep.subr.mxu0 0.0
        %2740 = vmatpush2.xpose.msra.mxu0 %v948
        %2741 = vmatprep.subr.mxu0 0.0
        %2742 = vmatpush2.xpose.msra.mxu0 %v943
        %2743 = vmatprep.subr.mxu0 0.0
        %2744 = vmatpush2.xpose.msra.mxu0 %v938
        %2745 = vmatprep.subr.mxu0 0.0
        %2746 = vmatpush2.xpose.msra.mxu0 %v933
        %2747 = vmatprep.subr.mxu0 0.0
        %2748 = vmatpush2.xpose.msra.mxu0 %v928
        %2749 = vmatprep.subr.mxu0 0.0
        %2750 = vmatpush2.xpose.msra.mxu0 %v923
        %2751 = vmatprep.subr.mxu0 0.0
        %2752 = vmatpush2.xpose.msra.mxu0 %v918
        %2753 = vmatprep.subr.mxu0 0.0
        %2754 = vmatpush2.xpose.msra.mxu0 %v913
        %2755 = vmatprep.subr.mxu0 0.0
        %2756 = vmatpush2.xpose.msra.mxu0 %v908
        %2757 = vmatprep.subr.mxu0 0.0
        %2758 = vmatpush2.xpose.msra.mxu0 %v903
        %2759 = vmatprep.subr.mxu0 0.0
        %2760 = vmatpush2.xpose.msra.mxu0 %v898
        %2761 = vmatprep.subr.mxu0 0.0
        %2762 = vmatpush2.xpose.msra.mxu0 %v893
        %2763 = vmatprep.subr.mxu0 0.0
        %2764 = vmatpush2.xpose.msra.mxu0 %v888
        %2765 = vmatprep.mubr.f32.mxu0 0.0
        %2766 = vmatmul.mubr.f32.gmra.mxu0 %v293
        %v2767 = vpop.f32.mrf.mxu0
        %v2768 = vadd.f32 %v2661, %v2767
        %v2769 = vpop.f32.mrf.mxu0
        %v2770 = vadd.f32 %v2663, %v2769
        %2771 = vmatprep.mubr.f32.mxu0 0.0
        %2772 = vmatmul.mubr.f32.gmra.mxu0 %v298
        %v2773 = vpop.f32.mrf.mxu0
        %v2774 = vadd.f32 %v2667, %v2773
        %v2775 = vpop.f32.mrf.mxu0
        %v2776 = vadd.f32 %v2669, %v2775
        %2777 = vmatprep.mubr.f32.mxu0 0.0
        %2778 = vmatmul.mubr.f32.gmra.mxu0 %v303
        %v2779 = vpop.f32.mrf.mxu0
        %v2780 = vadd.f32 %v2673, %v2779
        %v2781 = vpop.f32.mrf.mxu0
        %v2782 = vadd.f32 %v2675, %v2781
        %2783 = vmatprep.mubr.f32.mxu0 0.0
        %2784 = vmatmul.mubr.f32.gmra.mxu0 %v308
        %v2785 = vpop.f32.mrf.mxu0
        %v2786 = vadd.f32 %v2679, %v2785
        %v2787 = vpop.f32.mrf.mxu0
        %v2788 = vadd.f32 %v2681, %v2787
        %2789 = vmatprep.mubr.f32.mxu0 0.0
        %2790 = vmatmul.mubr.f32.gmra.mxu0 %v313
        %v2791 = vpop.f32.mrf.mxu0
        %v2792 = vadd.f32 %v2685, %v2791
        %v2793 = vpop.f32.mrf.mxu0
        %v2794 = vadd.f32 %v2687, %v2793
        %2795 = vmatprep.mubr.f32.mxu0 0.0
        %2796 = vmatmul.mubr.f32.gmra.mxu0 %v318
        %v2797 = vpop.f32.mrf.mxu0
        %v2798 = vadd.f32 %v2691, %v2797
        %v2799 = vpop.f32.mrf.mxu0
        %v2800 = vadd.f32 %v2693, %v2799
        %2801 = vmatprep.mubr.f32.mxu0 0.0
        %2802 = vmatmul.mubr.f32.gmra.mxu0 %v323
        %v2803 = vpop.f32.mrf.mxu0
        %v2804 = vadd.f32 %v2697, %v2803
        %v2805 = vpop.f32.mrf.mxu0
        %v2806 = vadd.f32 %v2699, %v2805
        %2807 = vdwg.mxu0
        %2808 = vmatprep.subr.mxu0 %v1040
        %2809 = vmatpush1.xpose.msra.mxu0 %v1039
        %2810 = vmatprep.subr.mxu0 %v1035
        %2811 = vmatpush1.xpose.msra.mxu0 %v1034
        %2812 = vmatprep.subr.mxu0 %v1030
        %2813 = vmatpush1.xpose.msra.mxu0 %v1029
        %2814 = vmatprep.subr.mxu0 %v1025
        %2815 = vmatpush1.xpose.msra.mxu0 %v1024
        %2816 = vmatprep.subr.mxu0 %v1020
        %2817 = vmatpush1.xpose.msra.mxu0 %v1019
        %2818 = vmatprep.subr.mxu0 %v1015
        %2819 = vmatpush1.xpose.msra.mxu0 %v1014
        %2820 = vmatprep.subr.mxu0 %v1010
        %2821 = vmatpush1.xpose.msra.mxu0 %v1009
        %2822 = vmatprep.subr.mxu0 %v1005
        %2823 = vmatpush1.xpose.msra.mxu0 %v1004
        %2824 = vmatprep.subr.mxu0 %v1000
        %2825 = vmatpush1.xpose.msra.mxu0 %v999
        %2826 = vmatprep.subr.mxu0 %v995
        %2827 = vmatpush1.xpose.msra.mxu0 %v994
        %2828 = vmatprep.subr.mxu0 %v990
        %2829 = vmatpush1.xpose.msra.mxu0 %v989
        %2830 = vmatprep.subr.mxu0 %v985
        %2831 = vmatpush1.xpose.msra.mxu0 %v984
        %2832 = vmatprep.subr.mxu0 %v980
        %2833 = vmatpush1.xpose.msra.mxu0 %v979
        %2834 = vmatprep.subr.mxu0 %v975
        %2835 = vmatpush1.xpose.msra.mxu0 %v974
        %2836 = vmatprep.subr.mxu0 %v970
        %2837 = vmatpush1.xpose.msra.mxu0 %v969
        %2838 = vmatprep.subr.mxu0 %v965
        %2839 = vmatpush1.xpose.msra.mxu0 %v964
        %2840 = vmatprep.subr.mxu0 %v1120
        %2841 = vmatpush2.xpose.msra.mxu0 %v1119
        %2842 = vmatprep.subr.mxu0 %v1115
        %2843 = vmatpush2.xpose.msra.mxu0 %v1114
        %2844 = vmatprep.subr.mxu0 %v1110
        %2845 = vmatpush2.xpose.msra.mxu0 %v1109
        %2846 = vmatprep.subr.mxu0 %v1105
        %2847 = vmatpush2.xpose.msra.mxu0 %v1104
        %2848 = vmatprep.subr.mxu0 %v1100
        %2849 = vmatpush2.xpose.msra.mxu0 %v1099
        %2850 = vmatprep.subr.mxu0 %v1095
        %2851 = vmatpush2.xpose.msra.mxu0 %v1094
        %2852 = vmatprep.subr.mxu0 %v1090
        %2853 = vmatpush2.xpose.msra.mxu0 %v1089
        %2854 = vmatprep.subr.mxu0 %v1085
        %2855 = vmatpush2.xpose.msra.mxu0 %v1084
        %2856 = vmatprep.subr.mxu0 %v1080
        %2857 = vmatpush2.xpose.msra.mxu0 %v1079
        %2858 = vmatprep.subr.mxu0 %v1075
        %2859 = vmatpush2.xpose.msra.mxu0 %v1074
        %2860 = vmatprep.subr.mxu0 %v1070
        %2861 = vmatpush2.xpose.msra.mxu0 %v1069
        %2862 = vmatprep.subr.mxu0 %v1065
        %2863 = vmatpush2.xpose.msra.mxu0 %v1064
        %2864 = vmatprep.subr.mxu0 %v1060
        %2865 = vmatpush2.xpose.msra.mxu0 %v1059
        %2866 = vmatprep.subr.mxu0 %v1055
        %2867 = vmatpush2.xpose.msra.mxu0 %v1054
        %2868 = vmatprep.subr.mxu0 %v1050
        %2869 = vmatpush2.xpose.msra.mxu0 %v1049
        %2870 = vmatprep.subr.mxu0 %v1045
        %2871 = vmatpush2.xpose.msra.mxu0 %v1044
        %2872 = vmatprep.mubr.f32.mxu0 %v290
        %2873 = vmatmul.mubr.f32.gmra.mxu0 %v289
        %v2874 = vpop.f32.mrf.mxu0
        %v2875 = vadd.f32 0.0, %v2874
        %v2876 = vpop.f32.mrf.mxu0
        %v2877 = vadd.f32 0.0, %v2876
        %2878 = vmatprep.mubr.f32.mxu0 %v295
        %2879 = vmatmul.mubr.f32.gmra.mxu0 %v294
        %v2880 = vpop.f32.mrf.mxu0
        %v2881 = vadd.f32 0.0, %v2880
        %v2882 = vpop.f32.mrf.mxu0
        %v2883 = vadd.f32 0.0, %v2882
        %2884 = vmatprep.mubr.f32.mxu0 %v300
        %2885 = vmatmul.mubr.f32.gmra.mxu0 %v299
        %v2886 = vpop.f32.mrf.mxu0
        %v2887 = vadd.f32 0.0, %v2886
        %v2888 = vpop.f32.mrf.mxu0
        %v2889 = vadd.f32 0.0, %v2888
        %2890 = vmatprep.mubr.f32.mxu0 %v305
        %2891 = vmatmul.mubr.f32.gmra.mxu0 %v304
        %v2892 = vpop.f32.mrf.mxu0
        %v2893 = vadd.f32 0.0, %v2892
        %v2894 = vpop.f32.mrf.mxu0
        %v2895 = vadd.f32 0.0, %v2894
        %2896 = vmatprep.mubr.f32.mxu0 %v310
        %2897 = vmatmul.mubr.f32.gmra.mxu0 %v309
        %v2898 = vpop.f32.mrf.mxu0
        %v2899 = vadd.f32 0.0, %v2898
        %v2900 = vpop.f32.mrf.mxu0
        %v2901 = vadd.f32 0.0, %v2900
        %2902 = vmatprep.mubr.f32.mxu0 %v315
        %2903 = vmatmul.mubr.f32.gmra.mxu0 %v314
        %v2904 = vpop.f32.mrf.mxu0
        %v2905 = vadd.f32 0.0, %v2904
        %v2906 = vpop.f32.mrf.mxu0
        %v2907 = vadd.f32 0.0, %v2906
        %2908 = vmatprep.mubr.f32.mxu0 %v320
        %2909 = vmatmul.mubr.f32.gmra.mxu0 %v319
        %v2910 = vpop.f32.mrf.mxu0
        %v2911 = vadd.f32 0.0, %v2910
        %v2912 = vpop.f32.mrf.mxu0
        %v2913 = vadd.f32 0.0, %v2912
        %2914 = vdwg.mxu0
        %2915 = vmatprep.subr.mxu0 %v1042
        %2916 = vmatpush1.xpose.msra.mxu0 %v1041
        %2917 = vmatprep.subr.mxu0 %v1037
        %2918 = vmatpush1.xpose.msra.mxu0 %v1036
        %2919 = vmatprep.subr.mxu0 %v1032
        %2920 = vmatpush1.xpose.msra.mxu0 %v1031
        %2921 = vmatprep.subr.mxu0 %v1027
        %2922 = vmatpush1.xpose.msra.mxu0 %v1026
        %2923 = vmatprep.subr.mxu0 %v1022
        %2924 = vmatpush1.xpose.msra.mxu0 %v1021
        %2925 = vmatprep.subr.mxu0 %v1017
        %2926 = vmatpush1.xpose.msra.mxu0 %v1016
        %2927 = vmatprep.subr.mxu0 %v1012
        %2928 = vmatpush1.xpose.msra.mxu0 %v1011
        %2929 = vmatprep.subr.mxu0 %v1007
        %2930 = vmatpush1.xpose.msra.mxu0 %v1006
        %2931 = vmatprep.subr.mxu0 %v1002
        %2932 = vmatpush1.xpose.msra.mxu0 %v1001
        %2933 = vmatprep.subr.mxu0 %v997
        %2934 = vmatpush1.xpose.msra.mxu0 %v996
        %2935 = vmatprep.subr.mxu0 %v992
        %2936 = vmatpush1.xpose.msra.mxu0 %v991
        %2937 = vmatprep.subr.mxu0 %v987
        %2938 = vmatpush1.xpose.msra.mxu0 %v986
        %2939 = vmatprep.subr.mxu0 %v982
        %2940 = vmatpush1.xpose.msra.mxu0 %v981
        %2941 = vmatprep.subr.mxu0 %v977
        %2942 = vmatpush1.xpose.msra.mxu0 %v976
        %2943 = vmatprep.subr.mxu0 %v972
        %2944 = vmatpush1.xpose.msra.mxu0 %v971
        %2945 = vmatprep.subr.mxu0 %v967
        %2946 = vmatpush1.xpose.msra.mxu0 %v966
        %2947 = vmatprep.subr.mxu0 %v1122
        %2948 = vmatpush2.xpose.msra.mxu0 %v1121
        %2949 = vmatprep.subr.mxu0 %v1117
        %2950 = vmatpush2.xpose.msra.mxu0 %v1116
        %2951 = vmatprep.subr.mxu0 %v1112
        %2952 = vmatpush2.xpose.msra.mxu0 %v1111
        %2953 = vmatprep.subr.mxu0 %v1107
        %2954 = vmatpush2.xpose.msra.mxu0 %v1106
        %2955 = vmatprep.subr.mxu0 %v1102
        %2956 = vmatpush2.xpose.msra.mxu0 %v1101
        %2957 = vmatprep.subr.mxu0 %v1097
        %2958 = vmatpush2.xpose.msra.mxu0 %v1096
        %2959 = vmatprep.subr.mxu0 %v1092
        %2960 = vmatpush2.xpose.msra.mxu0 %v1091
        %2961 = vmatprep.subr.mxu0 %v1087
        %2962 = vmatpush2.xpose.msra.mxu0 %v1086
        %2963 = vmatprep.subr.mxu0 %v1082
        %2964 = vmatpush2.xpose.msra.mxu0 %v1081
        %2965 = vmatprep.subr.mxu0 %v1077
        %2966 = vmatpush2.xpose.msra.mxu0 %v1076
        %2967 = vmatprep.subr.mxu0 %v1072
        %2968 = vmatpush2.xpose.msra.mxu0 %v1071
        %2969 = vmatprep.subr.mxu0 %v1067
        %2970 = vmatpush2.xpose.msra.mxu0 %v1066
        %2971 = vmatprep.subr.mxu0 %v1062
        %2972 = vmatpush2.xpose.msra.mxu0 %v1061
        %2973 = vmatprep.subr.mxu0 %v1057
        %2974 = vmatpush2.xpose.msra.mxu0 %v1056
        %2975 = vmatprep.subr.mxu0 %v1052
        %2976 = vmatpush2.xpose.msra.mxu0 %v1051
        %2977 = vmatprep.subr.mxu0 %v1047
        %2978 = vmatpush2.xpose.msra.mxu0 %v1046
        %2979 = vmatprep.mubr.f32.mxu0 %v292
        %2980 = vmatmul.mubr.f32.gmra.mxu0 %v291
        %v2981 = vpop.f32.mrf.mxu0
        %v2982 = vadd.f32 %v2875, %v2981
        %v2983 = vpop.f32.mrf.mxu0
        %v2984 = vadd.f32 %v2877, %v2983
        %2985 = vmatprep.mubr.f32.mxu0 %v297
        %2986 = vmatmul.mubr.f32.gmra.mxu0 %v296
        %v2987 = vpop.f32.mrf.mxu0
        %v2988 = vadd.f32 %v2881, %v2987
        %v2989 = vpop.f32.mrf.mxu0
        %v2990 = vadd.f32 %v2883, %v2989
        %2991 = vmatprep.mubr.f32.mxu0 %v302
        %2992 = vmatmul.mubr.f32.gmra.mxu0 %v301
        %v2993 = vpop.f32.mrf.mxu0
        %v2994 = vadd.f32 %v2887, %v2993
        %v2995 = vpop.f32.mrf.mxu0
        %v2996 = vadd.f32 %v2889, %v2995
        %2997 = vmatprep.mubr.f32.mxu0 %v307
        %2998 = vmatmul.mubr.f32.gmra.mxu0 %v306
        %v2999 = vpop.f32.mrf.mxu0
        %v3000 = vadd.f32 %v2893, %v2999
        %v3001 = vpop.f32.mrf.mxu0
        %v3002 = vadd.f32 %v2895, %v3001
        %3003 = vmatprep.mubr.f32.mxu0 %v312
        %3004 = vmatmul.mubr.f32.gmra.mxu0 %v311
        %v3005 = vpop.f32.mrf.mxu0
        %v3006 = vadd.f32 %v2899, %v3005
        %v3007 = vpop.f32.mrf.mxu0
        %v3008 = vadd.f32 %v2901, %v3007
        %3009 = vmatprep.mubr.f32.mxu0 %v317
        %3010 = vmatmul.mubr.f32.gmra.mxu0 %v316
        %v3011 = vpop.f32.mrf.mxu0
        %v3012 = vadd.f32 %v2905, %v3011
        %v3013 = vpop.f32.mrf.mxu0
        %v3014 = vadd.f32 %v2907, %v3013
        %3015 = vmatprep.mubr.f32.mxu0 %v322
        %3016 = vmatmul.mubr.f32.gmra.mxu0 %v321
        %v3017 = vpop.f32.mrf.mxu0
        %v3018 = vadd.f32 %v2911, %v3017
        %v3019 = vpop.f32.mrf.mxu0
        %v3020 = vadd.f32 %v2913, %v3019
        %3021 = vdwg.mxu0
        %3022 = vmatprep.subr.mxu0 0.0
        %3023 = vmatpush1.xpose.msra.mxu0 %v1043
        %3024 = vmatprep.subr.mxu0 0.0
        %3025 = vmatpush1.xpose.msra.mxu0 %v1038
        %3026 = vmatprep.subr.mxu0 0.0
        %3027 = vmatpush1.xpose.msra.mxu0 %v1033
        %3028 = vmatprep.subr.mxu0 0.0
        %3029 = vmatpush1.xpose.msra.mxu0 %v1028
        %3030 = vmatprep.subr.mxu0 0.0
        %3031 = vmatpush1.xpose.msra.mxu0 %v1023
        %3032 = vmatprep.subr.mxu0 0.0
        %3033 = vmatpush1.xpose.msra.mxu0 %v1018
        %3034 = vmatprep.subr.mxu0 0.0
        %3035 = vmatpush1.xpose.msra.mxu0 %v1013
        %3036 = vmatprep.subr.mxu0 0.0
        %3037 = vmatpush1.xpose.msra.mxu0 %v1008
        %3038 = vmatprep.subr.mxu0 0.0
        %3039 = vmatpush1.xpose.msra.mxu0 %v1003
        %3040 = vmatprep.subr.mxu0 0.0
        %3041 = vmatpush1.xpose.msra.mxu0 %v998
        %3042 = vmatprep.subr.mxu0 0.0
        %3043 = vmatpush1.xpose.msra.mxu0 %v993
        %3044 = vmatprep.subr.mxu0 0.0
        %3045 = vmatpush1.xpose.msra.mxu0 %v988
        %3046 = vmatprep.subr.mxu0 0.0
        %3047 = vmatpush1.xpose.msra.mxu0 %v983
        %3048 = vmatprep.subr.mxu0 0.0
        %3049 = vmatpush1.xpose.msra.mxu0 %v978
        %3050 = vmatprep.subr.mxu0 0.0
        %3051 = vmatpush1.xpose.msra.mxu0 %v973
        %3052 = vmatprep.subr.mxu0 0.0
        %3053 = vmatpush1.xpose.msra.mxu0 %v968
        %3054 = vmatprep.subr.mxu0 0.0
        %3055 = vmatpush2.xpose.msra.mxu0 %v1123
        %3056 = vmatprep.subr.mxu0 0.0
        %3057 = vmatpush2.xpose.msra.mxu0 %v1118
        %3058 = vmatprep.subr.mxu0 0.0
        %3059 = vmatpush2.xpose.msra.mxu0 %v1113
        %3060 = vmatprep.subr.mxu0 0.0
        %3061 = vmatpush2.xpose.msra.mxu0 %v1108
        %3062 = vmatprep.subr.mxu0 0.0
        %3063 = vmatpush2.xpose.msra.mxu0 %v1103
        %3064 = vmatprep.subr.mxu0 0.0
        %3065 = vmatpush2.xpose.msra.mxu0 %v1098
        %3066 = vmatprep.subr.mxu0 0.0
        %3067 = vmatpush2.xpose.msra.mxu0 %v1093
        %3068 = vmatprep.subr.mxu0 0.0
        %3069 = vmatpush2.xpose.msra.mxu0 %v1088
        %3070 = vmatprep.subr.mxu0 0.0
        %3071 = vmatpush2.xpose.msra.mxu0 %v1083
        %3072 = vmatprep.subr.mxu0 0.0
        %3073 = vmatpush2.xpose.msra.mxu0 %v1078
        %3074 = vmatprep.subr.mxu0 0.0
        %3075 = vmatpush2.xpose.msra.mxu0 %v1073
        %3076 = vmatprep.subr.mxu0 0.0
        %3077 = vmatpush2.xpose.msra.mxu0 %v1068
        %3078 = vmatprep.subr.mxu0 0.0
        %3079 = vmatpush2.xpose.msra.mxu0 %v1063
        %3080 = vmatprep.subr.mxu0 0.0
        %3081 = vmatpush2.xpose.msra.mxu0 %v1058
        %3082 = vmatprep.subr.mxu0 0.0
        %3083 = vmatpush2.xpose.msra.mxu0 %v1053
        %3084 = vmatprep.subr.mxu0 0.0
        %3085 = vmatpush2.xpose.msra.mxu0 %v1048
        %3086 = vmatprep.mubr.f32.mxu0 0.0
        %3087 = vmatmul.mubr.f32.gmra.mxu0 %v293
        %v3088 = vpop.f32.mrf.mxu0
        %v3089 = vadd.f32 %v2982, %v3088
        %v3090 = vpop.f32.mrf.mxu0
        %v3091 = vadd.f32 %v2984, %v3090
        %3092 = vmatprep.mubr.f32.mxu0 0.0
        %3093 = vmatmul.mubr.f32.gmra.mxu0 %v298
        %v3094 = vpop.f32.mrf.mxu0
        %v3095 = vadd.f32 %v2988, %v3094
        %v3096 = vpop.f32.mrf.mxu0
        %v3097 = vadd.f32 %v2990, %v3096
        %3098 = vmatprep.mubr.f32.mxu0 0.0
        %3099 = vmatmul.mubr.f32.gmra.mxu0 %v303
        %v3100 = vpop.f32.mrf.mxu0
        %v3101 = vadd.f32 %v2994, %v3100
        %v3102 = vpop.f32.mrf.mxu0
        %v3103 = vadd.f32 %v2996, %v3102
        %3104 = vmatprep.mubr.f32.mxu0 0.0
        %3105 = vmatmul.mubr.f32.gmra.mxu0 %v308
        %v3106 = vpop.f32.mrf.mxu0
        %v3107 = vadd.f32 %v3000, %v3106
        %v3108 = vpop.f32.mrf.mxu0
        %v3109 = vadd.f32 %v3002, %v3108
        %3110 = vmatprep.mubr.f32.mxu0 0.0
        %3111 = vmatmul.mubr.f32.gmra.mxu0 %v313
        %v3112 = vpop.f32.mrf.mxu0
        %v3113 = vadd.f32 %v3006, %v3112
        %v3114 = vpop.f32.mrf.mxu0
        %v3115 = vadd.f32 %v3008, %v3114
        %3116 = vmatprep.mubr.f32.mxu0 0.0
        %3117 = vmatmul.mubr.f32.gmra.mxu0 %v318
        %v3118 = vpop.f32.mrf.mxu0
        %v3119 = vadd.f32 %v3012, %v3118
        %v3120 = vpop.f32.mrf.mxu0
        %v3121 = vadd.f32 %v3014, %v3120
        %3122 = vmatprep.mubr.f32.mxu0 0.0
        %3123 = vmatmul.mubr.f32.gmra.mxu0 %v323
        %v3124 = vpop.f32.mrf.mxu0
        %v3125 = vadd.f32 %v3018, %v3124
        %v3126 = vpop.f32.mrf.mxu0
        %v3127 = vadd.f32 %v3020, %v3126
        %3128 = vdwg.mxu0
        %3129 = vmatprep.subr.mxu0 %v1200
        %3130 = vmatpush1.xpose.msra.mxu0 %v1199
        %3131 = vmatprep.subr.mxu0 %v1195
        %3132 = vmatpush1.xpose.msra.mxu0 %v1194
        %3133 = vmatprep.subr.mxu0 %v1190
        %3134 = vmatpush1.xpose.msra.mxu0 %v1189
        %3135 = vmatprep.subr.mxu0 %v1185
        %3136 = vmatpush1.xpose.msra.mxu0 %v1184
        %3137 = vmatprep.subr.mxu0 %v1180
        %3138 = vmatpush1.xpose.msra.mxu0 %v1179
        %3139 = vmatprep.subr.mxu0 %v1175
        %3140 = vmatpush1.xpose.msra.mxu0 %v1174
        %3141 = vmatprep.subr.mxu0 %v1170
        %3142 = vmatpush1.xpose.msra.mxu0 %v1169
        %3143 = vmatprep.subr.mxu0 %v1165
        %3144 = vmatpush1.xpose.msra.mxu0 %v1164
        %3145 = vmatprep.subr.mxu0 %v1160
        %3146 = vmatpush1.xpose.msra.mxu0 %v1159
        %3147 = vmatprep.subr.mxu0 %v1155
        %3148 = vmatpush1.xpose.msra.mxu0 %v1154
        %3149 = vmatprep.subr.mxu0 %v1150
        %3150 = vmatpush1.xpose.msra.mxu0 %v1149
        %3151 = vmatprep.subr.mxu0 %v1145
        %3152 = vmatpush1.xpose.msra.mxu0 %v1144
        %3153 = vmatprep.subr.mxu0 %v1140
        %3154 = vmatpush1.xpose.msra.mxu0 %v1139
        %3155 = vmatprep.subr.mxu0 %v1135
        %3156 = vmatpush1.xpose.msra.mxu0 %v1134
        %3157 = vmatprep.subr.mxu0 %v1130
        %3158 = vmatpush1.xpose.msra.mxu0 %v1129
        %3159 = vmatprep.subr.mxu0 %v1125
        %3160 = vmatpush1.xpose.msra.mxu0 %v1124
        %3161 = vmatprep.subr.mxu0 %v1280
        %3162 = vmatpush2.xpose.msra.mxu0 %v1279
        %3163 = vmatprep.subr.mxu0 %v1275
        %3164 = vmatpush2.xpose.msra.mxu0 %v1274
        %3165 = vmatprep.subr.mxu0 %v1270
        %3166 = vmatpush2.xpose.msra.mxu0 %v1269
        %3167 = vmatprep.subr.mxu0 %v1265
        %3168 = vmatpush2.xpose.msra.mxu0 %v1264
        %3169 = vmatprep.subr.mxu0 %v1260
        %3170 = vmatpush2.xpose.msra.mxu0 %v1259
        %3171 = vmatprep.subr.mxu0 %v1255
        %3172 = vmatpush2.xpose.msra.mxu0 %v1254
        %3173 = vmatprep.subr.mxu0 %v1250
        %3174 = vmatpush2.xpose.msra.mxu0 %v1249
        %3175 = vmatprep.subr.mxu0 %v1245
        %3176 = vmatpush2.xpose.msra.mxu0 %v1244
        %3177 = vmatprep.subr.mxu0 %v1240
        %3178 = vmatpush2.xpose.msra.mxu0 %v1239
        %3179 = vmatprep.subr.mxu0 %v1235
        %3180 = vmatpush2.xpose.msra.mxu0 %v1234
        %3181 = vmatprep.subr.mxu0 %v1230
        %3182 = vmatpush2.xpose.msra.mxu0 %v1229
        %3183 = vmatprep.subr.mxu0 %v1225
        %3184 = vmatpush2.xpose.msra.mxu0 %v1224
        %3185 = vmatprep.subr.mxu0 %v1220
        %3186 = vmatpush2.xpose.msra.mxu0 %v1219
        %3187 = vmatprep.subr.mxu0 %v1215
        %3188 = vmatpush2.xpose.msra.mxu0 %v1214
        %3189 = vmatprep.subr.mxu0 %v1210
        %3190 = vmatpush2.xpose.msra.mxu0 %v1209
        %3191 = vmatprep.subr.mxu0 %v1205
        %3192 = vmatpush2.xpose.msra.mxu0 %v1204
        %3193 = vmatprep.mubr.f32.mxu0 %v290
        %3194 = vmatmul.mubr.f32.gmra.mxu0 %v289
        %v3195 = vpop.f32.mrf.mxu0
        %v3196 = vadd.f32 0.0, %v3195
        %v3197 = vpop.f32.mrf.mxu0
        %v3198 = vadd.f32 0.0, %v3197
        %3199 = vmatprep.mubr.f32.mxu0 %v295
        %3200 = vmatmul.mubr.f32.gmra.mxu0 %v294
        %v3201 = vpop.f32.mrf.mxu0
        %v3202 = vadd.f32 0.0, %v3201
        %v3203 = vpop.f32.mrf.mxu0
        %v3204 = vadd.f32 0.0, %v3203
        %3205 = vmatprep.mubr.f32.mxu0 %v300
        %3206 = vmatmul.mubr.f32.gmra.mxu0 %v299
        %v3207 = vpop.f32.mrf.mxu0
        %v3208 = vadd.f32 0.0, %v3207
        %v3209 = vpop.f32.mrf.mxu0
        %v3210 = vadd.f32 0.0, %v3209
        %3211 = vmatprep.mubr.f32.mxu0 %v305
        %3212 = vmatmul.mubr.f32.gmra.mxu0 %v304
        %v3213 = vpop.f32.mrf.mxu0
        %v3214 = vadd.f32 0.0, %v3213
        %v3215 = vpop.f32.mrf.mxu0
        %v3216 = vadd.f32 0.0, %v3215
        %3217 = vmatprep.mubr.f32.mxu0 %v310
        %3218 = vmatmul.mubr.f32.gmra.mxu0 %v309
        %v3219 = vpop.f32.mrf.mxu0
        %v3220 = vadd.f32 0.0, %v3219
        %v3221 = vpop.f32.mrf.mxu0
        %v3222 = vadd.f32 0.0, %v3221
        %3223 = vmatprep.mubr.f32.mxu0 %v315
        %3224 = vmatmul.mubr.f32.gmra.mxu0 %v314
        %v3225 = vpop.f32.mrf.mxu0
        %v3226 = vadd.f32 0.0, %v3225
        %v3227 = vpop.f32.mrf.mxu0
        %v3228 = vadd.f32 0.0, %v3227
        %3229 = vmatprep.mubr.f32.mxu0 %v320
        %3230 = vmatmul.mubr.f32.gmra.mxu0 %v319
        %v3231 = vpop.f32.mrf.mxu0
        %v3232 = vadd.f32 0.0, %v3231
        %v3233 = vpop.f32.mrf.mxu0
        %v3234 = vadd.f32 0.0, %v3233
        %3235 = vdwg.mxu0
        %3236 = vmatprep.subr.mxu0 %v1202
        %3237 = vmatpush1.xpose.msra.mxu0 %v1201
        %3238 = vmatprep.subr.mxu0 %v1197
        %3239 = vmatpush1.xpose.msra.mxu0 %v1196
        %3240 = vmatprep.subr.mxu0 %v1192
        %3241 = vmatpush1.xpose.msra.mxu0 %v1191
        %3242 = vmatprep.subr.mxu0 %v1187
        %3243 = vmatpush1.xpose.msra.mxu0 %v1186
        %3244 = vmatprep.subr.mxu0 %v1182
        %3245 = vmatpush1.xpose.msra.mxu0 %v1181
        %3246 = vmatprep.subr.mxu0 %v1177
        %3247 = vmatpush1.xpose.msra.mxu0 %v1176
        %3248 = vmatprep.subr.mxu0 %v1172
        %3249 = vmatpush1.xpose.msra.mxu0 %v1171
        %3250 = vmatprep.subr.mxu0 %v1167
        %3251 = vmatpush1.xpose.msra.mxu0 %v1166
        %3252 = vmatprep.subr.mxu0 %v1162
        %3253 = vmatpush1.xpose.msra.mxu0 %v1161
        %3254 = vmatprep.subr.mxu0 %v1157
        %3255 = vmatpush1.xpose.msra.mxu0 %v1156
        %3256 = vmatprep.subr.mxu0 %v1152
        %3257 = vmatpush1.xpose.msra.mxu0 %v1151
        %3258 = vmatprep.subr.mxu0 %v1147
        %3259 = vmatpush1.xpose.msra.mxu0 %v1146
        %3260 = vmatprep.subr.mxu0 %v1142
        %3261 = vmatpush1.xpose.msra.mxu0 %v1141
        %3262 = vmatprep.subr.mxu0 %v1137
        %3263 = vmatpush1.xpose.msra.mxu0 %v1136
        %3264 = vmatprep.subr.mxu0 %v1132
        %3265 = vmatpush1.xpose.msra.mxu0 %v1131
        %3266 = vmatprep.subr.mxu0 %v1127
        %3267 = vmatpush1.xpose.msra.mxu0 %v1126
        %3268 = vmatprep.subr.mxu0 %v1282
        %3269 = vmatpush2.xpose.msra.mxu0 %v1281
        %3270 = vmatprep.subr.mxu0 %v1277
        %3271 = vmatpush2.xpose.msra.mxu0 %v1276
        %3272 = vmatprep.subr.mxu0 %v1272
        %3273 = vmatpush2.xpose.msra.mxu0 %v1271
        %3274 = vmatprep.subr.mxu0 %v1267
        %3275 = vmatpush2.xpose.msra.mxu0 %v1266
        %3276 = vmatprep.subr.mxu0 %v1262
        %3277 = vmatpush2.xpose.msra.mxu0 %v1261
        %3278 = vmatprep.subr.mxu0 %v1257
        %3279 = vmatpush2.xpose.msra.mxu0 %v1256
        %3280 = vmatprep.subr.mxu0 %v1252
        %3281 = vmatpush2.xpose.msra.mxu0 %v1251
        %3282 = vmatprep.subr.mxu0 %v1247
        %3283 = vmatpush2.xpose.msra.mxu0 %v1246
        %3284 = vmatprep.subr.mxu0 %v1242
        %3285 = vmatpush2.xpose.msra.mxu0 %v1241
        %3286 = vmatprep.subr.mxu0 %v1237
        %3287 = vmatpush2.xpose.msra.mxu0 %v1236
        %3288 = vmatprep.subr.mxu0 %v1232
        %3289 = vmatpush2.xpose.msra.mxu0 %v1231
        %3290 = vmatprep.subr.mxu0 %v1227
        %3291 = vmatpush2.xpose.msra.mxu0 %v1226
        %3292 = vmatprep.subr.mxu0 %v1222
        %3293 = vmatpush2.xpose.msra.mxu0 %v1221
        %3294 = vmatprep.subr.mxu0 %v1217
        %3295 = vmatpush2.xpose.msra.mxu0 %v1216
        %3296 = vmatprep.subr.mxu0 %v1212
        %3297 = vmatpush2.xpose.msra.mxu0 %v1211
        %3298 = vmatprep.subr.mxu0 %v1207
        %3299 = vmatpush2.xpose.msra.mxu0 %v1206
        %3300 = vmatprep.mubr.f32.mxu0 %v292
        %3301 = vmatmul.mubr.f32.gmra.mxu0 %v291
        %v3302 = vpop.f32.mrf.mxu0
        %v3303 = vadd.f32 %v3196, %v3302
        %v3304 = vpop.f32.mrf.mxu0
        %v3305 = vadd.f32 %v3198, %v3304
        %3306 = vmatprep.mubr.f32.mxu0 %v297
        %3307 = vmatmul.mubr.f32.gmra.mxu0 %v296
        %v3308 = vpop.f32.mrf.mxu0
        %v3309 = vadd.f32 %v3202, %v3308
        %v3310 = vpop.f32.mrf.mxu0
        %v3311 = vadd.f32 %v3204, %v3310
        %3312 = vmatprep.mubr.f32.mxu0 %v302
        %3313 = vmatmul.mubr.f32.gmra.mxu0 %v301
        %v3314 = vpop.f32.mrf.mxu0
        %v3315 = vadd.f32 %v3208, %v3314
        %v3316 = vpop.f32.mrf.mxu0
        %v3317 = vadd.f32 %v3210, %v3316
        %3318 = vmatprep.mubr.f32.mxu0 %v307
        %3319 = vmatmul.mubr.f32.gmra.mxu0 %v306
        %v3320 = vpop.f32.mrf.mxu0
        %v3321 = vadd.f32 %v3214, %v3320
        %v3322 = vpop.f32.mrf.mxu0
        %v3323 = vadd.f32 %v3216, %v3322
        %3324 = vmatprep.mubr.f32.mxu0 %v312
        %3325 = vmatmul.mubr.f32.gmra.mxu0 %v311
        %v3326 = vpop.f32.mrf.mxu0
        %v3327 = vadd.f32 %v3220, %v3326
        %v3328 = vpop.f32.mrf.mxu0
        %v3329 = vadd.f32 %v3222, %v3328
        %3330 = vmatprep.mubr.f32.mxu0 %v317
        %3331 = vmatmul.mubr.f32.gmra.mxu0 %v316
        %v3332 = vpop.f32.mrf.mxu0
        %v3333 = vadd.f32 %v3226, %v3332
        %v3334 = vpop.f32.mrf.mxu0
        %v3335 = vadd.f32 %v3228, %v3334
        %3336 = vmatprep.mubr.f32.mxu0 %v322
        %3337 = vmatmul.mubr.f32.gmra.mxu0 %v321
        %v3338 = vpop.f32.mrf.mxu0
        %v3339 = vadd.f32 %v3232, %v3338
        %v3340 = vpop.f32.mrf.mxu0
        %v3341 = vadd.f32 %v3234, %v3340
        %3342 = vdwg.mxu0
        %3343 = vmatprep.subr.mxu0 0.0
        %3344 = vmatpush1.xpose.msra.mxu0 %v1203
        %3345 = vmatprep.subr.mxu0 0.0
        %3346 = vmatpush1.xpose.msra.mxu0 %v1198
        %3347 = vmatprep.subr.mxu0 0.0
        %3348 = vmatpush1.xpose.msra.mxu0 %v1193
        %3349 = vmatprep.subr.mxu0 0.0
        %3350 = vmatpush1.xpose.msra.mxu0 %v1188
        %3351 = vmatprep.subr.mxu0 0.0
        %3352 = vmatpush1.xpose.msra.mxu0 %v1183
        %3353 = vmatprep.subr.mxu0 0.0
        %3354 = vmatpush1.xpose.msra.mxu0 %v1178
        %3355 = vmatprep.subr.mxu0 0.0
        %3356 = vmatpush1.xpose.msra.mxu0 %v1173
        %3357 = vmatprep.subr.mxu0 0.0
        %3358 = vmatpush1.xpose.msra.mxu0 %v1168
        %3359 = vmatprep.subr.mxu0 0.0
        %3360 = vmatpush1.xpose.msra.mxu0 %v1163
        %3361 = vmatprep.subr.mxu0 0.0
        %3362 = vmatpush1.xpose.msra.mxu0 %v1158
        %3363 = vmatprep.subr.mxu0 0.0
        %3364 = vmatpush1.xpose.msra.mxu0 %v1153
        %3365 = vmatprep.subr.mxu0 0.0
        %3366 = vmatpush1.xpose.msra.mxu0 %v1148
        %3367 = vmatprep.subr.mxu0 0.0
        %3368 = vmatpush1.xpose.msra.mxu0 %v1143
        %3369 = vmatprep.subr.mxu0 0.0
        %3370 = vmatpush1.xpose.msra.mxu0 %v1138
        %3371 = vmatprep.subr.mxu0 0.0
        %3372 = vmatpush1.xpose.msra.mxu0 %v1133
        %3373 = vmatprep.subr.mxu0 0.0
        %3374 = vmatpush1.xpose.msra.mxu0 %v1128
        %3375 = vmatprep.subr.mxu0 0.0
        %3376 = vmatpush2.xpose.msra.mxu0 %v1283
        %3377 = vmatprep.subr.mxu0 0.0
        %3378 = vmatpush2.xpose.msra.mxu0 %v1278
        %3379 = vmatprep.subr.mxu0 0.0
        %3380 = vmatpush2.xpose.msra.mxu0 %v1273
        %3381 = vmatprep.subr.mxu0 0.0
        %3382 = vmatpush2.xpose.msra.mxu0 %v1268
        %3383 = vmatprep.subr.mxu0 0.0
        %3384 = vmatpush2.xpose.msra.mxu0 %v1263
        %3385 = vmatprep.subr.mxu0 0.0
        %3386 = vmatpush2.xpose.msra.mxu0 %v1258
        %3387 = vmatprep.subr.mxu0 0.0
        %3388 = vmatpush2.xpose.msra.mxu0 %v1253
        %3389 = vmatprep.subr.mxu0 0.0
        %3390 = vmatpush2.xpose.msra.mxu0 %v1248
        %3391 = vmatprep.subr.mxu0 0.0
        %3392 = vmatpush2.xpose.msra.mxu0 %v1243
        %3393 = vmatprep.subr.mxu0 0.0
        %3394 = vmatpush2.xpose.msra.mxu0 %v1238
        %3395 = vmatprep.subr.mxu0 0.0
        %3396 = vmatpush2.xpose.msra.mxu0 %v1233
        %3397 = vmatprep.subr.mxu0 0.0
        %3398 = vmatpush2.xpose.msra.mxu0 %v1228
        %3399 = vmatprep.subr.mxu0 0.0
        %3400 = vmatpush2.xpose.msra.mxu0 %v1223
        %3401 = vmatprep.subr.mxu0 0.0
        %3402 = vmatpush2.xpose.msra.mxu0 %v1218
        %3403 = vmatprep.subr.mxu0 0.0
        %3404 = vmatpush2.xpose.msra.mxu0 %v1213
        %3405 = vmatprep.subr.mxu0 0.0
        %3406 = vmatpush2.xpose.msra.mxu0 %v1208
        %3407 = vmatprep.mubr.f32.mxu0 0.0
        %3408 = vmatmul.mubr.f32.gmra.mxu0 %v293
        %v3409 = vpop.f32.mrf.mxu0
        %v3410 = vadd.f32 %v3303, %v3409
        %v3411 = vpop.f32.mrf.mxu0
        %v3412 = vadd.f32 %v3305, %v3411
        %3413 = vmatprep.mubr.f32.mxu0 0.0
        %3414 = vmatmul.mubr.f32.gmra.mxu0 %v298
        %v3415 = vpop.f32.mrf.mxu0
        %v3416 = vadd.f32 %v3309, %v3415
        %v3417 = vpop.f32.mrf.mxu0
        %v3418 = vadd.f32 %v3311, %v3417
        %3419 = vmatprep.mubr.f32.mxu0 0.0
        %3420 = vmatmul.mubr.f32.gmra.mxu0 %v303
        %v3421 = vpop.f32.mrf.mxu0
        %v3422 = vadd.f32 %v3315, %v3421
        %v3423 = vpop.f32.mrf.mxu0
        %v3424 = vadd.f32 %v3317, %v3423
        %3425 = vmatprep.mubr.f32.mxu0 0.0
        %3426 = vmatmul.mubr.f32.gmra.mxu0 %v308
        %v3427 = vpop.f32.mrf.mxu0
        %v3428 = vadd.f32 %v3321, %v3427
        %v3429 = vpop.f32.mrf.mxu0
        %v3430 = vadd.f32 %v3323, %v3429
        %3431 = vmatprep.mubr.f32.mxu0 0.0
        %3432 = vmatmul.mubr.f32.gmra.mxu0 %v313
        %v3433 = vpop.f32.mrf.mxu0
        %v3434 = vadd.f32 %v3327, %v3433
        %v3435 = vpop.f32.mrf.mxu0
        %v3436 = vadd.f32 %v3329, %v3435
        %3437 = vmatprep.mubr.f32.mxu0 0.0
        %3438 = vmatmul.mubr.f32.gmra.mxu0 %v318
        %v3439 = vpop.f32.mrf.mxu0
        %v3440 = vadd.f32 %v3333, %v3439
        %v3441 = vpop.f32.mrf.mxu0
        %v3442 = vadd.f32 %v3335, %v3441
        %3443 = vmatprep.mubr.f32.mxu0 0.0
        %3444 = vmatmul.mubr.f32.gmra.mxu0 %v323
        %v3445 = vpop.f32.mrf.mxu0
        %v3446 = vadd.f32 %v3339, %v3445
        %v3447 = vpop.f32.mrf.mxu0
        %v3448 = vadd.f32 %v3341, %v3447
        %3449 = vdwg.mxu0
        %3450 = vmatprep.subr.mxu0 %v1360
        %3451 = vmatpush1.xpose.msra.mxu0 %v1359
        %3452 = vmatprep.subr.mxu0 %v1355
        %3453 = vmatpush1.xpose.msra.mxu0 %v1354
        %3454 = vmatprep.subr.mxu0 %v1350
        %3455 = vmatpush1.xpose.msra.mxu0 %v1349
        %3456 = vmatprep.subr.mxu0 %v1345
        %3457 = vmatpush1.xpose.msra.mxu0 %v1344
        %3458 = vmatprep.subr.mxu0 %v1340
        %3459 = vmatpush1.xpose.msra.mxu0 %v1339
        %3460 = vmatprep.subr.mxu0 %v1335
        %3461 = vmatpush1.xpose.msra.mxu0 %v1334
        %3462 = vmatprep.subr.mxu0 %v1330
        %3463 = vmatpush1.xpose.msra.mxu0 %v1329
        %3464 = vmatprep.subr.mxu0 %v1325
        %3465 = vmatpush1.xpose.msra.mxu0 %v1324
        %3466 = vmatprep.subr.mxu0 %v1320
        %3467 = vmatpush1.xpose.msra.mxu0 %v1319
        %3468 = vmatprep.subr.mxu0 %v1315
        %3469 = vmatpush1.xpose.msra.mxu0 %v1314
        %3470 = vmatprep.subr.mxu0 %v1310
        %3471 = vmatpush1.xpose.msra.mxu0 %v1309
        %3472 = vmatprep.subr.mxu0 %v1305
        %3473 = vmatpush1.xpose.msra.mxu0 %v1304
        %3474 = vmatprep.subr.mxu0 %v1300
        %3475 = vmatpush1.xpose.msra.mxu0 %v1299
        %3476 = vmatprep.subr.mxu0 %v1295
        %3477 = vmatpush1.xpose.msra.mxu0 %v1294
        %3478 = vmatprep.subr.mxu0 %v1290
        %3479 = vmatpush1.xpose.msra.mxu0 %v1289
        %3480 = vmatprep.subr.mxu0 %v1285
        %3481 = vmatpush1.xpose.msra.mxu0 %v1284
        %3482 = vmatprep.subr.mxu0 %v1440
        %3483 = vmatpush2.xpose.msra.mxu0 %v1439
        %3484 = vmatprep.subr.mxu0 %v1435
        %3485 = vmatpush2.xpose.msra.mxu0 %v1434
        %3486 = vmatprep.subr.mxu0 %v1430
        %3487 = vmatpush2.xpose.msra.mxu0 %v1429
        %3488 = vmatprep.subr.mxu0 %v1425
        %3489 = vmatpush2.xpose.msra.mxu0 %v1424
        %3490 = vmatprep.subr.mxu0 %v1420
        %3491 = vmatpush2.xpose.msra.mxu0 %v1419
        %3492 = vmatprep.subr.mxu0 %v1415
        %3493 = vmatpush2.xpose.msra.mxu0 %v1414
        %3494 = vmatprep.subr.mxu0 %v1410
        %3495 = vmatpush2.xpose.msra.mxu0 %v1409
        %3496 = vmatprep.subr.mxu0 %v1405
        %3497 = vmatpush2.xpose.msra.mxu0 %v1404
        %3498 = vmatprep.subr.mxu0 %v1400
        %3499 = vmatpush2.xpose.msra.mxu0 %v1399
        %3500 = vmatprep.subr.mxu0 %v1395
        %3501 = vmatpush2.xpose.msra.mxu0 %v1394
        %3502 = vmatprep.subr.mxu0 %v1390
        %3503 = vmatpush2.xpose.msra.mxu0 %v1389
        %3504 = vmatprep.subr.mxu0 %v1385
        %3505 = vmatpush2.xpose.msra.mxu0 %v1384
        %3506 = vmatprep.subr.mxu0 %v1380
        %3507 = vmatpush2.xpose.msra.mxu0 %v1379
        %3508 = vmatprep.subr.mxu0 %v1375
        %3509 = vmatpush2.xpose.msra.mxu0 %v1374
        %3510 = vmatprep.subr.mxu0 %v1370
        %3511 = vmatpush2.xpose.msra.mxu0 %v1369
        %3512 = vmatprep.subr.mxu0 %v1365
        %3513 = vmatpush2.xpose.msra.mxu0 %v1364
        %3514 = vmatprep.mubr.f32.mxu0 %v290
        %3515 = vmatmul.mubr.f32.gmra.mxu0 %v289
        %v3516 = vpop.f32.mrf.mxu0
        %v3517 = vadd.f32 0.0, %v3516
        %v3518 = vpop.f32.mrf.mxu0
        %v3519 = vadd.f32 0.0, %v3518
        %3520 = vmatprep.mubr.f32.mxu0 %v295
        %3521 = vmatmul.mubr.f32.gmra.mxu0 %v294
        %v3522 = vpop.f32.mrf.mxu0
        %v3523 = vadd.f32 0.0, %v3522
        %v3524 = vpop.f32.mrf.mxu0
        %v3525 = vadd.f32 0.0, %v3524
        %3526 = vmatprep.mubr.f32.mxu0 %v300
        %3527 = vmatmul.mubr.f32.gmra.mxu0 %v299
        %v3528 = vpop.f32.mrf.mxu0
        %v3529 = vadd.f32 0.0, %v3528
        %v3530 = vpop.f32.mrf.mxu0
        %v3531 = vadd.f32 0.0, %v3530
        %3532 = vmatprep.mubr.f32.mxu0 %v305
        %3533 = vmatmul.mubr.f32.gmra.mxu0 %v304
        %v3534 = vpop.f32.mrf.mxu0
        %v3535 = vadd.f32 0.0, %v3534
        %v3536 = vpop.f32.mrf.mxu0
        %v3537 = vadd.f32 0.0, %v3536
        %3538 = vmatprep.mubr.f32.mxu0 %v310
        %3539 = vmatmul.mubr.f32.gmra.mxu0 %v309
        %v3540 = vpop.f32.mrf.mxu0
        %v3541 = vadd.f32 0.0, %v3540
        %v3542 = vpop.f32.mrf.mxu0
        %v3543 = vadd.f32 0.0, %v3542
        %3544 = vmatprep.mubr.f32.mxu0 %v315
        %3545 = vmatmul.mubr.f32.gmra.mxu0 %v314
        %v3546 = vpop.f32.mrf.mxu0
        %v3547 = vadd.f32 0.0, %v3546
        %v3548 = vpop.f32.mrf.mxu0
        %v3549 = vadd.f32 0.0, %v3548
        %3550 = vmatprep.mubr.f32.mxu0 %v320
        %3551 = vmatmul.mubr.f32.gmra.mxu0 %v319
        %v3552 = vpop.f32.mrf.mxu0
        %v3553 = vadd.f32 0.0, %v3552
        %v3554 = vpop.f32.mrf.mxu0
        %v3555 = vadd.f32 0.0, %v3554
        %3556 = vdwg.mxu0
        %3557 = vmatprep.subr.mxu0 %v1362
        %3558 = vmatpush1.xpose.msra.mxu0 %v1361
        %3559 = vmatprep.subr.mxu0 %v1357
        %3560 = vmatpush1.xpose.msra.mxu0 %v1356
        %3561 = vmatprep.subr.mxu0 %v1352
        %3562 = vmatpush1.xpose.msra.mxu0 %v1351
        %3563 = vmatprep.subr.mxu0 %v1347
        %3564 = vmatpush1.xpose.msra.mxu0 %v1346
        %3565 = vmatprep.subr.mxu0 %v1342
        %3566 = vmatpush1.xpose.msra.mxu0 %v1341
        %3567 = vmatprep.subr.mxu0 %v1337
        %3568 = vmatpush1.xpose.msra.mxu0 %v1336
        %3569 = vmatprep.subr.mxu0 %v1332
        %3570 = vmatpush1.xpose.msra.mxu0 %v1331
        %3571 = vmatprep.subr.mxu0 %v1327
        %3572 = vmatpush1.xpose.msra.mxu0 %v1326
        %3573 = vmatprep.subr.mxu0 %v1322
        %3574 = vmatpush1.xpose.msra.mxu0 %v1321
        %3575 = vmatprep.subr.mxu0 %v1317
        %3576 = vmatpush1.xpose.msra.mxu0 %v1316
        %3577 = vmatprep.subr.mxu0 %v1312
        %3578 = vmatpush1.xpose.msra.mxu0 %v1311
        %3579 = vmatprep.subr.mxu0 %v1307
        %3580 = vmatpush1.xpose.msra.mxu0 %v1306
        %3581 = vmatprep.subr.mxu0 %v1302
        %3582 = vmatpush1.xpose.msra.mxu0 %v1301
        %3583 = vmatprep.subr.mxu0 %v1297
        %3584 = vmatpush1.xpose.msra.mxu0 %v1296
        %3585 = vmatprep.subr.mxu0 %v1292
        %3586 = vmatpush1.xpose.msra.mxu0 %v1291
        %3587 = vmatprep.subr.mxu0 %v1287
        %3588 = vmatpush1.xpose.msra.mxu0 %v1286
        %3589 = vmatprep.subr.mxu0 %v1442
        %3590 = vmatpush2.xpose.msra.mxu0 %v1441
        %3591 = vmatprep.subr.mxu0 %v1437
        %3592 = vmatpush2.xpose.msra.mxu0 %v1436
        %3593 = vmatprep.subr.mxu0 %v1432
        %3594 = vmatpush2.xpose.msra.mxu0 %v1431
        %3595 = vmatprep.subr.mxu0 %v1427
        %3596 = vmatpush2.xpose.msra.mxu0 %v1426
        %3597 = vmatprep.subr.mxu0 %v1422
        %3598 = vmatpush2.xpose.msra.mxu0 %v1421
        %3599 = vmatprep.subr.mxu0 %v1417
        %3600 = vmatpush2.xpose.msra.mxu0 %v1416
        %3601 = vmatprep.subr.mxu0 %v1412
        %3602 = vmatpush2.xpose.msra.mxu0 %v1411
        %3603 = vmatprep.subr.mxu0 %v1407
        %3604 = vmatpush2.xpose.msra.mxu0 %v1406
        %3605 = vmatprep.subr.mxu0 %v1402
        %3606 = vmatpush2.xpose.msra.mxu0 %v1401
        %3607 = vmatprep.subr.mxu0 %v1397
        %3608 = vmatpush2.xpose.msra.mxu0 %v1396
        %3609 = vmatprep.subr.mxu0 %v1392
        %3610 = vmatpush2.xpose.msra.mxu0 %v1391
        %3611 = vmatprep.subr.mxu0 %v1387
        %3612 = vmatpush2.xpose.msra.mxu0 %v1386
        %3613 = vmatprep.subr.mxu0 %v1382
        %3614 = vmatpush2.xpose.msra.mxu0 %v1381
        %3615 = vmatprep.subr.mxu0 %v1377
        %3616 = vmatpush2.xpose.msra.mxu0 %v1376
        %3617 = vmatprep.subr.mxu0 %v1372
        %3618 = vmatpush2.xpose.msra.mxu0 %v1371
        %3619 = vmatprep.subr.mxu0 %v1367
        %3620 = vmatpush2.xpose.msra.mxu0 %v1366
        %3621 = vmatprep.mubr.f32.mxu0 %v292
        %3622 = vmatmul.mubr.f32.gmra.mxu0 %v291
        %v3623 = vpop.f32.mrf.mxu0
        %v3624 = vadd.f32 %v3517, %v3623
        %v3625 = vpop.f32.mrf.mxu0
        %v3626 = vadd.f32 %v3519, %v3625
        %3627 = vmatprep.mubr.f32.mxu0 %v297
        %3628 = vmatmul.mubr.f32.gmra.mxu0 %v296
        %v3629 = vpop.f32.mrf.mxu0
        %v3630 = vadd.f32 %v3523, %v3629
        %v3631 = vpop.f32.mrf.mxu0
        %v3632 = vadd.f32 %v3525, %v3631
        %3633 = vmatprep.mubr.f32.mxu0 %v302
        %3634 = vmatmul.mubr.f32.gmra.mxu0 %v301
        %v3635 = vpop.f32.mrf.mxu0
        %v3636 = vadd.f32 %v3529, %v3635
        %v3637 = vpop.f32.mrf.mxu0
        %v3638 = vadd.f32 %v3531, %v3637
        %3639 = vmatprep.mubr.f32.mxu0 %v307
        %3640 = vmatmul.mubr.f32.gmra.mxu0 %v306
        %v3641 = vpop.f32.mrf.mxu0
        %v3642 = vadd.f32 %v3535, %v3641
        %v3643 = vpop.f32.mrf.mxu0
        %v3644 = vadd.f32 %v3537, %v3643
        %3645 = vmatprep.mubr.f32.mxu0 %v312
        %3646 = vmatmul.mubr.f32.gmra.mxu0 %v311
        %v3647 = vpop.f32.mrf.mxu0
        %v3648 = vadd.f32 %v3541, %v3647
        %v3649 = vpop.f32.mrf.mxu0
        %v3650 = vadd.f32 %v3543, %v3649
        %3651 = vmatprep.mubr.f32.mxu0 %v317
        %3652 = vmatmul.mubr.f32.gmra.mxu0 %v316
        %v3653 = vpop.f32.mrf.mxu0
        %v3654 = vadd.f32 %v3547, %v3653
        %v3655 = vpop.f32.mrf.mxu0
        %v3656 = vadd.f32 %v3549, %v3655
        %3657 = vmatprep.mubr.f32.mxu0 %v322
        %3658 = vmatmul.mubr.f32.gmra.mxu0 %v321
        %v3659 = vpop.f32.mrf.mxu0
        %v3660 = vadd.f32 %v3553, %v3659
        %v3661 = vpop.f32.mrf.mxu0
        %v3662 = vadd.f32 %v3555, %v3661
        %3663 = vdwg.mxu0
        %3664 = vmatprep.subr.mxu0 0.0
        %3665 = vmatpush1.xpose.msra.mxu0 %v1363
        %3666 = vmatprep.subr.mxu0 0.0
        %3667 = vmatpush1.xpose.msra.mxu0 %v1358
        %3668 = vmatprep.subr.mxu0 0.0
        %3669 = vmatpush1.xpose.msra.mxu0 %v1353
        %3670 = vmatprep.subr.mxu0 0.0
        %3671 = vmatpush1.xpose.msra.mxu0 %v1348
        %3672 = vmatprep.subr.mxu0 0.0
        %3673 = vmatpush1.xpose.msra.mxu0 %v1343
        %3674 = vmatprep.subr.mxu0 0.0
        %3675 = vmatpush1.xpose.msra.mxu0 %v1338
        %3676 = vmatprep.subr.mxu0 0.0
        %3677 = vmatpush1.xpose.msra.mxu0 %v1333
        %3678 = vmatprep.subr.mxu0 0.0
        %3679 = vmatpush1.xpose.msra.mxu0 %v1328
        %3680 = vmatprep.subr.mxu0 0.0
        %3681 = vmatpush1.xpose.msra.mxu0 %v1323
        %3682 = vmatprep.subr.mxu0 0.0
        %3683 = vmatpush1.xpose.msra.mxu0 %v1318
        %3684 = vmatprep.subr.mxu0 0.0
        %3685 = vmatpush1.xpose.msra.mxu0 %v1313
        %3686 = vmatprep.subr.mxu0 0.0
        %3687 = vmatpush1.xpose.msra.mxu0 %v1308
        %3688 = vmatprep.subr.mxu0 0.0
        %3689 = vmatpush1.xpose.msra.mxu0 %v1303
        %3690 = vmatprep.subr.mxu0 0.0
        %3691 = vmatpush1.xpose.msra.mxu0 %v1298
        %3692 = vmatprep.subr.mxu0 0.0
        %3693 = vmatpush1.xpose.msra.mxu0 %v1293
        %3694 = vmatprep.subr.mxu0 0.0
        %3695 = vmatpush1.xpose.msra.mxu0 %v1288
        %3696 = vmatprep.subr.mxu0 0.0
        %3697 = vmatpush2.xpose.msra.mxu0 %v1443
        %3698 = vmatprep.subr.mxu0 0.0
        %3699 = vmatpush2.xpose.msra.mxu0 %v1438
        %3700 = vmatprep.subr.mxu0 0.0
        %3701 = vmatpush2.xpose.msra.mxu0 %v1433
        %3702 = vmatprep.subr.mxu0 0.0
        %3703 = vmatpush2.xpose.msra.mxu0 %v1428
        %3704 = vmatprep.subr.mxu0 0.0
        %3705 = vmatpush2.xpose.msra.mxu0 %v1423
        %3706 = vmatprep.subr.mxu0 0.0
        %3707 = vmatpush2.xpose.msra.mxu0 %v1418
        %3708 = vmatprep.subr.mxu0 0.0
        %3709 = vmatpush2.xpose.msra.mxu0 %v1413
        %3710 = vmatprep.subr.mxu0 0.0
        %3711 = vmatpush2.xpose.msra.mxu0 %v1408
        %3712 = vmatprep.subr.mxu0 0.0
        %3713 = vmatpush2.xpose.msra.mxu0 %v1403
        %3714 = vmatprep.subr.mxu0 0.0
        %3715 = vmatpush2.xpose.msra.mxu0 %v1398
        %3716 = vmatprep.subr.mxu0 0.0
        %3717 = vmatpush2.xpose.msra.mxu0 %v1393
        %3718 = vmatprep.subr.mxu0 0.0
        %3719 = vmatpush2.xpose.msra.mxu0 %v1388
        %3720 = vmatprep.subr.mxu0 0.0
        %3721 = vmatpush2.xpose.msra.mxu0 %v1383
        %3722 = vmatprep.subr.mxu0 0.0
        %3723 = vmatpush2.xpose.msra.mxu0 %v1378
        %3724 = vmatprep.subr.mxu0 0.0
        %3725 = vmatpush2.xpose.msra.mxu0 %v1373
        %3726 = vmatprep.subr.mxu0 0.0
        %3727 = vmatpush2.xpose.msra.mxu0 %v1368
        %3728 = vmatprep.mubr.f32.mxu0 0.0
        %3729 = vmatmul.mubr.f32.gmra.mxu0 %v293
        %v3730 = vpop.f32.mrf.mxu0
        %v3731 = vadd.f32 %v3624, %v3730
        %v3732 = vpop.f32.mrf.mxu0
        %v3733 = vadd.f32 %v3626, %v3732
        %3734 = vmatprep.mubr.f32.mxu0 0.0
        %3735 = vmatmul.mubr.f32.gmra.mxu0 %v298
        %v3736 = vpop.f32.mrf.mxu0
        %v3737 = vadd.f32 %v3630, %v3736
        %v3738 = vpop.f32.mrf.mxu0
        %v3739 = vadd.f32 %v3632, %v3738
        %3740 = vmatprep.mubr.f32.mxu0 0.0
        %3741 = vmatmul.mubr.f32.gmra.mxu0 %v303
        %v3742 = vpop.f32.mrf.mxu0
        %v3743 = vadd.f32 %v3636, %v3742
        %v3744 = vpop.f32.mrf.mxu0
        %v3745 = vadd.f32 %v3638, %v3744
        %3746 = vmatprep.mubr.f32.mxu0 0.0
        %3747 = vmatmul.mubr.f32.gmra.mxu0 %v308
        %v3748 = vpop.f32.mrf.mxu0
        %v3749 = vadd.f32 %v3642, %v3748
        %v3750 = vpop.f32.mrf.mxu0
        %v3751 = vadd.f32 %v3644, %v3750
        %3752 = vmatprep.mubr.f32.mxu0 0.0
        %3753 = vmatmul.mubr.f32.gmra.mxu0 %v313
        %v3754 = vpop.f32.mrf.mxu0
        %v3755 = vadd.f32 %v3648, %v3754
        %v3756 = vpop.f32.mrf.mxu0
        %v3757 = vadd.f32 %v3650, %v3756
        %3758 = vmatprep.mubr.f32.mxu0 0.0
        %3759 = vmatmul.mubr.f32.gmra.mxu0 %v318
        %v3760 = vpop.f32.mrf.mxu0
        %v3761 = vadd.f32 %v3654, %v3760
        %v3762 = vpop.f32.mrf.mxu0
        %v3763 = vadd.f32 %v3656, %v3762
        %3764 = vmatprep.mubr.f32.mxu0 0.0
        %3765 = vmatmul.mubr.f32.gmra.mxu0 %v323
        %v3766 = vpop.f32.mrf.mxu0
        %v3767 = vadd.f32 %v3660, %v3766
        %v3768 = vpop.f32.mrf.mxu0
        %v3769 = vadd.f32 %v3662, %v3768
        %3770 = vdwg.mxu0
        %3771 = vmatprep.subr.mxu0 %v1520
        %3772 = vmatpush1.xpose.msra.mxu0 %v1519
        %3773 = vmatprep.subr.mxu0 %v1515
        %3774 = vmatpush1.xpose.msra.mxu0 %v1514
        %3775 = vmatprep.subr.mxu0 %v1510
        %3776 = vmatpush1.xpose.msra.mxu0 %v1509
        %3777 = vmatprep.subr.mxu0 %v1505
        %3778 = vmatpush1.xpose.msra.mxu0 %v1504
        %3779 = vmatprep.subr.mxu0 %v1500
        %3780 = vmatpush1.xpose.msra.mxu0 %v1499
        %3781 = vmatprep.subr.mxu0 %v1495
        %3782 = vmatpush1.xpose.msra.mxu0 %v1494
        %3783 = vmatprep.subr.mxu0 %v1490
        %3784 = vmatpush1.xpose.msra.mxu0 %v1489
        %3785 = vmatprep.subr.mxu0 %v1485
        %3786 = vmatpush1.xpose.msra.mxu0 %v1484
        %3787 = vmatprep.subr.mxu0 %v1480
        %3788 = vmatpush1.xpose.msra.mxu0 %v1479
        %3789 = vmatprep.subr.mxu0 %v1475
        %3790 = vmatpush1.xpose.msra.mxu0 %v1474
        %3791 = vmatprep.subr.mxu0 %v1470
        %3792 = vmatpush1.xpose.msra.mxu0 %v1469
        %3793 = vmatprep.subr.mxu0 %v1465
        %3794 = vmatpush1.xpose.msra.mxu0 %v1464
        %3795 = vmatprep.subr.mxu0 %v1460
        %3796 = vmatpush1.xpose.msra.mxu0 %v1459
        %3797 = vmatprep.subr.mxu0 %v1455
        %3798 = vmatpush1.xpose.msra.mxu0 %v1454
        %3799 = vmatprep.subr.mxu0 %v1450
        %3800 = vmatpush1.xpose.msra.mxu0 %v1449
        %3801 = vmatprep.subr.mxu0 %v1445
        %3802 = vmatpush1.xpose.msra.mxu0 %v1444
        %3803 = vmatprep.subr.mxu0 0.0
        %3804 = vmatpush2.xpose.msra.mxu0 0.0
        %3805 = vmatprep.subr.mxu0 0.0
        %3806 = vmatpush2.xpose.msra.mxu0 0.0
        %3807 = vmatprep.subr.mxu0 0.0
        %3808 = vmatpush2.xpose.msra.mxu0 0.0
        %3809 = vmatprep.subr.mxu0 0.0
        %3810 = vmatpush2.xpose.msra.mxu0 0.0
        %3811 = vmatprep.subr.mxu0 0.0
        %3812 = vmatpush2.xpose.msra.mxu0 0.0
        %3813 = vmatprep.subr.mxu0 0.0
        %3814 = vmatpush2.xpose.msra.mxu0 0.0
        %3815 = vmatprep.subr.mxu0 0.0
        %3816 = vmatpush2.xpose.msra.mxu0 0.0
        %3817 = vmatprep.subr.mxu0 0.0
        %3818 = vmatpush2.xpose.msra.mxu0 0.0
        %3819 = vmatprep.subr.mxu0 0.0
        %3820 = vmatpush2.xpose.msra.mxu0 0.0
        %3821 = vmatprep.subr.mxu0 0.0
        %3822 = vmatpush2.xpose.msra.mxu0 0.0
        %3823 = vmatprep.subr.mxu0 0.0
        %3824 = vmatpush2.xpose.msra.mxu0 0.0
        %3825 = vmatprep.subr.mxu0 0.0
        %3826 = vmatpush2.xpose.msra.mxu0 0.0
        %3827 = vmatprep.subr.mxu0 0.0
        %3828 = vmatpush2.xpose.msra.mxu0 0.0
        %3829 = vmatprep.subr.mxu0 0.0
        %3830 = vmatpush2.xpose.msra.mxu0 0.0
        %3831 = vmatprep.subr.mxu0 0.0
        %3832 = vmatpush2.xpose.msra.mxu0 0.0
        %3833 = vmatprep.subr.mxu0 0.0
        %3834 = vmatpush2.xpose.msra.mxu0 0.0
        %3835 = vmatprep.mubr.f32.mxu0 %v290
        %3836 = vmatmul.mubr.f32.gmra.mxu0 %v289
        %v3837 = vpop.f32.mrf.mxu0
        %v3838 = vadd.f32 0.0, %v3837
        %v3839 = vpop.f32.mrf.mxu0
        %3840 = vmatprep.mubr.f32.mxu0 %v295
        %3841 = vmatmul.mubr.f32.gmra.mxu0 %v294
        %v3842 = vpop.f32.mrf.mxu0
        %v3843 = vadd.f32 0.0, %v3842
        %v3844 = vpop.f32.mrf.mxu0
        %3845 = vmatprep.mubr.f32.mxu0 %v300
        %3846 = vmatmul.mubr.f32.gmra.mxu0 %v299
        %v3847 = vpop.f32.mrf.mxu0
        %v3848 = vadd.f32 0.0, %v3847
        %v3849 = vpop.f32.mrf.mxu0
        %3850 = vmatprep.mubr.f32.mxu0 %v305
        %3851 = vmatmul.mubr.f32.gmra.mxu0 %v304
        %v3852 = vpop.f32.mrf.mxu0
        %v3853 = vadd.f32 0.0, %v3852
        %v3854 = vpop.f32.mrf.mxu0
        %3855 = vmatprep.mubr.f32.mxu0 %v310
        %3856 = vmatmul.mubr.f32.gmra.mxu0 %v309
        %v3857 = vpop.f32.mrf.mxu0
        %v3858 = vadd.f32 0.0, %v3857
        %v3859 = vpop.f32.mrf.mxu0
        %3860 = vmatprep.mubr.f32.mxu0 %v315
        %3861 = vmatmul.mubr.f32.gmra.mxu0 %v314
        %v3862 = vpop.f32.mrf.mxu0
        %v3863 = vadd.f32 0.0, %v3862
        %v3864 = vpop.f32.mrf.mxu0
        %3865 = vmatprep.mubr.f32.mxu0 %v320
        %3866 = vmatmul.mubr.f32.gmra.mxu0 %v319
        %v3867 = vpop.f32.mrf.mxu0
        %v3868 = vadd.f32 0.0, %v3867
        %v3869 = vpop.f32.mrf.mxu0
        %3870 = vdwg.mxu0
        %3871 = vmatprep.subr.mxu0 %v1522
        %3872 = vmatpush1.xpose.msra.mxu0 %v1521
        %3873 = vmatprep.subr.mxu0 %v1517
        %3874 = vmatpush1.xpose.msra.mxu0 %v1516
        %3875 = vmatprep.subr.mxu0 %v1512
        %3876 = vmatpush1.xpose.msra.mxu0 %v1511
        %3877 = vmatprep.subr.mxu0 %v1507
        %3878 = vmatpush1.xpose.msra.mxu0 %v1506
        %3879 = vmatprep.subr.mxu0 %v1502
        %3880 = vmatpush1.xpose.msra.mxu0 %v1501
        %3881 = vmatprep.subr.mxu0 %v1497
        %3882 = vmatpush1.xpose.msra.mxu0 %v1496
        %3883 = vmatprep.subr.mxu0 %v1492
        %3884 = vmatpush1.xpose.msra.mxu0 %v1491
        %3885 = vmatprep.subr.mxu0 %v1487
        %3886 = vmatpush1.xpose.msra.mxu0 %v1486
        %3887 = vmatprep.subr.mxu0 %v1482
        %3888 = vmatpush1.xpose.msra.mxu0 %v1481
        %3889 = vmatprep.subr.mxu0 %v1477
        %3890 = vmatpush1.xpose.msra.mxu0 %v1476
        %3891 = vmatprep.subr.mxu0 %v1472
        %3892 = vmatpush1.xpose.msra.mxu0 %v1471
        %3893 = vmatprep.subr.mxu0 %v1467
        %3894 = vmatpush1.xpose.msra.mxu0 %v1466
        %3895 = vmatprep.subr.mxu0 %v1462
        %3896 = vmatpush1.xpose.msra.mxu0 %v1461
        %3897 = vmatprep.subr.mxu0 %v1457
        %3898 = vmatpush1.xpose.msra.mxu0 %v1456
        %3899 = vmatprep.subr.mxu0 %v1452
        %3900 = vmatpush1.xpose.msra.mxu0 %v1451
        %3901 = vmatprep.subr.mxu0 %v1447
        %3902 = vmatpush1.xpose.msra.mxu0 %v1446
        %3903 = vmatprep.subr.mxu0 0.0
        %3904 = vmatpush2.xpose.msra.mxu0 0.0
        %3905 = vmatprep.subr.mxu0 0.0
        %3906 = vmatpush2.xpose.msra.mxu0 0.0
        %3907 = vmatprep.subr.mxu0 0.0
        %3908 = vmatpush2.xpose.msra.mxu0 0.0
        %3909 = vmatprep.subr.mxu0 0.0
        %3910 = vmatpush2.xpose.msra.mxu0 0.0
        %3911 = vmatprep.subr.mxu0 0.0
        %3912 = vmatpush2.xpose.msra.mxu0 0.0
        %3913 = vmatprep.subr.mxu0 0.0
        %3914 = vmatpush2.xpose.msra.mxu0 0.0
        %3915 = vmatprep.subr.mxu0 0.0
        %3916 = vmatpush2.xpose.msra.mxu0 0.0
        %3917 = vmatprep.subr.mxu0 0.0
        %3918 = vmatpush2.xpose.msra.mxu0 0.0
        %3919 = vmatprep.subr.mxu0 0.0
        %3920 = vmatpush2.xpose.msra.mxu0 0.0
        %3921 = vmatprep.subr.mxu0 0.0
        %3922 = vmatpush2.xpose.msra.mxu0 0.0
        %3923 = vmatprep.subr.mxu0 0.0
        %3924 = vmatpush2.xpose.msra.mxu0 0.0
        %3925 = vmatprep.subr.mxu0 0.0
        %3926 = vmatpush2.xpose.msra.mxu0 0.0
        %3927 = vmatprep.subr.mxu0 0.0
        %3928 = vmatpush2.xpose.msra.mxu0 0.0
        %3929 = vmatprep.subr.mxu0 0.0
        %3930 = vmatpush2.xpose.msra.mxu0 0.0
        %3931 = vmatprep.subr.mxu0 0.0
        %3932 = vmatpush2.xpose.msra.mxu0 0.0
        %3933 = vmatprep.subr.mxu0 0.0
        %3934 = vmatpush2.xpose.msra.mxu0 0.0
        %3935 = vmatprep.mubr.f32.mxu0 %v292
        %3936 = vmatmul.mubr.f32.gmra.mxu0 %v291
        %v3937 = vpop.f32.mrf.mxu0
        %v3938 = vadd.f32 %v3838, %v3937
        %v3939 = vpop.f32.mrf.mxu0
        %3940 = vmatprep.mubr.f32.mxu0 %v297
        %3941 = vmatmul.mubr.f32.gmra.mxu0 %v296
        %v3942 = vpop.f32.mrf.mxu0
        %v3943 = vadd.f32 %v3843, %v3942
        %v3944 = vpop.f32.mrf.mxu0
        %3945 = vmatprep.mubr.f32.mxu0 %v302
        %3946 = vmatmul.mubr.f32.gmra.mxu0 %v301
        %v3947 = vpop.f32.mrf.mxu0
        %v3948 = vadd.f32 %v3848, %v3947
        %v3949 = vpop.f32.mrf.mxu0
        %3950 = vmatprep.mubr.f32.mxu0 %v307
        %3951 = vmatmul.mubr.f32.gmra.mxu0 %v306
        %v3952 = vpop.f32.mrf.mxu0
        %v3953 = vadd.f32 %v3853, %v3952
        %v3954 = vpop.f32.mrf.mxu0
        %3955 = vmatprep.mubr.f32.mxu0 %v312
        %3956 = vmatmul.mubr.f32.gmra.mxu0 %v311
        %v3957 = vpop.f32.mrf.mxu0
        %v3958 = vadd.f32 %v3858, %v3957
        %v3959 = vpop.f32.mrf.mxu0
        %3960 = vmatprep.mubr.f32.mxu0 %v317
        %3961 = vmatmul.mubr.f32.gmra.mxu0 %v316
        %v3962 = vpop.f32.mrf.mxu0
        %v3963 = vadd.f32 %v3863, %v3962
        %v3964 = vpop.f32.mrf.mxu0
        %3965 = vmatprep.mubr.f32.mxu0 %v322
        %3966 = vmatmul.mubr.f32.gmra.mxu0 %v321
        %v3967 = vpop.f32.mrf.mxu0
        %v3968 = vadd.f32 %v3868, %v3967
        %v3969 = vpop.f32.mrf.mxu0
        %3970 = vdwg.mxu0
        %3971 = vmatprep.subr.mxu0 0.0
        %3972 = vmatpush1.xpose.msra.mxu0 %v1523
        %3973 = vmatprep.subr.mxu0 0.0
        %3974 = vmatpush1.xpose.msra.mxu0 %v1518
        %3975 = vmatprep.subr.mxu0 0.0
        %3976 = vmatpush1.xpose.msra.mxu0 %v1513
        %3977 = vmatprep.subr.mxu0 0.0
        %3978 = vmatpush1.xpose.msra.mxu0 %v1508
        %3979 = vmatprep.subr.mxu0 0.0
        %3980 = vmatpush1.xpose.msra.mxu0 %v1503
        %3981 = vmatprep.subr.mxu0 0.0
        %3982 = vmatpush1.xpose.msra.mxu0 %v1498
        %3983 = vmatprep.subr.mxu0 0.0
        %3984 = vmatpush1.xpose.msra.mxu0 %v1493
        %3985 = vmatprep.subr.mxu0 0.0
        %3986 = vmatpush1.xpose.msra.mxu0 %v1488
        %3987 = vmatprep.subr.mxu0 0.0
        %3988 = vmatpush1.xpose.msra.mxu0 %v1483
        %3989 = vmatprep.subr.mxu0 0.0
        %3990 = vmatpush1.xpose.msra.mxu0 %v1478
        %3991 = vmatprep.subr.mxu0 0.0
        %3992 = vmatpush1.xpose.msra.mxu0 %v1473
        %3993 = vmatprep.subr.mxu0 0.0
        %3994 = vmatpush1.xpose.msra.mxu0 %v1468
        %3995 = vmatprep.subr.mxu0 0.0
        %3996 = vmatpush1.xpose.msra.mxu0 %v1463
        %3997 = vmatprep.subr.mxu0 0.0
        %3998 = vmatpush1.xpose.msra.mxu0 %v1458
        %3999 = vmatprep.subr.mxu0 0.0
        %4000 = vmatpush1.xpose.msra.mxu0 %v1453
        %4001 = vmatprep.subr.mxu0 0.0
        %4002 = vmatpush1.xpose.msra.mxu0 %v1448
        %4003 = vmatprep.subr.mxu0 0.0
        %4004 = vmatpush2.xpose.msra.mxu0 0.0
        %4005 = vmatprep.subr.mxu0 0.0
        %4006 = vmatpush2.xpose.msra.mxu0 0.0
        %4007 = vmatprep.subr.mxu0 0.0
        %4008 = vmatpush2.xpose.msra.mxu0 0.0
        %4009 = vmatprep.subr.mxu0 0.0
        %4010 = vmatpush2.xpose.msra.mxu0 0.0
        %4011 = vmatprep.subr.mxu0 0.0
        %4012 = vmatpush2.xpose.msra.mxu0 0.0
        %4013 = vmatprep.subr.mxu0 0.0
        %4014 = vmatpush2.xpose.msra.mxu0 0.0
        %4015 = vmatprep.subr.mxu0 0.0
        %4016 = vmatpush2.xpose.msra.mxu0 0.0
        %4017 = vmatprep.subr.mxu0 0.0
        %4018 = vmatpush2.xpose.msra.mxu0 0.0
        %4019 = vmatprep.subr.mxu0 0.0
        %4020 = vmatpush2.xpose.msra.mxu0 0.0
        %4021 = vmatprep.subr.mxu0 0.0
        %4022 = vmatpush2.xpose.msra.mxu0 0.0
        %4023 = vmatprep.subr.mxu0 0.0
        %4024 = vmatpush2.xpose.msra.mxu0 0.0
        %4025 = vmatprep.subr.mxu0 0.0
        %4026 = vmatpush2.xpose.msra.mxu0 0.0
        %4027 = vmatprep.subr.mxu0 0.0
        %4028 = vmatpush2.xpose.msra.mxu0 0.0
        %4029 = vmatprep.subr.mxu0 0.0
        %4030 = vmatpush2.xpose.msra.mxu0 0.0
        %4031 = vmatprep.subr.mxu0 0.0
        %4032 = vmatpush2.xpose.msra.mxu0 0.0
        %4033 = vmatprep.subr.mxu0 0.0
        %4034 = vmatpush2.xpose.msra.mxu0 0.0
        %4035 = vmatprep.mubr.f32.mxu0 0.0
        %4036 = vmatmul.mubr.f32.gmra.mxu0 %v293
        %v4037 = vpop.f32.mrf.mxu0
        %v4038 = vadd.f32 %v3938, %v4037
        %v4039 = vpop.f32.mrf.mxu0
        %4040 = vmatprep.mubr.f32.mxu0 0.0
        %4041 = vmatmul.mubr.f32.gmra.mxu0 %v298
        %v4042 = vpop.f32.mrf.mxu0
        %v4043 = vadd.f32 %v3943, %v4042
        %v4044 = vpop.f32.mrf.mxu0
        %4045 = vmatprep.mubr.f32.mxu0 0.0
        %4046 = vmatmul.mubr.f32.gmra.mxu0 %v303
        %v4047 = vpop.f32.mrf.mxu0
        %v4048 = vadd.f32 %v3948, %v4047
        %v4049 = vpop.f32.mrf.mxu0
        %4050 = vmatprep.mubr.f32.mxu0 0.0
        %4051 = vmatmul.mubr.f32.gmra.mxu0 %v308
        %v4052 = vpop.f32.mrf.mxu0
        %v4053 = vadd.f32 %v3953, %v4052
        %v4054 = vpop.f32.mrf.mxu0
        %4055 = vmatprep.mubr.f32.mxu0 0.0
        %4056 = vmatmul.mubr.f32.gmra.mxu0 %v313
        %v4057 = vpop.f32.mrf.mxu0
        %v4058 = vadd.f32 %v3958, %v4057
        %v4059 = vpop.f32.mrf.mxu0
        %4060 = vmatprep.mubr.f32.mxu0 0.0
        %4061 = vmatmul.mubr.f32.gmra.mxu0 %v318
        %v4062 = vpop.f32.mrf.mxu0
        %v4063 = vadd.f32 %v3963, %v4062
        %v4064 = vpop.f32.mrf.mxu0
        %4065 = vmatprep.mubr.f32.mxu0 0.0
        %4066 = vmatmul.mubr.f32.gmra.mxu0 %v323
        %v4067 = vpop.f32.mrf.mxu0
        %v4068 = vadd.f32 %v3968, %v4067
        %v4069 = vpop.f32.mrf.mxu0
        %4070 = vdwg.mxu0
        %4071 = vst [vmem:[%s216] sm:$0xff] %v1805
        %4072 = vst [vmem:[%s216 + $0x8] sm:$0xff] %v1807
        %4073 = vst [vmem:[%s216 + $0x10] sm:$0xff] %v2126
        %4074 = vst [vmem:[%s216 + $0x18] sm:$0xff] %v2128
        %4075 = vst [vmem:[%s216 + $0x20] sm:$0xff] %v2447
        %4076 = vst [vmem:[%s216 + $0x28] sm:$0xff] %v2449
        %4077 = vst [vmem:[%s216 + $0x30] sm:$0xff] %v2768
        %4078 = vst [vmem:[%s216 + $0x38] sm:$0xff] %v2770
        %4079 = vst [vmem:[%s216 + $0x40] sm:$0xff] %v3089
        %4080 = vst [vmem:[%s216 + $0x48] sm:$0xff] %v3091
        %4081 = vst [vmem:[%s216 + $0x50] sm:$0xff] %v3410
        %4082 = vst [vmem:[%s216 + $0x58] sm:$0xff] %v3412
        %4083 = vst [vmem:[%s216 + $0x60] sm:$0xff] %v3731
        %4084 = vst [vmem:[%s216 + $0x68] sm:$0xff] %v3733
        %4085 = vst [vmem:[%s216 + $0x70] sm:$0xff] %v4038
        %4086 = vst [vmem:[%s216 + $0x78] sm:$0xff] %v1811
        %4087 = vst [vmem:[%s216 + $0x80] sm:$0xff] %v1813
        %4088 = vst [vmem:[%s216 + $0x88] sm:$0xff] %v2132
        %4089 = vst [vmem:[%s216 + $0x90] sm:$0xff] %v2134
        %4090 = vst [vmem:[%s216 + $0x98] sm:$0xff] %v2453
        %4091 = vst [vmem:[%s216 + $0xa0] sm:$0xff] %v2455
        %4092 = vst [vmem:[%s216 + $0xa8] sm:$0xff] %v2774
        %4093 = vst [vmem:[%s216 + $0xb0] sm:$0xff] %v2776
        %4094 = vst [vmem:[%s216 + $0xb8] sm:$0xff] %v3095
        %4095 = vst [vmem:[%s216 + $0xc0] sm:$0xff] %v3097
        %4096 = vst [vmem:[%s216 + $0xc8] sm:$0xff] %v3416
        %4097 = vst [vmem:[%s216 + $0xd0] sm:$0xff] %v3418
        %4098 = vst [vmem:[%s216 + $0xd8] sm:$0xff] %v3737
        %4099 = vst [vmem:[%s216 + $0xe0] sm:$0xff] %v3739
        %4100 = vst [vmem:[%s216 + $0xe8] sm:$0xff] %v4043
        %4101 = vst [vmem:[%s216 + $0xf0] sm:$0xff] %v1817
        %4102 = vst [vmem:[%s216 + $0xf8] sm:$0xff] %v1819
        %4103 = vst [vmem:[%s216 + $0x100] sm:$0xff] %v2138
        %4104 = vst [vmem:[%s216 + $0x108] sm:$0xff] %v2140
        %4105 = vst [vmem:[%s216 + $0x110] sm:$0xff] %v2459
        %4106 = vst [vmem:[%s216 + $0x118] sm:$0xff] %v2461
        %4107 = vst [vmem:[%s216 + $0x120] sm:$0xff] %v2780
        %4108 = vst [vmem:[%s216 + $0x128] sm:$0xff] %v2782
        %4109 = vst [vmem:[%s216 + $0x130] sm:$0xff] %v3101
        %4110 = vst [vmem:[%s216 + $0x138] sm:$0xff] %v3103
        %4111 = vst [vmem:[%s216 + $0x140] sm:$0xff] %v3422
        %4112 = vst [vmem:[%s216 + $0x148] sm:$0xff] %v3424
        %4113 = vst [vmem:[%s216 + $0x150] sm:$0xff] %v3743
        %4114 = vst [vmem:[%s216 + $0x158] sm:$0xff] %v3745
        %4115 = vst [vmem:[%s216 + $0x160] sm:$0xff] %v4048
        %4116 = vst [vmem:[%s216 + $0x168] sm:$0xff] %v1823
        %4117 = vst [vmem:[%s216 + $0x170] sm:$0xff] %v1825
        %4118 = vst [vmem:[%s216 + $0x178] sm:$0xff] %v2144
        %4119 = vst [vmem:[%s216 + $0x180] sm:$0xff] %v2146
        %4120 = vst [vmem:[%s216 + $0x188] sm:$0xff] %v2465
        %4121 = vst [vmem:[%s216 + $0x190] sm:$0xff] %v2467
        %4122 = vst [vmem:[%s216 + $0x198] sm:$0xff] %v2786
        %4123 = vst [vmem:[%s216 + $0x1a0] sm:$0xff] %v2788
        %4124 = vst [vmem:[%s216 + $0x1a8] sm:$0xff] %v3107
        %4125 = vst [vmem:[%s216 + $0x1b0] sm:$0xff] %v3109
        %4126 = vst [vmem:[%s216 + $0x1b8] sm:$0xff] %v3428
        %4127 = vst [vmem:[%s216 + $0x1c0] sm:$0xff] %v3430
        %4128 = vst [vmem:[%s216 + $0x1c8] sm:$0xff] %v3749
        %4129 = vst [vmem:[%s216 + $0x1d0] sm:$0xff] %v3751
        %4130 = vst [vmem:[%s216 + $0x1d8] sm:$0xff] %v4053
        %4131 = vst [vmem:[%s216 + $0x1e0] sm:$0xff] %v1829
        %4132 = vst [vmem:[%s216 + $0x1e8] sm:$0xff] %v1831
        %4133 = vst [vmem:[%s216 + $0x1f0] sm:$0xff] %v2150
        %4134 = vst [vmem:[%s216 + $0x1f8] sm:$0xff] %v2152
        %4135 = vst [vmem:[%s216 + $0x200] sm:$0xff] %v2471
        %4136 = vst [vmem:[%s216 + $0x208] sm:$0xff] %v2473
        %4137 = vst [vmem:[%s216 + $0x210] sm:$0xff] %v2792
        %4138 = vst [vmem:[%s216 + $0x218] sm:$0xff] %v2794
        %4139 = vst [vmem:[%s216 + $0x220] sm:$0xff] %v3113
        %4140 = vst [vmem:[%s216 + $0x228] sm:$0xff] %v3115
        %4141 = vst [vmem:[%s216 + $0x230] sm:$0xff] %v3434
        %4142 = vst [vmem:[%s216 + $0x238] sm:$0xff] %v3436
        %4143 = vst [vmem:[%s216 + $0x240] sm:$0xff] %v3755
        %4144 = vst [vmem:[%s216 + $0x248] sm:$0xff] %v3757
        %4145 = vst [vmem:[%s216 + $0x250] sm:$0xff] %v4058
        %4146 = vst [vmem:[%s216 + $0x258] sm:$0xff] %v1835
        %4147 = vst [vmem:[%s216 + $0x260] sm:$0xff] %v1837
        %4148 = vst [vmem:[%s216 + $0x268] sm:$0xff] %v2156
        %4149 = vst [vmem:[%s216 + $0x270] sm:$0xff] %v2158
        %4150 = vst [vmem:[%s216 + $0x278] sm:$0xff] %v2477
        %4151 = vst [vmem:[%s216 + $0x280] sm:$0xff] %v2479
        %4152 = vst [vmem:[%s216 + $0x288] sm:$0xff] %v2798
        %4153 = vst [vmem:[%s216 + $0x290] sm:$0xff] %v2800
        %4154 = vst [vmem:[%s216 + $0x298] sm:$0xff] %v3119
        %4155 = vst [vmem:[%s216 + $0x2a0] sm:$0xff] %v3121
        %4156 = vst [vmem:[%s216 + $0x2a8] sm:$0xff] %v3440
        %4157 = vst [vmem:[%s216 + $0x2b0] sm:$0xff] %v3442
        %4158 = vst [vmem:[%s216 + $0x2b8] sm:$0xff] %v3761
        %4159 = vst [vmem:[%s216 + $0x2c0] sm:$0xff] %v3763
        %4160 = vst [vmem:[%s216 + $0x2c8] sm:$0xff] %v4063
        %4161 = vst [vmem:[%s216 + $0x2d0] sm:$0x1] %v1841
        %4162 = vst [vmem:[%s216 + $0x2d8] sm:$0x1] %v1843
        %4163 = vst [vmem:[%s216 + $0x2e0] sm:$0x1] %v2162
        %4164 = vst [vmem:[%s216 + $0x2e8] sm:$0x1] %v2164
        %4165 = vst [vmem:[%s216 + $0x2f0] sm:$0x1] %v2483
        %4166 = vst [vmem:[%s216 + $0x2f8] sm:$0x1] %v2485
        %4167 = vst [vmem:[%s216 + $0x300] sm:$0x1] %v2804
        %4168 = vst [vmem:[%s216 + $0x308] sm:$0x1] %v2806
        %4169 = vst [vmem:[%s216 + $0x310] sm:$0x1] %v3125
        %4170 = vst [vmem:[%s216 + $0x318] sm:$0x1] %v3127
        %4171 = vst [vmem:[%s216 + $0x320] sm:$0x1] %v3446
        %4172 = vst [vmem:[%s216 + $0x328] sm:$0x1] %v3448
        %4173 = vst [vmem:[%s216 + $0x330] sm:$0x1] %v3767
        %4174 = vst [vmem:[%s216 + $0x338] sm:$0x1] %v3769
        %4175 = vst [vmem:[%s216 + $0x340] sm:$0x1] %v4068
        %s4176 = sand.u32 %s95, 1
        %s4177 = scalar_lea.sflag [#allocation4], %s4176
        %s4178 = sand.u32 %s95, 1
        %s4179 = smul.addr %s4178, 840
        %s4180 = scalar_lea.vmem [#allocation8], %s4179
        // Predicated region
        $region45: #{tpu_custom_call.1} parent=31 // pred_check
          %p4181 = pneg %p105
        $region46: #{tpu_custom_call.1} parent=31 // pred_check_branch
          %4183 = sbr.rel (%p4181) target = $region48
        $region47: #{tpu_custom_call.1} parent=31 // pred_region
          %s4184 = smul.u32 15, %s19
          %s4186 = ssub.s32 13440, 13440
          %4187 = vsyncadd %s4177, %s4186
          %s4188 = smul.addr %s4184, 128
          %s4189 = scalar_lea.hbm %s3, %s4188
          %s4190 = sshll.u32 %s4180, 4
          %s4191 = int_to_ptr.vmem [resolvable:$true] %s4190
          %4196 = dma.vmem_to_hbm [thread:$0]  %s4191, 13440, %s4189, %s4177, 1920, 3840, 120
        $region48: #{tpu_custom_call.1} parent=31 // pred_fallthru
          _
      $region32: #{tpu_custom_call.1} parent=5 // pred_fallthru
        _
      %p4197 = scmp.le.s32.totalorder 2, %s14
      // Predicated region
      $region49: #{tpu_custom_call.1} parent=5 // pred_check
        %p4198 = pneg %p4197
      $region50: #{tpu_custom_call.1} parent=5 // pred_check_branch
        %4200 = sbr.rel (%p4198) target = $region52
      $region51: #{tpu_custom_call.1} parent=5 // pred_region
        %s4201 = ssub.s32 %s14, 2
        // Predicated region
        $region53: #{tpu_custom_call.1} parent=51 // pred_check
          %p4202 = pneg %p111
        $region54: #{tpu_custom_call.1} parent=51 // pred_check_branch
          %4204 = sbr.rel (%p4202) target = $region56
        $region55: #{tpu_custom_call.1} parent=51 // pred_region
          %s4205 = sand.u32 %s96, 1
          %s4206 = scalar_lea.sflag [#allocation4], %s4205
          %s4207 = sand.u32 %s96, 1
          %s4208 = smul.addr %s4207, 840
          %s4209 = scalar_lea.vmem [#allocation8], %s4208
          %4210 = dma.done %s4206, 13440
        $region56: #{tpu_custom_call.1} parent=51 // pred_fallthru
          _
      $region52: #{tpu_custom_call.1} parent=5 // pred_fallthru
        _
    $region6: #{tpu_custom_call.1} parent=1 // loop_footer
      %s18 = sadd.s32 1, %s14
    $region7: #{tpu_custom_call.1} parent=1 // loop_footer_branch
      %13 = sbr.rel target = $region3
    $region8: #{tpu_custom_call.1} parent=1 // loop_exit
      _
    %4211 = vsyncpa [#allocation3], 1
    %s4212 = scalar_lea.sflag [#allocation3], 1
    %4213 = vsyncpa %s4212, 1
    %4214 = vsyncpa [#allocation6], 1
    %4215 = vsyncpa [#allocation4], 1
    %s4216 = scalar_lea.sflag [#allocation4], 1
    %4217 = vsyncpa %s4216, 1

</llo_original>
